<compile_context>
chip_gen: v5e
topology: v5e:2x2
jax: 0.10.0
libtpu: 0.0.40
codegen_flags: <defaults>
</compile_context>

<pallas_src>
import math
import numpy as np
import jax
import jax.numpy as jnp
from jax.experimental import pallas as pl
from jax.experimental.pallas import tpu as pltpu

# ------------------------- demo configuration -------------------------
K_POOL = 2          # GlobalPoolBlock k
C_FEAT = 32         # GlobalPoolBlock c (== input channels == fc out_features)
BATCH = 8           # N
H_IN = 16
W_IN = 16


# ------------------------- Pallas kernel: single fused matmul -------------------------
def _global_pool_block_kernel(x_ref, wc_ref, b_ref, o_ref):
    """x_ref : (TN, C*H*W) f32   row-major flatten of contiguous NCHW, one row per sample
    wc_ref: (C*H*W, c)   bf16  adaptive-avg-pool operator folded into the fc weight
    b_ref : (1, c)       f32   fc bias
    o_ref : (TN, c)      f32   output rows (wrapper reshapes to (N, C, 1, 1))"""
    x_bf16 = x_ref[...].astype(jnp.bfloat16)          # in-kernel cast, hidden under the matmul
    o_ref[...] = jnp.dot(x_bf16, wc_ref[...],
                         preferred_element_type=jnp.float32) + b_ref[...]


# ------------------------- host-side one-time parameter prep (N-independent) -------------------------
def _adaptive_pool_matrix(out_size, in_size):
    """Row i averages input positions [floor(i*in/out), ceil((i+1)*in/out)) — PyTorch adaptive pooling."""
    m = np.zeros((out_size, in_size), np.float32)
    for i in range(out_size):
        s = (i * in_size) // out_size
        e = -((-(i + 1) * in_size) // out_size)        # ceil division
        m[i, s:e] = 1.0 / float(e - s)
    return m


def prepare_global_pool_block_params(w_fc, b_fc, k, C, H, W):
    """One-time prep, cacheable alongside the weights and independent of batch size N:
    fold the exact PyTorch adaptive-avg-pool operator into the fc weight (f32 fold, bf16 store)."""
    c_out, fan_in = w_fc.shape
    assert c_out == C and fan_in == C * k * k          # module asserts C == self.c
    kk = k * k
    ph = _adaptive_pool_matrix(k, H)                                   # (k, H)
    pw = _adaptive_pool_matrix(k, W)                                   # (k, W)
    p2 = jnp.asarray(np.einsum("ih,jw->ijhw", ph, pw).reshape(kk, H * W))  # (kk, H*W), f32, exact bins
    w3 = w_fc.reshape(c_out, C, kk).astype(jnp.float32)                # (o, ch, bin)
    # Wc[ch*H*W + hw, o] = sum_bin W_fc[o, ch*kk+bin] * P[bin, hw]  — matches torch flatten order.
    wc = jnp.einsum("ocb,bs->cso", w3, p2).reshape(C * H * W, c_out).astype(jnp.bfloat16)
    b_row = b_fc.reshape(1, c_out).astype(jnp.float32)
    return wc, b_row


# ------------------------- forward wrapper -------------------------
def global_pool_block_forward(x, wc, b_row, k):
    """Pallas forward of GlobalPoolBlock: adaptive_avg_pool2d((k,k)) -> flatten -> Linear -> view(N,C,1,1)."""
    N, C, H, W = x.shape
    c_out = b_row.shape[1]
    kdim = C * H * W
    assert wc.shape == (kdim, c_out)

    # Free row-major flatten of contiguous NCHW; stays f32 (cast happens in-kernel).
    x2d = x.reshape(N, kdim)

    # Grid over the batch rows (parallel axis); weight block constant across the grid.
    if N % 8 == 0:
        tn = min(N, 256)                    # multiple of 8 (sublane friendly), VMEM-sized row block
    else:
        tn = N                              # full-extent block for small / ragged N
    grid = (pl.cdiv(N, tn),)

    y = pl.pallas_call(
        _global_pool_block_kernel,
        out_shape=jax.ShapeDtypeStruct((N, c_out), jnp.float32),
        grid_spec=pltpu.PrefetchScalarGridSpec(
            num_scalar_prefetch=0,
            grid=grid,
            in_specs=[
                pl.BlockSpec((tn, kdim), lambda i: (i, 0)),      # x rows for this block
                pl.BlockSpec((kdim, c_out), lambda i: (0, 0)),   # folded weight, grid-invariant
                pl.BlockSpec((1, c_out), lambda i: (0, 0)),      # bias
            ],
            out_specs=pl.BlockSpec((tn, c_out), lambda i: (i, 0)),
        ),
        compiler_params=pltpu.CompilerParams(dimension_semantics=("parallel",)),
    )(x2d, wc, b_row)

    return y.reshape(N, C, 1, 1)


# ------------------------- pure-JAX reference (literal transcription of the torch ops) -------------------------
def reference_forward(x, w_fc, b_fc, k):
    N, C, H, W = x.shape
    rows = []
    for i in range(k):
        hs, he = (i * H) // k, -((-(i + 1) * H) // k)
        cols = []
        for j in range(k):
            ws, we = (j * W) // k, -((-(j + 1) * W) // k)
            cols.append(jnp.mean(x[:, :, hs:he, ws:we], axis=(2, 3)))   # one adaptive bin
        rows.append(jnp.stack(cols, axis=-1))
    pooled = jnp.stack(rows, axis=-2)                 # F.adaptive_avg_pool2d(x, (k, k)) -> (N, C, k, k)
    flat = pooled.reshape(N, C * k * k)               # x.flatten(start_dim=1)
    y = flat @ w_fc.T + b_fc                          # self.fc(x)
    return y.reshape(N, C, 1, 1)                      # x.view(N, C, 1, 1)


if __name__ == "__main__":
    key = jax.random.PRNGKey(0)
    k_x, k_w, k_b = jax.random.split(key, 3)

    N, C, H, W, K = BATCH, C_FEAT, H_IN, W_IN, K_POOL
    x = jax.random.normal(k_x, (N, C, H, W), jnp.float32)

    # nn.Linear(c*k*k, c) default init: U(-1/sqrt(fan_in), +1/sqrt(fan_in)) for weight and bias.
    fan_in = C * K * K
    bound = 1.0 / math.sqrt(fan_in)
    w_fc = jax.random.uniform(k_w, (C, fan_in), jnp.float32, -bound, bound)
    b_fc = jax.random.uniform(k_b, (C,), jnp.float32, -bound, bound)

    # One-time, N-independent parameter prep (pool operator folded into the fc weight).
    wc, b_row = prepare_global_pool_block_params(w_fc, b_fc, K, C, H, W)
    wc, b_row = jax.block_until_ready((wc, b_row))

    out = global_pool_block_forward(x, wc, b_row, K)
    out = jax.block_until_ready(out)

    ref = reference_forward(x, w_fc, b_fc, K)
    assert out.shape == (N, C, 1, 1)
    np.testing.assert_allclose(np.asarray(out), np.asarray(ref), rtol=2e-2, atol=5e-3)
    print("KERNEL_OK")
</pallas_src>

<mosaic_0001>
module attributes {stable_mosaic.version = 11 : i64} {
  func.func @_global_pool_block_kernel(%arg0: i32, %arg1: memref<8x8192xf32, #tpu.memory_space<vmem>>, %arg2: memref<8192x32xbf16, #tpu.memory_space<vmem>>, %arg3: memref<1x32xf32, #tpu.memory_space<vmem>>, %arg4: memref<8x32xf32, #tpu.memory_space<vmem>>) attributes {dimension_semantics = [#tpu.dimension_semantics<parallel>], iteration_bounds = array<i64: 1>, scalar_prefetch = 0 : i64, scratch_operands = 0 : i64, tpu.core_type = #tpu.core_type<tc>, window_params = [{transform_indices = @transform_0, window_bounds = array<i64: 8, 8192>}, {pipeline_mode = #tpu.pipeline_mode<synchronous>, transform_indices = @transform_1, window_bounds = array<i64: 8192, 32>}, {pipeline_mode = #tpu.pipeline_mode<synchronous>, transform_indices = @transform_2, window_bounds = array<i64: 1, 32>}, {transform_indices = @transform_3, window_bounds = array<i64: 8, 32>}]} {
    %c0 = arith.constant 0 : index
    %c0_0 = arith.constant 0 : index
    %0 = vector.load %arg1[%c0, %c0_0] : memref<8x8192xf32, #tpu.memory_space<vmem>>, vector<8x8192xf32>
    %1 = arith.truncf %0 : vector<8x8192xf32> to vector<8x8192xbf16>
    %c0_1 = arith.constant 0 : index
    %c0_2 = arith.constant 0 : index
    %2 = vector.load %arg2[%c0_1, %c0_2] : memref<8192x32xbf16, #tpu.memory_space<vmem>>, vector<8192x32xbf16>
    %cst = arith.constant dense<0.000000e+00> : vector<8x32xf32>
    %3 = tpu.matmul %1, %2, %cst {dimension_numbers = #tpu.dot_dimension_numbers<[1], [0], [0], [1], [0, 0, 1, 1], [], []>} : vector<8x8192xbf16>, vector<8192x32xbf16>, vector<8x32xf32> -> vector<8x32xf32>
    %c0_3 = arith.constant 0 : index
    %c0_4 = arith.constant 0 : index
    %4 = vector.load %arg3[%c0_3, %c0_4] : memref<1x32xf32, #tpu.memory_space<vmem>>, vector<1x32xf32>
    %5 = vector.broadcast %4 : vector<1x32xf32> to vector<8x32xf32>
    %6 = arith.addf %3, %5 : vector<8x32xf32>
    %c0_5 = arith.constant 0 : index
    %c0_6 = arith.constant 0 : index
    %7 = vector.load %arg4[%c0_5, %c0_6] : memref<8x32xf32, #tpu.memory_space<vmem>>, vector<8x32xf32>
    tpu.vector_store %arg4[%c0_5, %c0_6], %6 {strides = array<i32>} : memref<8x32xf32, #tpu.memory_space<vmem>>, vector<8x32xf32>,
    return
  }
  func.func @transform_0(%arg0: i32) -> (i32, i32) {
    %c0_i32 = arith.constant 0 : i32
    %c0_i32_0 = arith.constant 0 : i32
    return %arg0, %c0_i32 : i32, i32
  }
  func.func @transform_1(%arg0: i32) -> (i32, i32) {
    %c0_i32 = arith.constant 0 : i32
    %c0_i32_0 = arith.constant 0 : i32
    %c0_i32_1 = arith.constant 0 : i32
    return %c0_i32, %c0_i32_0 : i32, i32
  }
  func.func @transform_2(%arg0: i32) -> (i32, i32) {
    %c0_i32 = arith.constant 0 : i32
    %c0_i32_0 = arith.constant 0 : i32
    %c0_i32_1 = arith.constant 0 : i32
    return %c0_i32, %c0_i32_0 : i32, i32
  }
  func.func @transform_3(%arg0: i32) -> (i32, i32) {
    %c0_i32 = arith.constant 0 : i32
    %c0_i32_0 = arith.constant 0 : i32
    return %arg0, %c0_i32 : i32, i32
  }
}

</mosaic_0001>

<llo_original>
// kernel: tpu_custom_call.1
$region0: #{tpu_custom_call.1}
  #allocation0 [shape = 'u32[]', space=smem, size = 0x4, offset = 0x4, fixed_abs, tag = 'smem constant byte address 0x4 - core index']
  #allocation1 [shape = 'u32[72,128]{1,0:T(1,128)}', space=vmem, size = 0x9000, scoped, tag = 'internal scratch']
  %s0 = inlined_call_operand.vmem [shape: f32[8,8192], index: 0, kind: input, shape index: {}]
  %s1 = inlined_call_operand.vmem [shape: bf16[8192,32], index: 1, kind: input, shape index: {}]
  %s2 = inlined_call_operand.vmem [shape: f32[1,32], index: 2, kind: input, shape index: {}]
  %s3 = inlined_call_operand.hbm [shape: f32[8,32], index: 3, kind: output, shape index: {}]
  %s4 = sld [smem:[#allocation0]]
  $region22: #{tpu_custom_call.1} parent=0
    _
  %s6 = ssub.s32 1, %s4
  %s7 = scalar_select 0, %s6, %s4
  $region1: #{tpu_custom_call.1} parent=0
    #allocation2 [shape = 'u8[4096]{0}', space=vmem, size = 0x1000, scoped, tag = 'output window, operand 0, single buffered']
    #allocation3 [shape = 's32[1]{0}', space=sflag, size = 0x4, scoped, tag = 'scoped memory for tpu_custom_call.1']
    %8 = vsyncpa [#allocation3], 0
    // Predicated region
    $region2: #{tpu_custom_call.1} parent=1 // pred_check
      _
    $region3: #{tpu_custom_call.1} parent=1 // pred_check_branch
      %10 = sbr.rel (0) target = $region5
    $region4: #{tpu_custom_call.1} parent=1 // pred_region
      _
    $region5: #{tpu_custom_call.1} parent=1 // pred_fallthru
      _
    // Predicated region
    $region6: #{tpu_custom_call.1} parent=1 // pred_check
      _
    $region7: #{tpu_custom_call.1} parent=1 // pred_check_branch
      %12 = sbr.rel (0) target = $region9
    $region8: #{tpu_custom_call.1} parent=1 // pred_region
      _
    $region9: #{tpu_custom_call.1} parent=1 // pred_fallthru
      _
    // Predicated region
    $region10: #{tpu_custom_call.1} parent=1 // pred_check
      _
    $region11: #{tpu_custom_call.1} parent=1 // pred_check_branch
      %14 = sbr.rel (0) target = $region13
    $region12: #{tpu_custom_call.1} parent=1 // pred_region
      _
    $region13: #{tpu_custom_call.1} parent=1 // pred_fallthru
      _
    %v15 = vld [vmem:[%s0] sm:$0xff]
    %v16 = vld [vmem:[%s0 + $0x8] sm:$0xff]
    %v17 = vld [vmem:[%s0 + $0x10] sm:$0xff]
    %v18 = vld [vmem:[%s0 + $0x18] sm:$0xff]
    %v19 = vld [vmem:[%s0 + $0x20] sm:$0xff]
    %v20 = vld [vmem:[%s0 + $0x28] sm:$0xff]
    %v21 = vld [vmem:[%s0 + $0x30] sm:$0xff]
    %v22 = vld [vmem:[%s0 + $0x38] sm:$0xff]
    %v23 = vld [vmem:[%s0 + $0x40] sm:$0xff]
    %v24 = vld [vmem:[%s0 + $0x48] sm:$0xff]
    %v25 = vld [vmem:[%s0 + $0x50] sm:$0xff]
    %v26 = vld [vmem:[%s0 + $0x58] sm:$0xff]
    %v27 = vld [vmem:[%s0 + $0x60] sm:$0xff]
    %v28 = vld [vmem:[%s0 + $0x68] sm:$0xff]
    %v29 = vld [vmem:[%s0 + $0x70] sm:$0xff]
    %v30 = vld [vmem:[%s0 + $0x78] sm:$0xff]
    %v31 = vld [vmem:[%s0 + $0x80] sm:$0xff]
    %v32 = vld [vmem:[%s0 + $0x88] sm:$0xff]
    %v33 = vld [vmem:[%s0 + $0x90] sm:$0xff]
    %v34 = vld [vmem:[%s0 + $0x98] sm:$0xff]
    %v35 = vld [vmem:[%s0 + $0xa0] sm:$0xff]
    %v36 = vld [vmem:[%s0 + $0xa8] sm:$0xff]
    %v37 = vld [vmem:[%s0 + $0xb0] sm:$0xff]
    %v38 = vld [vmem:[%s0 + $0xb8] sm:$0xff]
    %v39 = vld [vmem:[%s0 + $0xc0] sm:$0xff]
    %v40 = vld [vmem:[%s0 + $0xc8] sm:$0xff]
    %v41 = vld [vmem:[%s0 + $0xd0] sm:$0xff]
    %v42 = vld [vmem:[%s0 + $0xd8] sm:$0xff]
    %v43 = vld [vmem:[%s0 + $0xe0] sm:$0xff]
    %v44 = vld [vmem:[%s0 + $0xe8] sm:$0xff]
    %v45 = vld [vmem:[%s0 + $0xf0] sm:$0xff]
    %v46 = vld [vmem:[%s0 + $0xf8] sm:$0xff]
    %v47 = vld [vmem:[%s0 + $0x100] sm:$0xff]
    %v48 = vld [vmem:[%s0 + $0x108] sm:$0xff]
    %v49 = vld [vmem:[%s0 + $0x110] sm:$0xff]
    %v50 = vld [vmem:[%s0 + $0x118] sm:$0xff]
    %v51 = vld [vmem:[%s0 + $0x120] sm:$0xff]
    %v52 = vld [vmem:[%s0 + $0x128] sm:$0xff]
    %v53 = vld [vmem:[%s0 + $0x130] sm:$0xff]
    %v54 = vld [vmem:[%s0 + $0x138] sm:$0xff]
    %v55 = vld [vmem:[%s0 + $0x140] sm:$0xff]
    %v56 = vld [vmem:[%s0 + $0x148] sm:$0xff]
    %v57 = vld [vmem:[%s0 + $0x150] sm:$0xff]
    %v58 = vld [vmem:[%s0 + $0x158] sm:$0xff]
    %v59 = vld [vmem:[%s0 + $0x160] sm:$0xff]
    %v60 = vld [vmem:[%s0 + $0x168] sm:$0xff]
    %v61 = vld [vmem:[%s0 + $0x170] sm:$0xff]
    %v62 = vld [vmem:[%s0 + $0x178] sm:$0xff]
    %v63 = vld [vmem:[%s0 + $0x180] sm:$0xff]
    %v64 = vld [vmem:[%s0 + $0x188] sm:$0xff]
    %v65 = vld [vmem:[%s0 + $0x190] sm:$0xff]
    %v66 = vld [vmem:[%s0 + $0x198] sm:$0xff]
    %v67 = vld [vmem:[%s0 + $0x1a0] sm:$0xff]
    %v68 = vld [vmem:[%s0 + $0x1a8] sm:$0xff]
    %v69 = vld [vmem:[%s0 + $0x1b0] sm:$0xff]
    %v70 = vld [vmem:[%s0 + $0x1b8] sm:$0xff]
    %v71 = vld [vmem:[%s0 + $0x1c0] sm:$0xff]
    %v72 = vld [vmem:[%s0 + $0x1c8] sm:$0xff]
    %v73 = vld [vmem:[%s0 + $0x1d0] sm:$0xff]
    %v74 = vld [vmem:[%s0 + $0x1d8] sm:$0xff]
    %v75 = vld [vmem:[%s0 + $0x1e0] sm:$0xff]
    %v76 = vld [vmem:[%s0 + $0x1e8] sm:$0xff]
    %v77 = vld [vmem:[%s0 + $0x1f0] sm:$0xff]
    %v78 = vld [vmem:[%s0 + $0x1f8] sm:$0xff]
    %v79 = vpack.c.bf16 %v15, %v15
    %v80 = vpack.c.bf16 %v16, %v16
    %v81 = vpack.c.bf16 %v17, %v17
    %v82 = vpack.c.bf16 %v18, %v18
    %v83 = vpack.c.bf16 %v19, %v19
    %v84 = vpack.c.bf16 %v20, %v20
    %v85 = vpack.c.bf16 %v21, %v21
    %v86 = vpack.c.bf16 %v22, %v22
    %v87 = vpack.c.bf16 %v23, %v23
    %v88 = vpack.c.bf16 %v24, %v24
    %v89 = vpack.c.bf16 %v25, %v25
    %v90 = vpack.c.bf16 %v26, %v26
    %v91 = vpack.c.bf16 %v27, %v27
    %v92 = vpack.c.bf16 %v28, %v28
    %v93 = vpack.c.bf16 %v29, %v29
    %v94 = vpack.c.bf16 %v30, %v30
    %v95 = vpack.c.bf16 %v31, %v31
    %v96 = vpack.c.bf16 %v32, %v32
    %v97 = vpack.c.bf16 %v33, %v33
    %v98 = vpack.c.bf16 %v34, %v34
    %v99 = vpack.c.bf16 %v35, %v35
    %v100 = vpack.c.bf16 %v36, %v36
    %v101 = vpack.c.bf16 %v37, %v37
    %v102 = vpack.c.bf16 %v38, %v38
    %v103 = vpack.c.bf16 %v39, %v39
    %v104 = vpack.c.bf16 %v40, %v40
    %v105 = vpack.c.bf16 %v41, %v41
    %v106 = vpack.c.bf16 %v42, %v42
    %v107 = vpack.c.bf16 %v43, %v43
    %v108 = vpack.c.bf16 %v44, %v44
    %v109 = vpack.c.bf16 %v45, %v45
    %v110 = vpack.c.bf16 %v46, %v46
    %v111 = vpack.c.bf16 %v47, %v47
    %v112 = vpack.c.bf16 %v48, %v48
    %v113 = vpack.c.bf16 %v49, %v49
    %v114 = vpack.c.bf16 %v50, %v50
    %v115 = vpack.c.bf16 %v51, %v51
    %v116 = vpack.c.bf16 %v52, %v52
    %v117 = vpack.c.bf16 %v53, %v53
    %v118 = vpack.c.bf16 %v54, %v54
    %v119 = vpack.c.bf16 %v55, %v55
    %v120 = vpack.c.bf16 %v56, %v56
    %v121 = vpack.c.bf16 %v57, %v57
    %v122 = vpack.c.bf16 %v58, %v58
    %v123 = vpack.c.bf16 %v59, %v59
    %v124 = vpack.c.bf16 %v60, %v60
    %v125 = vpack.c.bf16 %v61, %v61
    %v126 = vpack.c.bf16 %v62, %v62
    %v127 = vpack.c.bf16 %v63, %v63
    %v128 = vpack.c.bf16 %v64, %v64
    %v129 = vpack.c.bf16 %v65, %v65
    %v130 = vpack.c.bf16 %v66, %v66
    %v131 = vpack.c.bf16 %v67, %v67
    %v132 = vpack.c.bf16 %v68, %v68
    %v133 = vpack.c.bf16 %v69, %v69
    %v134 = vpack.c.bf16 %v70, %v70
    %v135 = vpack.c.bf16 %v71, %v71
    %v136 = vpack.c.bf16 %v72, %v72
    %v137 = vpack.c.bf16 %v73, %v73
    %v138 = vpack.c.bf16 %v74, %v74
    %v139 = vpack.c.bf16 %v75, %v75
    %v140 = vpack.c.bf16 %v76, %v76
    %v141 = vpack.c.bf16 %v77, %v77
    %v142 = vpack.c.bf16 %v78, %v78
    %v143 = vld [vmem:[%s1] sm:$0xf]
    %v144 = vld [vmem:[%s1 + $0x4] sm:$0xf]
    %v145 = vld [vmem:[%s1 + $0x8] sm:$0xf]
    %v146 = vld [vmem:[%s1 + $0xc] sm:$0xf]
    %v147 = vld [vmem:[%s1 + $0x10] sm:$0xf]
    %v148 = vld [vmem:[%s1 + $0x14] sm:$0xf]
    %v149 = vld [vmem:[%s1 + $0x18] sm:$0xf]
    %v150 = vld [vmem:[%s1 + $0x1c] sm:$0xf]
    %v151 = vld [vmem:[%s1 + $0x20] sm:$0xf]
    %v152 = vld [vmem:[%s1 + $0x24] sm:$0xf]
    %v153 = vld [vmem:[%s1 + $0x28] sm:$0xf]
    %v154 = vld [vmem:[%s1 + $0x2c] sm:$0xf]
    %v155 = vld [vmem:[%s1 + $0x30] sm:$0xf]
    %v156 = vld [vmem:[%s1 + $0x34] sm:$0xf]
    %v157 = vld [vmem:[%s1 + $0x38] sm:$0xf]
    %v158 = vld [vmem:[%s1 + $0x3c] sm:$0xf]
    %v159 = vld [vmem:[%s1 + $0x40] sm:$0xf]
    %v160 = vld [vmem:[%s1 + $0x44] sm:$0xf]
    %v161 = vld [vmem:[%s1 + $0x48] sm:$0xf]
    %v162 = vld [vmem:[%s1 + $0x4c] sm:$0xf]
    %v163 = vld [vmem:[%s1 + $0x50] sm:$0xf]
    %v164 = vld [vmem:[%s1 + $0x54] sm:$0xf]
    %v165 = vld [vmem:[%s1 + $0x58] sm:$0xf]
    %v166 = vld [vmem:[%s1 + $0x5c] sm:$0xf]
    %v167 = vld [vmem:[%s1 + $0x60] sm:$0xf]
    %v168 = vld [vmem:[%s1 + $0x64] sm:$0xf]
    %v169 = vld [vmem:[%s1 + $0x68] sm:$0xf]
    %v170 = vld [vmem:[%s1 + $0x6c] sm:$0xf]
    %v171 = vld [vmem:[%s1 + $0x70] sm:$0xf]
    %v172 = vld [vmem:[%s1 + $0x74] sm:$0xf]
    %v173 = vld [vmem:[%s1 + $0x78] sm:$0xf]
    %v174 = vld [vmem:[%s1 + $0x7c] sm:$0xf]
    %v175 = vld [vmem:[%s1 + $0x80] sm:$0xf]
    %v176 = vld [vmem:[%s1 + $0x84] sm:$0xf]
    %v177 = vld [vmem:[%s1 + $0x88] sm:$0xf]
    %v178 = vld [vmem:[%s1 + $0x8c] sm:$0xf]
    %v179 = vld [vmem:[%s1 + $0x90] sm:$0xf]
    %v180 = vld [vmem:[%s1 + $0x94] sm:$0xf]
    %v181 = vld [vmem:[%s1 + $0x98] sm:$0xf]
    %v182 = vld [vmem:[%s1 + $0x9c] sm:$0xf]
    %v183 = vld [vmem:[%s1 + $0xa0] sm:$0xf]
    %v184 = vld [vmem:[%s1 + $0xa4] sm:$0xf]
    %v185 = vld [vmem:[%s1 + $0xa8] sm:$0xf]
    %v186 = vld [vmem:[%s1 + $0xac] sm:$0xf]
    %v187 = vld [vmem:[%s1 + $0xb0] sm:$0xf]
    %v188 = vld [vmem:[%s1 + $0xb4] sm:$0xf]
    %v189 = vld [vmem:[%s1 + $0xb8] sm:$0xf]
    %v190 = vld [vmem:[%s1 + $0xbc] sm:$0xf]
    %v191 = vld [vmem:[%s1 + $0xc0] sm:$0xf]
    %v192 = vld [vmem:[%s1 + $0xc4] sm:$0xf]
    %v193 = vld [vmem:[%s1 + $0xc8] sm:$0xf]
    %v194 = vld [vmem:[%s1 + $0xcc] sm:$0xf]
    %v195 = vld [vmem:[%s1 + $0xd0] sm:$0xf]
    %v196 = vld [vmem:[%s1 + $0xd4] sm:$0xf]
    %v197 = vld [vmem:[%s1 + $0xd8] sm:$0xf]
    %v198 = vld [vmem:[%s1 + $0xdc] sm:$0xf]
    %v199 = vld [vmem:[%s1 + $0xe0] sm:$0xf]
    %v200 = vld [vmem:[%s1 + $0xe4] sm:$0xf]
    %v201 = vld [vmem:[%s1 + $0xe8] sm:$0xf]
    %v202 = vld [vmem:[%s1 + $0xec] sm:$0xf]
    %v203 = vld [vmem:[%s1 + $0xf0] sm:$0xf]
    %v204 = vld [vmem:[%s1 + $0xf4] sm:$0xf]
    %v205 = vld [vmem:[%s1 + $0xf8] sm:$0xf]
    %v206 = vld [vmem:[%s1 + $0xfc] sm:$0xf]
    %v207 = vld [vmem:[%s1 + $0x100] sm:$0xf]
    %v208 = vld [vmem:[%s1 + $0x104] sm:$0xf]
    %v209 = vld [vmem:[%s1 + $0x108] sm:$0xf]
    %v210 = vld [vmem:[%s1 + $0x10c] sm:$0xf]
    %v211 = vld [vmem:[%s1 + $0x110] sm:$0xf]
    %v212 = vld [vmem:[%s1 + $0x114] sm:$0xf]
    %v213 = vld [vmem:[%s1 + $0x118] sm:$0xf]
    %v214 = vld [vmem:[%s1 + $0x11c] sm:$0xf]
    %v215 = vld [vmem:[%s1 + $0x120] sm:$0xf]
    %v216 = vld [vmem:[%s1 + $0x124] sm:$0xf]
    %v217 = vld [vmem:[%s1 + $0x128] sm:$0xf]
    %v218 = vld [vmem:[%s1 + $0x12c] sm:$0xf]
    %v219 = vld [vmem:[%s1 + $0x130] sm:$0xf]
    %v220 = vld [vmem:[%s1 + $0x134] sm:$0xf]
    %v221 = vld [vmem:[%s1 + $0x138] sm:$0xf]
    %v222 = vld [vmem:[%s1 + $0x13c] sm:$0xf]
    %v223 = vld [vmem:[%s1 + $0x140] sm:$0xf]
    %v224 = vld [vmem:[%s1 + $0x144] sm:$0xf]
    %v225 = vld [vmem:[%s1 + $0x148] sm:$0xf]
    %v226 = vld [vmem:[%s1 + $0x14c] sm:$0xf]
    %v227 = vld [vmem:[%s1 + $0x150] sm:$0xf]
    %v228 = vld [vmem:[%s1 + $0x154] sm:$0xf]
    %v229 = vld [vmem:[%s1 + $0x158] sm:$0xf]
    %v230 = vld [vmem:[%s1 + $0x15c] sm:$0xf]
    %v231 = vld [vmem:[%s1 + $0x160] sm:$0xf]
    %v232 = vld [vmem:[%s1 + $0x164] sm:$0xf]
    %v233 = vld [vmem:[%s1 + $0x168] sm:$0xf]
    %v234 = vld [vmem:[%s1 + $0x16c] sm:$0xf]
    %v235 = vld [vmem:[%s1 + $0x170] sm:$0xf]
    %v236 = vld [vmem:[%s1 + $0x174] sm:$0xf]
    %v237 = vld [vmem:[%s1 + $0x178] sm:$0xf]
    %v238 = vld [vmem:[%s1 + $0x17c] sm:$0xf]
    %v239 = vld [vmem:[%s1 + $0x180] sm:$0xf]
    %v240 = vld [vmem:[%s1 + $0x184] sm:$0xf]
    %v241 = vld [vmem:[%s1 + $0x188] sm:$0xf]
    %v242 = vld [vmem:[%s1 + $0x18c] sm:$0xf]
    %v243 = vld [vmem:[%s1 + $0x190] sm:$0xf]
    %v244 = vld [vmem:[%s1 + $0x194] sm:$0xf]
    %v245 = vld [vmem:[%s1 + $0x198] sm:$0xf]
    %v246 = vld [vmem:[%s1 + $0x19c] sm:$0xf]
    %v247 = vld [vmem:[%s1 + $0x1a0] sm:$0xf]
    %v248 = vld [vmem:[%s1 + $0x1a4] sm:$0xf]
    %v249 = vld [vmem:[%s1 + $0x1a8] sm:$0xf]
    %v250 = vld [vmem:[%s1 + $0x1ac] sm:$0xf]
    %v251 = vld [vmem:[%s1 + $0x1b0] sm:$0xf]
    %v252 = vld [vmem:[%s1 + $0x1b4] sm:$0xf]
    %v253 = vld [vmem:[%s1 + $0x1b8] sm:$0xf]
    %v254 = vld [vmem:[%s1 + $0x1bc] sm:$0xf]
    %v255 = vld [vmem:[%s1 + $0x1c0] sm:$0xf]
    %v256 = vld [vmem:[%s1 + $0x1c4] sm:$0xf]
    %v257 = vld [vmem:[%s1 + $0x1c8] sm:$0xf]
    %v258 = vld [vmem:[%s1 + $0x1cc] sm:$0xf]
    %v259 = vld [vmem:[%s1 + $0x1d0] sm:$0xf]
    %v260 = vld [vmem:[%s1 + $0x1d4] sm:$0xf]
    %v261 = vld [vmem:[%s1 + $0x1d8] sm:$0xf]
    %v262 = vld [vmem:[%s1 + $0x1dc] sm:$0xf]
    %v263 = vld [vmem:[%s1 + $0x1e0] sm:$0xf]
    %v264 = vld [vmem:[%s1 + $0x1e4] sm:$0xf]
    %v265 = vld [vmem:[%s1 + $0x1e8] sm:$0xf]
    %v266 = vld [vmem:[%s1 + $0x1ec] sm:$0xf]
    %v267 = vld [vmem:[%s1 + $0x1f0] sm:$0xf]
    %v268 = vld [vmem:[%s1 + $0x1f4] sm:$0xf]
    %v269 = vld [vmem:[%s1 + $0x1f8] sm:$0xf]
    %v270 = vld [vmem:[%s1 + $0x1fc] sm:$0xf]
    %v271 = vld [vmem:[%s1 + $0x200] sm:$0xf]
    %v272 = vld [vmem:[%s1 + $0x204] sm:$0xf]
    %v273 = vld [vmem:[%s1 + $0x208] sm:$0xf]
    %v274 = vld [vmem:[%s1 + $0x20c] sm:$0xf]
    %v275 = vld [vmem:[%s1 + $0x210] sm:$0xf]
    %v276 = vld [vmem:[%s1 + $0x214] sm:$0xf]
    %v277 = vld [vmem:[%s1 + $0x218] sm:$0xf]
    %v278 = vld [vmem:[%s1 + $0x21c] sm:$0xf]
    %v279 = vld [vmem:[%s1 + $0x220] sm:$0xf]
    %v280 = vld [vmem:[%s1 + $0x224] sm:$0xf]
    %v281 = vld [vmem:[%s1 + $0x228] sm:$0xf]
    %v282 = vld [vmem:[%s1 + $0x22c] sm:$0xf]
    %v283 = vld [vmem:[%s1 + $0x230] sm:$0xf]
    %v284 = vld [vmem:[%s1 + $0x234] sm:$0xf]
    %v285 = vld [vmem:[%s1 + $0x238] sm:$0xf]
    %v286 = vld [vmem:[%s1 + $0x23c] sm:$0xf]
    %v287 = vld [vmem:[%s1 + $0x240] sm:$0xf]
    %v288 = vld [vmem:[%s1 + $0x244] sm:$0xf]
    %v289 = vld [vmem:[%s1 + $0x248] sm:$0xf]
    %v290 = vld [vmem:[%s1 + $0x24c] sm:$0xf]
    %v291 = vld [vmem:[%s1 + $0x250] sm:$0xf]
    %v292 = vld [vmem:[%s1 + $0x254] sm:$0xf]
    %v293 = vld [vmem:[%s1 + $0x258] sm:$0xf]
    %v294 = vld [vmem:[%s1 + $0x25c] sm:$0xf]
    %v295 = vld [vmem:[%s1 + $0x260] sm:$0xf]
    %v296 = vld [vmem:[%s1 + $0x264] sm:$0xf]
    %v297 = vld [vmem:[%s1 + $0x268] sm:$0xf]
    %v298 = vld [vmem:[%s1 + $0x26c] sm:$0xf]
    %v299 = vld [vmem:[%s1 + $0x270] sm:$0xf]
    %v300 = vld [vmem:[%s1 + $0x274] sm:$0xf]
    %v301 = vld [vmem:[%s1 + $0x278] sm:$0xf]
    %v302 = vld [vmem:[%s1 + $0x27c] sm:$0xf]
    %v303 = vld [vmem:[%s1 + $0x280] sm:$0xf]
    %v304 = vld [vmem:[%s1 + $0x284] sm:$0xf]
    %v305 = vld [vmem:[%s1 + $0x288] sm:$0xf]
    %v306 = vld [vmem:[%s1 + $0x28c] sm:$0xf]
    %v307 = vld [vmem:[%s1 + $0x290] sm:$0xf]
    %v308 = vld [vmem:[%s1 + $0x294] sm:$0xf]
    %v309 = vld [vmem:[%s1 + $0x298] sm:$0xf]
    %v310 = vld [vmem:[%s1 + $0x29c] sm:$0xf]
    %v311 = vld [vmem:[%s1 + $0x2a0] sm:$0xf]
    %v312 = vld [vmem:[%s1 + $0x2a4] sm:$0xf]
    %v313 = vld [vmem:[%s1 + $0x2a8] sm:$0xf]
    %v314 = vld [vmem:[%s1 + $0x2ac] sm:$0xf]
    %v315 = vld [vmem:[%s1 + $0x2b0] sm:$0xf]
    %v316 = vld [vmem:[%s1 + $0x2b4] sm:$0xf]
    %v317 = vld [vmem:[%s1 + $0x2b8] sm:$0xf]
    %v318 = vld [vmem:[%s1 + $0x2bc] sm:$0xf]
    %v319 = vld [vmem:[%s1 + $0x2c0] sm:$0xf]
    %v320 = vld [vmem:[%s1 + $0x2c4] sm:$0xf]
    %v321 = vld [vmem:[%s1 + $0x2c8] sm:$0xf]
    %v322 = vld [vmem:[%s1 + $0x2cc] sm:$0xf]
    %v323 = vld [vmem:[%s1 + $0x2d0] sm:$0xf]
    %v324 = vld [vmem:[%s1 + $0x2d4] sm:$0xf]
    %v325 = vld [vmem:[%s1 + $0x2d8] sm:$0xf]
    %v326 = vld [vmem:[%s1 + $0x2dc] sm:$0xf]
    %v327 = vld [vmem:[%s1 + $0x2e0] sm:$0xf]
    %v328 = vld [vmem:[%s1 + $0x2e4] sm:$0xf]
    %v329 = vld [vmem:[%s1 + $0x2e8] sm:$0xf]
    %v330 = vld [vmem:[%s1 + $0x2ec] sm:$0xf]
    %v331 = vld [vmem:[%s1 + $0x2f0] sm:$0xf]
    %v332 = vld [vmem:[%s1 + $0x2f4] sm:$0xf]
    %v333 = vld [vmem:[%s1 + $0x2f8] sm:$0xf]
    %v334 = vld [vmem:[%s1 + $0x2fc] sm:$0xf]
    %v335 = vld [vmem:[%s1 + $0x300] sm:$0xf]
    %v336 = vld [vmem:[%s1 + $0x304] sm:$0xf]
    %v337 = vld [vmem:[%s1 + $0x308] sm:$0xf]
    %v338 = vld [vmem:[%s1 + $0x30c] sm:$0xf]
    %v339 = vld [vmem:[%s1 + $0x310] sm:$0xf]
    %v340 = vld [vmem:[%s1 + $0x314] sm:$0xf]
    %v341 = vld [vmem:[%s1 + $0x318] sm:$0xf]
    %v342 = vld [vmem:[%s1 + $0x31c] sm:$0xf]
    %v343 = vld [vmem:[%s1 + $0x320] sm:$0xf]
    %v344 = vld [vmem:[%s1 + $0x324] sm:$0xf]
    %v345 = vld [vmem:[%s1 + $0x328] sm:$0xf]
    %v346 = vld [vmem:[%s1 + $0x32c] sm:$0xf]
    %v347 = vld [vmem:[%s1 + $0x330] sm:$0xf]
    %v348 = vld [vmem:[%s1 + $0x334] sm:$0xf]
    %v349 = vld [vmem:[%s1 + $0x338] sm:$0xf]
    %v350 = vld [vmem:[%s1 + $0x33c] sm:$0xf]
    %v351 = vld [vmem:[%s1 + $0x340] sm:$0xf]
    %v352 = vld [vmem:[%s1 + $0x344] sm:$0xf]
    %v353 = vld [vmem:[%s1 + $0x348] sm:$0xf]
    %v354 = vld [vmem:[%s1 + $0x34c] sm:$0xf]
    %v355 = vld [vmem:[%s1 + $0x350] sm:$0xf]
    %v356 = vld [vmem:[%s1 + $0x354] sm:$0xf]
    %v357 = vld [vmem:[%s1 + $0x358] sm:$0xf]
    %v358 = vld [vmem:[%s1 + $0x35c] sm:$0xf]
    %v359 = vld [vmem:[%s1 + $0x360] sm:$0xf]
    %v360 = vld [vmem:[%s1 + $0x364] sm:$0xf]
    %v361 = vld [vmem:[%s1 + $0x368] sm:$0xf]
    %v362 = vld [vmem:[%s1 + $0x36c] sm:$0xf]
    %v363 = vld [vmem:[%s1 + $0x370] sm:$0xf]
    %v364 = vld [vmem:[%s1 + $0x374] sm:$0xf]
    %v365 = vld [vmem:[%s1 + $0x378] sm:$0xf]
    %v366 = vld [vmem:[%s1 + $0x37c] sm:$0xf]
    %v367 = vld [vmem:[%s1 + $0x380] sm:$0xf]
    %v368 = vld [vmem:[%s1 + $0x384] sm:$0xf]
    %v369 = vld [vmem:[%s1 + $0x388] sm:$0xf]
    %v370 = vld [vmem:[%s1 + $0x38c] sm:$0xf]
    %v371 = vld [vmem:[%s1 + $0x390] sm:$0xf]
    %v372 = vld [vmem:[%s1 + $0x394] sm:$0xf]
    %v373 = vld [vmem:[%s1 + $0x398] sm:$0xf]
    %v374 = vld [vmem:[%s1 + $0x39c] sm:$0xf]
    %v375 = vld [vmem:[%s1 + $0x3a0] sm:$0xf]
    %v376 = vld [vmem:[%s1 + $0x3a4] sm:$0xf]
    %v377 = vld [vmem:[%s1 + $0x3a8] sm:$0xf]
    %v378 = vld [vmem:[%s1 + $0x3ac] sm:$0xf]
    %v379 = vld [vmem:[%s1 + $0x3b0] sm:$0xf]
    %v380 = vld [vmem:[%s1 + $0x3b4] sm:$0xf]
    %v381 = vld [vmem:[%s1 + $0x3b8] sm:$0xf]
    %v382 = vld [vmem:[%s1 + $0x3bc] sm:$0xf]
    %v383 = vld [vmem:[%s1 + $0x3c0] sm:$0xf]
    %v384 = vld [vmem:[%s1 + $0x3c4] sm:$0xf]
    %v385 = vld [vmem:[%s1 + $0x3c8] sm:$0xf]
    %v386 = vld [vmem:[%s1 + $0x3cc] sm:$0xf]
    %v387 = vld [vmem:[%s1 + $0x3d0] sm:$0xf]
    %v388 = vld [vmem:[%s1 + $0x3d4] sm:$0xf]
    %v389 = vld [vmem:[%s1 + $0x3d8] sm:$0xf]
    %v390 = vld [vmem:[%s1 + $0x3dc] sm:$0xf]
    %v391 = vld [vmem:[%s1 + $0x3e0] sm:$0xf]
    %v392 = vld [vmem:[%s1 + $0x3e4] sm:$0xf]
    %v393 = vld [vmem:[%s1 + $0x3e8] sm:$0xf]
    %v394 = vld [vmem:[%s1 + $0x3ec] sm:$0xf]
    %v395 = vld [vmem:[%s1 + $0x3f0] sm:$0xf]
    %v396 = vld [vmem:[%s1 + $0x3f4] sm:$0xf]
    %v397 = vld [vmem:[%s1 + $0x3f8] sm:$0xf]
    %v398 = vld [vmem:[%s1 + $0x3fc] sm:$0xf]
    %v399 = vld [vmem:[%s1 + $0x400] sm:$0xf]
    %v400 = vld [vmem:[%s1 + $0x404] sm:$0xf]
    %v401 = vld [vmem:[%s1 + $0x408] sm:$0xf]
    %v402 = vld [vmem:[%s1 + $0x40c] sm:$0xf]
    %v403 = vld [vmem:[%s1 + $0x410] sm:$0xf]
    %v404 = vld [vmem:[%s1 + $0x414] sm:$0xf]
    %v405 = vld [vmem:[%s1 + $0x418] sm:$0xf]
    %v406 = vld [vmem:[%s1 + $0x41c] sm:$0xf]
    %v407 = vld [vmem:[%s1 + $0x420] sm:$0xf]
    %v408 = vld [vmem:[%s1 + $0x424] sm:$0xf]
    %v409 = vld [vmem:[%s1 + $0x428] sm:$0xf]
    %v410 = vld [vmem:[%s1 + $0x42c] sm:$0xf]
    %v411 = vld [vmem:[%s1 + $0x430] sm:$0xf]
    %v412 = vld [vmem:[%s1 + $0x434] sm:$0xf]
    %v413 = vld [vmem:[%s1 + $0x438] sm:$0xf]
    %v414 = vld [vmem:[%s1 + $0x43c] sm:$0xf]
    %v415 = vld [vmem:[%s1 + $0x440] sm:$0xf]
    %v416 = vld [vmem:[%s1 + $0x444] sm:$0xf]
    %v417 = vld [vmem:[%s1 + $0x448] sm:$0xf]
    %v418 = vld [vmem:[%s1 + $0x44c] sm:$0xf]
    %v419 = vld [vmem:[%s1 + $0x450] sm:$0xf]
    %v420 = vld [vmem:[%s1 + $0x454] sm:$0xf]
    %v421 = vld [vmem:[%s1 + $0x458] sm:$0xf]
    %v422 = vld [vmem:[%s1 + $0x45c] sm:$0xf]
    %v423 = vld [vmem:[%s1 + $0x460] sm:$0xf]
    %v424 = vld [vmem:[%s1 + $0x464] sm:$0xf]
    %v425 = vld [vmem:[%s1 + $0x468] sm:$0xf]
    %v426 = vld [vmem:[%s1 + $0x46c] sm:$0xf]
    %v427 = vld [vmem:[%s1 + $0x470] sm:$0xf]
    %v428 = vld [vmem:[%s1 + $0x474] sm:$0xf]
    %v429 = vld [vmem:[%s1 + $0x478] sm:$0xf]
    %v430 = vld [vmem:[%s1 + $0x47c] sm:$0xf]
    %v431 = vld [vmem:[%s1 + $0x480] sm:$0xf]
    %v432 = vld [vmem:[%s1 + $0x484] sm:$0xf]
    %v433 = vld [vmem:[%s1 + $0x488] sm:$0xf]
    %v434 = vld [vmem:[%s1 + $0x48c] sm:$0xf]
    %v435 = vld [vmem:[%s1 + $0x490] sm:$0xf]
    %v436 = vld [vmem:[%s1 + $0x494] sm:$0xf]
    %v437 = vld [vmem:[%s1 + $0x498] sm:$0xf]
    %v438 = vld [vmem:[%s1 + $0x49c] sm:$0xf]
    %v439 = vld [vmem:[%s1 + $0x4a0] sm:$0xf]
    %v440 = vld [vmem:[%s1 + $0x4a4] sm:$0xf]
    %v441 = vld [vmem:[%s1 + $0x4a8] sm:$0xf]
    %v442 = vld [vmem:[%s1 + $0x4ac] sm:$0xf]
    %v443 = vld [vmem:[%s1 + $0x4b0] sm:$0xf]
    %v444 = vld [vmem:[%s1 + $0x4b4] sm:$0xf]
    %v445 = vld [vmem:[%s1 + $0x4b8] sm:$0xf]
    %v446 = vld [vmem:[%s1 + $0x4bc] sm:$0xf]
    %v447 = vld [vmem:[%s1 + $0x4c0] sm:$0xf]
    %v448 = vld [vmem:[%s1 + $0x4c4] sm:$0xf]
    %v449 = vld [vmem:[%s1 + $0x4c8] sm:$0xf]
    %v450 = vld [vmem:[%s1 + $0x4cc] sm:$0xf]
    %v451 = vld [vmem:[%s1 + $0x4d0] sm:$0xf]
    %v452 = vld [vmem:[%s1 + $0x4d4] sm:$0xf]
    %v453 = vld [vmem:[%s1 + $0x4d8] sm:$0xf]
    %v454 = vld [vmem:[%s1 + $0x4dc] sm:$0xf]
    %v455 = vld [vmem:[%s1 + $0x4e0] sm:$0xf]
    %v456 = vld [vmem:[%s1 + $0x4e4] sm:$0xf]
    %v457 = vld [vmem:[%s1 + $0x4e8] sm:$0xf]
    %v458 = vld [vmem:[%s1 + $0x4ec] sm:$0xf]
    %v459 = vld [vmem:[%s1 + $0x4f0] sm:$0xf]
    %v460 = vld [vmem:[%s1 + $0x4f4] sm:$0xf]
    %v461 = vld [vmem:[%s1 + $0x4f8] sm:$0xf]
    %v462 = vld [vmem:[%s1 + $0x4fc] sm:$0xf]
    %v463 = vld [vmem:[%s1 + $0x500] sm:$0xf]
    %v464 = vld [vmem:[%s1 + $0x504] sm:$0xf]
    %v465 = vld [vmem:[%s1 + $0x508] sm:$0xf]
    %v466 = vld [vmem:[%s1 + $0x50c] sm:$0xf]
    %v467 = vld [vmem:[%s1 + $0x510] sm:$0xf]
    %v468 = vld [vmem:[%s1 + $0x514] sm:$0xf]
    %v469 = vld [vmem:[%s1 + $0x518] sm:$0xf]
    %v470 = vld [vmem:[%s1 + $0x51c] sm:$0xf]
    %v471 = vld [vmem:[%s1 + $0x520] sm:$0xf]
    %v472 = vld [vmem:[%s1 + $0x524] sm:$0xf]
    %v473 = vld [vmem:[%s1 + $0x528] sm:$0xf]
    %v474 = vld [vmem:[%s1 + $0x52c] sm:$0xf]
    %v475 = vld [vmem:[%s1 + $0x530] sm:$0xf]
    %v476 = vld [vmem:[%s1 + $0x534] sm:$0xf]
    %v477 = vld [vmem:[%s1 + $0x538] sm:$0xf]
    %v478 = vld [vmem:[%s1 + $0x53c] sm:$0xf]
    %v479 = vld [vmem:[%s1 + $0x540] sm:$0xf]
    %v480 = vld [vmem:[%s1 + $0x544] sm:$0xf]
    %v481 = vld [vmem:[%s1 + $0x548] sm:$0xf]
    %v482 = vld [vmem:[%s1 + $0x54c] sm:$0xf]
    %v483 = vld [vmem:[%s1 + $0x550] sm:$0xf]
    %v484 = vld [vmem:[%s1 + $0x554] sm:$0xf]
    %v485 = vld [vmem:[%s1 + $0x558] sm:$0xf]
    %v486 = vld [vmem:[%s1 + $0x55c] sm:$0xf]
    %v487 = vld [vmem:[%s1 + $0x560] sm:$0xf]
    %v488 = vld [vmem:[%s1 + $0x564] sm:$0xf]
    %v489 = vld [vmem:[%s1 + $0x568] sm:$0xf]
    %v490 = vld [vmem:[%s1 + $0x56c] sm:$0xf]
    %v491 = vld [vmem:[%s1 + $0x570] sm:$0xf]
    %v492 = vld [vmem:[%s1 + $0x574] sm:$0xf]
    %v493 = vld [vmem:[%s1 + $0x578] sm:$0xf]
    %v494 = vld [vmem:[%s1 + $0x57c] sm:$0xf]
    %v495 = vld [vmem:[%s1 + $0x580] sm:$0xf]
    %v496 = vld [vmem:[%s1 + $0x584] sm:$0xf]
    %v497 = vld [vmem:[%s1 + $0x588] sm:$0xf]
    %v498 = vld [vmem:[%s1 + $0x58c] sm:$0xf]
    %v499 = vld [vmem:[%s1 + $0x590] sm:$0xf]
    %v500 = vld [vmem:[%s1 + $0x594] sm:$0xf]
    %v501 = vld [vmem:[%s1 + $0x598] sm:$0xf]
    %v502 = vld [vmem:[%s1 + $0x59c] sm:$0xf]
    %v503 = vld [vmem:[%s1 + $0x5a0] sm:$0xf]
    %v504 = vld [vmem:[%s1 + $0x5a4] sm:$0xf]
    %v505 = vld [vmem:[%s1 + $0x5a8] sm:$0xf]
    %v506 = vld [vmem:[%s1 + $0x5ac] sm:$0xf]
    %v507 = vld [vmem:[%s1 + $0x5b0] sm:$0xf]
    %v508 = vld [vmem:[%s1 + $0x5b4] sm:$0xf]
    %v509 = vld [vmem:[%s1 + $0x5b8] sm:$0xf]
    %v510 = vld [vmem:[%s1 + $0x5bc] sm:$0xf]
    %v511 = vld [vmem:[%s1 + $0x5c0] sm:$0xf]
    %v512 = vld [vmem:[%s1 + $0x5c4] sm:$0xf]
    %v513 = vld [vmem:[%s1 + $0x5c8] sm:$0xf]
    %v514 = vld [vmem:[%s1 + $0x5cc] sm:$0xf]
    %v515 = vld [vmem:[%s1 + $0x5d0] sm:$0xf]
    %v516 = vld [vmem:[%s1 + $0x5d4] sm:$0xf]
    %v517 = vld [vmem:[%s1 + $0x5d8] sm:$0xf]
    %v518 = vld [vmem:[%s1 + $0x5dc] sm:$0xf]
    %v519 = vld [vmem:[%s1 + $0x5e0] sm:$0xf]
    %v520 = vld [vmem:[%s1 + $0x5e4] sm:$0xf]
    %v521 = vld [vmem:[%s1 + $0x5e8] sm:$0xf]
    %v522 = vld [vmem:[%s1 + $0x5ec] sm:$0xf]
    %v523 = vld [vmem:[%s1 + $0x5f0] sm:$0xf]
    %v524 = vld [vmem:[%s1 + $0x5f4] sm:$0xf]
    %v525 = vld [vmem:[%s1 + $0x5f8] sm:$0xf]
    %v526 = vld [vmem:[%s1 + $0x5fc] sm:$0xf]
    %v527 = vld [vmem:[%s1 + $0x600] sm:$0xf]
    %v528 = vld [vmem:[%s1 + $0x604] sm:$0xf]
    %v529 = vld [vmem:[%s1 + $0x608] sm:$0xf]
    %v530 = vld [vmem:[%s1 + $0x60c] sm:$0xf]
    %v531 = vld [vmem:[%s1 + $0x610] sm:$0xf]
    %v532 = vld [vmem:[%s1 + $0x614] sm:$0xf]
    %v533 = vld [vmem:[%s1 + $0x618] sm:$0xf]
    %v534 = vld [vmem:[%s1 + $0x61c] sm:$0xf]
    %v535 = vld [vmem:[%s1 + $0x620] sm:$0xf]
    %v536 = vld [vmem:[%s1 + $0x624] sm:$0xf]
    %v537 = vld [vmem:[%s1 + $0x628] sm:$0xf]
    %v538 = vld [vmem:[%s1 + $0x62c] sm:$0xf]
    %v539 = vld [vmem:[%s1 + $0x630] sm:$0xf]
    %v540 = vld [vmem:[%s1 + $0x634] sm:$0xf]
    %v541 = vld [vmem:[%s1 + $0x638] sm:$0xf]
    %v542 = vld [vmem:[%s1 + $0x63c] sm:$0xf]
    %v543 = vld [vmem:[%s1 + $0x640] sm:$0xf]
    %v544 = vld [vmem:[%s1 + $0x644] sm:$0xf]
    %v545 = vld [vmem:[%s1 + $0x648] sm:$0xf]
    %v546 = vld [vmem:[%s1 + $0x64c] sm:$0xf]
    %v547 = vld [vmem:[%s1 + $0x650] sm:$0xf]
    %v548 = vld [vmem:[%s1 + $0x654] sm:$0xf]
    %v549 = vld [vmem:[%s1 + $0x658] sm:$0xf]
    %v550 = vld [vmem:[%s1 + $0x65c] sm:$0xf]
    %v551 = vld [vmem:[%s1 + $0x660] sm:$0xf]
    %v552 = vld [vmem:[%s1 + $0x664] sm:$0xf]
    %v553 = vld [vmem:[%s1 + $0x668] sm:$0xf]
    %v554 = vld [vmem:[%s1 + $0x66c] sm:$0xf]
    %v555 = vld [vmem:[%s1 + $0x670] sm:$0xf]
    %v556 = vld [vmem:[%s1 + $0x674] sm:$0xf]
    %v557 = vld [vmem:[%s1 + $0x678] sm:$0xf]
    %v558 = vld [vmem:[%s1 + $0x67c] sm:$0xf]
    %v559 = vld [vmem:[%s1 + $0x680] sm:$0xf]
    %v560 = vld [vmem:[%s1 + $0x684] sm:$0xf]
    %v561 = vld [vmem:[%s1 + $0x688] sm:$0xf]
    %v562 = vld [vmem:[%s1 + $0x68c] sm:$0xf]
    %v563 = vld [vmem:[%s1 + $0x690] sm:$0xf]
    %v564 = vld [vmem:[%s1 + $0x694] sm:$0xf]
    %v565 = vld [vmem:[%s1 + $0x698] sm:$0xf]
    %v566 = vld [vmem:[%s1 + $0x69c] sm:$0xf]
    %v567 = vld [vmem:[%s1 + $0x6a0] sm:$0xf]
    %v568 = vld [vmem:[%s1 + $0x6a4] sm:$0xf]
    %v569 = vld [vmem:[%s1 + $0x6a8] sm:$0xf]
    %v570 = vld [vmem:[%s1 + $0x6ac] sm:$0xf]
    %v571 = vld [vmem:[%s1 + $0x6b0] sm:$0xf]
    %v572 = vld [vmem:[%s1 + $0x6b4] sm:$0xf]
    %v573 = vld [vmem:[%s1 + $0x6b8] sm:$0xf]
    %v574 = vld [vmem:[%s1 + $0x6bc] sm:$0xf]
    %v575 = vld [vmem:[%s1 + $0x6c0] sm:$0xf]
    %v576 = vld [vmem:[%s1 + $0x6c4] sm:$0xf]
    %v577 = vld [vmem:[%s1 + $0x6c8] sm:$0xf]
    %v578 = vld [vmem:[%s1 + $0x6cc] sm:$0xf]
    %v579 = vld [vmem:[%s1 + $0x6d0] sm:$0xf]
    %v580 = vld [vmem:[%s1 + $0x6d4] sm:$0xf]
    %v581 = vld [vmem:[%s1 + $0x6d8] sm:$0xf]
    %v582 = vld [vmem:[%s1 + $0x6dc] sm:$0xf]
    %v583 = vld [vmem:[%s1 + $0x6e0] sm:$0xf]
    %v584 = vld [vmem:[%s1 + $0x6e4] sm:$0xf]
    %v585 = vld [vmem:[%s1 + $0x6e8] sm:$0xf]
    %v586 = vld [vmem:[%s1 + $0x6ec] sm:$0xf]
    %v587 = vld [vmem:[%s1 + $0x6f0] sm:$0xf]
    %v588 = vld [vmem:[%s1 + $0x6f4] sm:$0xf]
    %v589 = vld [vmem:[%s1 + $0x6f8] sm:$0xf]
    %v590 = vld [vmem:[%s1 + $0x6fc] sm:$0xf]
    %v591 = vld [vmem:[%s1 + $0x700] sm:$0xf]
    %v592 = vld [vmem:[%s1 + $0x704] sm:$0xf]
    %v593 = vld [vmem:[%s1 + $0x708] sm:$0xf]
    %v594 = vld [vmem:[%s1 + $0x70c] sm:$0xf]
    %v595 = vld [vmem:[%s1 + $0x710] sm:$0xf]
    %v596 = vld [vmem:[%s1 + $0x714] sm:$0xf]
    %v597 = vld [vmem:[%s1 + $0x718] sm:$0xf]
    %v598 = vld [vmem:[%s1 + $0x71c] sm:$0xf]
    %v599 = vld [vmem:[%s1 + $0x720] sm:$0xf]
    %v600 = vld [vmem:[%s1 + $0x724] sm:$0xf]
    %v601 = vld [vmem:[%s1 + $0x728] sm:$0xf]
    %v602 = vld [vmem:[%s1 + $0x72c] sm:$0xf]
    %v603 = vld [vmem:[%s1 + $0x730] sm:$0xf]
    %v604 = vld [vmem:[%s1 + $0x734] sm:$0xf]
    %v605 = vld [vmem:[%s1 + $0x738] sm:$0xf]
    %v606 = vld [vmem:[%s1 + $0x73c] sm:$0xf]
    %v607 = vld [vmem:[%s1 + $0x740] sm:$0xf]
    %v608 = vld [vmem:[%s1 + $0x744] sm:$0xf]
    %v609 = vld [vmem:[%s1 + $0x748] sm:$0xf]
    %v610 = vld [vmem:[%s1 + $0x74c] sm:$0xf]
    %v611 = vld [vmem:[%s1 + $0x750] sm:$0xf]
    %v612 = vld [vmem:[%s1 + $0x754] sm:$0xf]
    %v613 = vld [vmem:[%s1 + $0x758] sm:$0xf]
    %v614 = vld [vmem:[%s1 + $0x75c] sm:$0xf]
    %v615 = vld [vmem:[%s1 + $0x760] sm:$0xf]
    %v616 = vld [vmem:[%s1 + $0x764] sm:$0xf]
    %v617 = vld [vmem:[%s1 + $0x768] sm:$0xf]
    %v618 = vld [vmem:[%s1 + $0x76c] sm:$0xf]
    %v619 = vld [vmem:[%s1 + $0x770] sm:$0xf]
    %v620 = vld [vmem:[%s1 + $0x774] sm:$0xf]
    %v621 = vld [vmem:[%s1 + $0x778] sm:$0xf]
    %v622 = vld [vmem:[%s1 + $0x77c] sm:$0xf]
    %v623 = vld [vmem:[%s1 + $0x780] sm:$0xf]
    %v624 = vld [vmem:[%s1 + $0x784] sm:$0xf]
    %v625 = vld [vmem:[%s1 + $0x788] sm:$0xf]
    %v626 = vld [vmem:[%s1 + $0x78c] sm:$0xf]
    %v627 = vld [vmem:[%s1 + $0x790] sm:$0xf]
    %v628 = vld [vmem:[%s1 + $0x794] sm:$0xf]
    %v629 = vld [vmem:[%s1 + $0x798] sm:$0xf]
    %v630 = vld [vmem:[%s1 + $0x79c] sm:$0xf]
    %v631 = vld [vmem:[%s1 + $0x7a0] sm:$0xf]
    %v632 = vld [vmem:[%s1 + $0x7a4] sm:$0xf]
    %v633 = vld [vmem:[%s1 + $0x7a8] sm:$0xf]
    %v634 = vld [vmem:[%s1 + $0x7ac] sm:$0xf]
    %v635 = vld [vmem:[%s1 + $0x7b0] sm:$0xf]
    %v636 = vld [vmem:[%s1 + $0x7b4] sm:$0xf]
    %v637 = vld [vmem:[%s1 + $0x7b8] sm:$0xf]
    %v638 = vld [vmem:[%s1 + $0x7bc] sm:$0xf]
    %v639 = vld [vmem:[%s1 + $0x7c0] sm:$0xf]
    %v640 = vld [vmem:[%s1 + $0x7c4] sm:$0xf]
    %v641 = vld [vmem:[%s1 + $0x7c8] sm:$0xf]
    %v642 = vld [vmem:[%s1 + $0x7cc] sm:$0xf]
    %v643 = vld [vmem:[%s1 + $0x7d0] sm:$0xf]
    %v644 = vld [vmem:[%s1 + $0x7d4] sm:$0xf]
    %v645 = vld [vmem:[%s1 + $0x7d8] sm:$0xf]
    %v646 = vld [vmem:[%s1 + $0x7dc] sm:$0xf]
    %v647 = vld [vmem:[%s1 + $0x7e0] sm:$0xf]
    %v648 = vld [vmem:[%s1 + $0x7e4] sm:$0xf]
    %v649 = vld [vmem:[%s1 + $0x7e8] sm:$0xf]
    %v650 = vld [vmem:[%s1 + $0x7ec] sm:$0xf]
    %v651 = vld [vmem:[%s1 + $0x7f0] sm:$0xf]
    %v652 = vld [vmem:[%s1 + $0x7f4] sm:$0xf]
    %v653 = vld [vmem:[%s1 + $0x7f8] sm:$0xf]
    %v654 = vld [vmem:[%s1 + $0x7fc] sm:$0xf]
    %v655 = vld [vmem:[%s1 + $0x800] sm:$0xf]
    %v656 = vld [vmem:[%s1 + $0x804] sm:$0xf]
    %v657 = vld [vmem:[%s1 + $0x808] sm:$0xf]
    %v658 = vld [vmem:[%s1 + $0x80c] sm:$0xf]
    %v659 = vld [vmem:[%s1 + $0x810] sm:$0xf]
    %v660 = vld [vmem:[%s1 + $0x814] sm:$0xf]
    %v661 = vld [vmem:[%s1 + $0x818] sm:$0xf]
    %v662 = vld [vmem:[%s1 + $0x81c] sm:$0xf]
    %v663 = vld [vmem:[%s1 + $0x820] sm:$0xf]
    %v664 = vld [vmem:[%s1 + $0x824] sm:$0xf]
    %v665 = vld [vmem:[%s1 + $0x828] sm:$0xf]
    %v666 = vld [vmem:[%s1 + $0x82c] sm:$0xf]
    %v667 = vld [vmem:[%s1 + $0x830] sm:$0xf]
    %v668 = vld [vmem:[%s1 + $0x834] sm:$0xf]
    %v669 = vld [vmem:[%s1 + $0x838] sm:$0xf]
    %v670 = vld [vmem:[%s1 + $0x83c] sm:$0xf]
    %v671 = vld [vmem:[%s1 + $0x840] sm:$0xf]
    %v672 = vld [vmem:[%s1 + $0x844] sm:$0xf]
    %v673 = vld [vmem:[%s1 + $0x848] sm:$0xf]
    %v674 = vld [vmem:[%s1 + $0x84c] sm:$0xf]
    %v675 = vld [vmem:[%s1 + $0x850] sm:$0xf]
    %v676 = vld [vmem:[%s1 + $0x854] sm:$0xf]
    %v677 = vld [vmem:[%s1 + $0x858] sm:$0xf]
    %v678 = vld [vmem:[%s1 + $0x85c] sm:$0xf]
    %v679 = vld [vmem:[%s1 + $0x860] sm:$0xf]
    %v680 = vld [vmem:[%s1 + $0x864] sm:$0xf]
    %v681 = vld [vmem:[%s1 + $0x868] sm:$0xf]
    %v682 = vld [vmem:[%s1 + $0x86c] sm:$0xf]
    %v683 = vld [vmem:[%s1 + $0x870] sm:$0xf]
    %v684 = vld [vmem:[%s1 + $0x874] sm:$0xf]
    %v685 = vld [vmem:[%s1 + $0x878] sm:$0xf]
    %v686 = vld [vmem:[%s1 + $0x87c] sm:$0xf]
    %v687 = vld [vmem:[%s1 + $0x880] sm:$0xf]
    %v688 = vld [vmem:[%s1 + $0x884] sm:$0xf]
    %v689 = vld [vmem:[%s1 + $0x888] sm:$0xf]
    %v690 = vld [vmem:[%s1 + $0x88c] sm:$0xf]
    %v691 = vld [vmem:[%s1 + $0x890] sm:$0xf]
    %v692 = vld [vmem:[%s1 + $0x894] sm:$0xf]
    %v693 = vld [vmem:[%s1 + $0x898] sm:$0xf]
    %v694 = vld [vmem:[%s1 + $0x89c] sm:$0xf]
    %v695 = vld [vmem:[%s1 + $0x8a0] sm:$0xf]
    %v696 = vld [vmem:[%s1 + $0x8a4] sm:$0xf]
    %v697 = vld [vmem:[%s1 + $0x8a8] sm:$0xf]
    %v698 = vld [vmem:[%s1 + $0x8ac] sm:$0xf]
    %v699 = vld [vmem:[%s1 + $0x8b0] sm:$0xf]
    %v700 = vld [vmem:[%s1 + $0x8b4] sm:$0xf]
    %v701 = vld [vmem:[%s1 + $0x8b8] sm:$0xf]
    %v702 = vld [vmem:[%s1 + $0x8bc] sm:$0xf]
    %v703 = vld [vmem:[%s1 + $0x8c0] sm:$0xf]
    %v704 = vld [vmem:[%s1 + $0x8c4] sm:$0xf]
    %v705 = vld [vmem:[%s1 + $0x8c8] sm:$0xf]
    %v706 = vld [vmem:[%s1 + $0x8cc] sm:$0xf]
    %v707 = vld [vmem:[%s1 + $0x8d0] sm:$0xf]
    %v708 = vld [vmem:[%s1 + $0x8d4] sm:$0xf]
    %v709 = vld [vmem:[%s1 + $0x8d8] sm:$0xf]
    %v710 = vld [vmem:[%s1 + $0x8dc] sm:$0xf]
    %v711 = vld [vmem:[%s1 + $0x8e0] sm:$0xf]
    %v712 = vld [vmem:[%s1 + $0x8e4] sm:$0xf]
    %v713 = vld [vmem:[%s1 + $0x8e8] sm:$0xf]
    %v714 = vld [vmem:[%s1 + $0x8ec] sm:$0xf]
    %v715 = vld [vmem:[%s1 + $0x8f0] sm:$0xf]
    %v716 = vld [vmem:[%s1 + $0x8f4] sm:$0xf]
    %v717 = vld [vmem:[%s1 + $0x8f8] sm:$0xf]
    %v718 = vld [vmem:[%s1 + $0x8fc] sm:$0xf]
    %v719 = vld [vmem:[%s1 + $0x900] sm:$0xf]
    %v720 = vld [vmem:[%s1 + $0x904] sm:$0xf]
    %v721 = vld [vmem:[%s1 + $0x908] sm:$0xf]
    %v722 = vld [vmem:[%s1 + $0x90c] sm:$0xf]
    %v723 = vld [vmem:[%s1 + $0x910] sm:$0xf]
    %v724 = vld [vmem:[%s1 + $0x914] sm:$0xf]
    %v725 = vld [vmem:[%s1 + $0x918] sm:$0xf]
    %v726 = vld [vmem:[%s1 + $0x91c] sm:$0xf]
    %v727 = vld [vmem:[%s1 + $0x920] sm:$0xf]
    %v728 = vld [vmem:[%s1 + $0x924] sm:$0xf]
    %v729 = vld [vmem:[%s1 + $0x928] sm:$0xf]
    %v730 = vld [vmem:[%s1 + $0x92c] sm:$0xf]
    %v731 = vld [vmem:[%s1 + $0x930] sm:$0xf]
    %v732 = vld [vmem:[%s1 + $0x934] sm:$0xf]
    %v733 = vld [vmem:[%s1 + $0x938] sm:$0xf]
    %v734 = vld [vmem:[%s1 + $0x93c] sm:$0xf]
    %v735 = vld [vmem:[%s1 + $0x940] sm:$0xf]
    %v736 = vld [vmem:[%s1 + $0x944] sm:$0xf]
    %v737 = vld [vmem:[%s1 + $0x948] sm:$0xf]
    %v738 = vld [vmem:[%s1 + $0x94c] sm:$0xf]
    %v739 = vld [vmem:[%s1 + $0x950] sm:$0xf]
    %v740 = vld [vmem:[%s1 + $0x954] sm:$0xf]
    %v741 = vld [vmem:[%s1 + $0x958] sm:$0xf]
    %v742 = vld [vmem:[%s1 + $0x95c] sm:$0xf]
    %v743 = vld [vmem:[%s1 + $0x960] sm:$0xf]
    %v744 = vld [vmem:[%s1 + $0x964] sm:$0xf]
    %v745 = vld [vmem:[%s1 + $0x968] sm:$0xf]
    %v746 = vld [vmem:[%s1 + $0x96c] sm:$0xf]
    %v747 = vld [vmem:[%s1 + $0x970] sm:$0xf]
    %v748 = vld [vmem:[%s1 + $0x974] sm:$0xf]
    %v749 = vld [vmem:[%s1 + $0x978] sm:$0xf]
    %v750 = vld [vmem:[%s1 + $0x97c] sm:$0xf]
    %v751 = vld [vmem:[%s1 + $0x980] sm:$0xf]
    %v752 = vld [vmem:[%s1 + $0x984] sm:$0xf]
    %v753 = vld [vmem:[%s1 + $0x988] sm:$0xf]
    %v754 = vld [vmem:[%s1 + $0x98c] sm:$0xf]
    %v755 = vld [vmem:[%s1 + $0x990] sm:$0xf]
    %v756 = vld [vmem:[%s1 + $0x994] sm:$0xf]
    %v757 = vld [vmem:[%s1 + $0x998] sm:$0xf]
    %v758 = vld [vmem:[%s1 + $0x99c] sm:$0xf]
    %v759 = vld [vmem:[%s1 + $0x9a0] sm:$0xf]
    %v760 = vld [vmem:[%s1 + $0x9a4] sm:$0xf]
    %v761 = vld [vmem:[%s1 + $0x9a8] sm:$0xf]
    %v762 = vld [vmem:[%s1 + $0x9ac] sm:$0xf]
    %v763 = vld [vmem:[%s1 + $0x9b0] sm:$0xf]
    %v764 = vld [vmem:[%s1 + $0x9b4] sm:$0xf]
    %v765 = vld [vmem:[%s1 + $0x9b8] sm:$0xf]
    %v766 = vld [vmem:[%s1 + $0x9bc] sm:$0xf]
    %v767 = vld [vmem:[%s1 + $0x9c0] sm:$0xf]
    %v768 = vld [vmem:[%s1 + $0x9c4] sm:$0xf]
    %v769 = vld [vmem:[%s1 + $0x9c8] sm:$0xf]
    %v770 = vld [vmem:[%s1 + $0x9cc] sm:$0xf]
    %v771 = vld [vmem:[%s1 + $0x9d0] sm:$0xf]
    %v772 = vld [vmem:[%s1 + $0x9d4] sm:$0xf]
    %v773 = vld [vmem:[%s1 + $0x9d8] sm:$0xf]
    %v774 = vld [vmem:[%s1 + $0x9dc] sm:$0xf]
    %v775 = vld [vmem:[%s1 + $0x9e0] sm:$0xf]
    %v776 = vld [vmem:[%s1 + $0x9e4] sm:$0xf]
    %v777 = vld [vmem:[%s1 + $0x9e8] sm:$0xf]
    %v778 = vld [vmem:[%s1 + $0x9ec] sm:$0xf]
    %v779 = vld [vmem:[%s1 + $0x9f0] sm:$0xf]
    %v780 = vld [vmem:[%s1 + $0x9f4] sm:$0xf]
    %v781 = vld [vmem:[%s1 + $0x9f8] sm:$0xf]
    %v782 = vld [vmem:[%s1 + $0x9fc] sm:$0xf]
    %v783 = vld [vmem:[%s1 + $0xa00] sm:$0xf]
    %v784 = vld [vmem:[%s1 + $0xa04] sm:$0xf]
    %v785 = vld [vmem:[%s1 + $0xa08] sm:$0xf]
    %v786 = vld [vmem:[%s1 + $0xa0c] sm:$0xf]
    %v787 = vld [vmem:[%s1 + $0xa10] sm:$0xf]
    %v788 = vld [vmem:[%s1 + $0xa14] sm:$0xf]
    %v789 = vld [vmem:[%s1 + $0xa18] sm:$0xf]
    %v790 = vld [vmem:[%s1 + $0xa1c] sm:$0xf]
    %v791 = vld [vmem:[%s1 + $0xa20] sm:$0xf]
    %v792 = vld [vmem:[%s1 + $0xa24] sm:$0xf]
    %v793 = vld [vmem:[%s1 + $0xa28] sm:$0xf]
    %v794 = vld [vmem:[%s1 + $0xa2c] sm:$0xf]
    %v795 = vld [vmem:[%s1 + $0xa30] sm:$0xf]
    %v796 = vld [vmem:[%s1 + $0xa34] sm:$0xf]
    %v797 = vld [vmem:[%s1 + $0xa38] sm:$0xf]
    %v798 = vld [vmem:[%s1 + $0xa3c] sm:$0xf]
    %v799 = vld [vmem:[%s1 + $0xa40] sm:$0xf]
    %v800 = vld [vmem:[%s1 + $0xa44] sm:$0xf]
    %v801 = vld [vmem:[%s1 + $0xa48] sm:$0xf]
    %v802 = vld [vmem:[%s1 + $0xa4c] sm:$0xf]
    %v803 = vld [vmem:[%s1 + $0xa50] sm:$0xf]
    %v804 = vld [vmem:[%s1 + $0xa54] sm:$0xf]
    %v805 = vld [vmem:[%s1 + $0xa58] sm:$0xf]
    %v806 = vld [vmem:[%s1 + $0xa5c] sm:$0xf]
    %v807 = vld [vmem:[%s1 + $0xa60] sm:$0xf]
    %v808 = vld [vmem:[%s1 + $0xa64] sm:$0xf]
    %v809 = vld [vmem:[%s1 + $0xa68] sm:$0xf]
    %v810 = vld [vmem:[%s1 + $0xa6c] sm:$0xf]
    %v811 = vld [vmem:[%s1 + $0xa70] sm:$0xf]
    %v812 = vld [vmem:[%s1 + $0xa74] sm:$0xf]
    %v813 = vld [vmem:[%s1 + $0xa78] sm:$0xf]
    %v814 = vld [vmem:[%s1 + $0xa7c] sm:$0xf]
    %v815 = vld [vmem:[%s1 + $0xa80] sm:$0xf]
    %v816 = vld [vmem:[%s1 + $0xa84] sm:$0xf]
    %v817 = vld [vmem:[%s1 + $0xa88] sm:$0xf]
    %v818 = vld [vmem:[%s1 + $0xa8c] sm:$0xf]
    %v819 = vld [vmem:[%s1 + $0xa90] sm:$0xf]
    %v820 = vld [vmem:[%s1 + $0xa94] sm:$0xf]
    %v821 = vld [vmem:[%s1 + $0xa98] sm:$0xf]
    %v822 = vld [vmem:[%s1 + $0xa9c] sm:$0xf]
    %v823 = vld [vmem:[%s1 + $0xaa0] sm:$0xf]
    %v824 = vld [vmem:[%s1 + $0xaa4] sm:$0xf]
    %v825 = vld [vmem:[%s1 + $0xaa8] sm:$0xf]
    %v826 = vld [vmem:[%s1 + $0xaac] sm:$0xf]
    %v827 = vld [vmem:[%s1 + $0xab0] sm:$0xf]
    %v828 = vld [vmem:[%s1 + $0xab4] sm:$0xf]
    %v829 = vld [vmem:[%s1 + $0xab8] sm:$0xf]
    %v830 = vld [vmem:[%s1 + $0xabc] sm:$0xf]
    %v831 = vld [vmem:[%s1 + $0xac0] sm:$0xf]
    %v832 = vld [vmem:[%s1 + $0xac4] sm:$0xf]
    %v833 = vld [vmem:[%s1 + $0xac8] sm:$0xf]
    %v834 = vld [vmem:[%s1 + $0xacc] sm:$0xf]
    %v835 = vld [vmem:[%s1 + $0xad0] sm:$0xf]
    %v836 = vld [vmem:[%s1 + $0xad4] sm:$0xf]
    %v837 = vld [vmem:[%s1 + $0xad8] sm:$0xf]
    %v838 = vld [vmem:[%s1 + $0xadc] sm:$0xf]
    %v839 = vld [vmem:[%s1 + $0xae0] sm:$0xf]
    %v840 = vld [vmem:[%s1 + $0xae4] sm:$0xf]
    %v841 = vld [vmem:[%s1 + $0xae8] sm:$0xf]
    %v842 = vld [vmem:[%s1 + $0xaec] sm:$0xf]
    %v843 = vld [vmem:[%s1 + $0xaf0] sm:$0xf]
    %v844 = vld [vmem:[%s1 + $0xaf4] sm:$0xf]
    %v845 = vld [vmem:[%s1 + $0xaf8] sm:$0xf]
    %v846 = vld [vmem:[%s1 + $0xafc] sm:$0xf]
    %v847 = vld [vmem:[%s1 + $0xb00] sm:$0xf]
    %v848 = vld [vmem:[%s1 + $0xb04] sm:$0xf]
    %v849 = vld [vmem:[%s1 + $0xb08] sm:$0xf]
    %v850 = vld [vmem:[%s1 + $0xb0c] sm:$0xf]
    %v851 = vld [vmem:[%s1 + $0xb10] sm:$0xf]
    %v852 = vld [vmem:[%s1 + $0xb14] sm:$0xf]
    %v853 = vld [vmem:[%s1 + $0xb18] sm:$0xf]
    %v854 = vld [vmem:[%s1 + $0xb1c] sm:$0xf]
    %v855 = vld [vmem:[%s1 + $0xb20] sm:$0xf]
    %v856 = vld [vmem:[%s1 + $0xb24] sm:$0xf]
    %v857 = vld [vmem:[%s1 + $0xb28] sm:$0xf]
    %v858 = vld [vmem:[%s1 + $0xb2c] sm:$0xf]
    %v859 = vld [vmem:[%s1 + $0xb30] sm:$0xf]
    %v860 = vld [vmem:[%s1 + $0xb34] sm:$0xf]
    %v861 = vld [vmem:[%s1 + $0xb38] sm:$0xf]
    %v862 = vld [vmem:[%s1 + $0xb3c] sm:$0xf]
    %v863 = vld [vmem:[%s1 + $0xb40] sm:$0xf]
    %v864 = vld [vmem:[%s1 + $0xb44] sm:$0xf]
    %v865 = vld [vmem:[%s1 + $0xb48] sm:$0xf]
    %v866 = vld [vmem:[%s1 + $0xb4c] sm:$0xf]
    %v867 = vld [vmem:[%s1 + $0xb50] sm:$0xf]
    %v868 = vld [vmem:[%s1 + $0xb54] sm:$0xf]
    %v869 = vld [vmem:[%s1 + $0xb58] sm:$0xf]
    %v870 = vld [vmem:[%s1 + $0xb5c] sm:$0xf]
    %v871 = vld [vmem:[%s1 + $0xb60] sm:$0xf]
    %v872 = vld [vmem:[%s1 + $0xb64] sm:$0xf]
    %v873 = vld [vmem:[%s1 + $0xb68] sm:$0xf]
    %v874 = vld [vmem:[%s1 + $0xb6c] sm:$0xf]
    %v875 = vld [vmem:[%s1 + $0xb70] sm:$0xf]
    %v876 = vld [vmem:[%s1 + $0xb74] sm:$0xf]
    %v877 = vld [vmem:[%s1 + $0xb78] sm:$0xf]
    %v878 = vld [vmem:[%s1 + $0xb7c] sm:$0xf]
    %v879 = vld [vmem:[%s1 + $0xb80] sm:$0xf]
    %v880 = vld [vmem:[%s1 + $0xb84] sm:$0xf]
    %v881 = vld [vmem:[%s1 + $0xb88] sm:$0xf]
    %v882 = vld [vmem:[%s1 + $0xb8c] sm:$0xf]
    %v883 = vld [vmem:[%s1 + $0xb90] sm:$0xf]
    %v884 = vld [vmem:[%s1 + $0xb94] sm:$0xf]
    %v885 = vld [vmem:[%s1 + $0xb98] sm:$0xf]
    %v886 = vld [vmem:[%s1 + $0xb9c] sm:$0xf]
    %v887 = vld [vmem:[%s1 + $0xba0] sm:$0xf]
    %v888 = vld [vmem:[%s1 + $0xba4] sm:$0xf]
    %v889 = vld [vmem:[%s1 + $0xba8] sm:$0xf]
    %v890 = vld [vmem:[%s1 + $0xbac] sm:$0xf]
    %v891 = vld [vmem:[%s1 + $0xbb0] sm:$0xf]
    %v892 = vld [vmem:[%s1 + $0xbb4] sm:$0xf]
    %v893 = vld [vmem:[%s1 + $0xbb8] sm:$0xf]
    %v894 = vld [vmem:[%s1 + $0xbbc] sm:$0xf]
    %v895 = vld [vmem:[%s1 + $0xbc0] sm:$0xf]
    %v896 = vld [vmem:[%s1 + $0xbc4] sm:$0xf]
    %v897 = vld [vmem:[%s1 + $0xbc8] sm:$0xf]
    %v898 = vld [vmem:[%s1 + $0xbcc] sm:$0xf]
    %v899 = vld [vmem:[%s1 + $0xbd0] sm:$0xf]
    %v900 = vld [vmem:[%s1 + $0xbd4] sm:$0xf]
    %v901 = vld [vmem:[%s1 + $0xbd8] sm:$0xf]
    %v902 = vld [vmem:[%s1 + $0xbdc] sm:$0xf]
    %v903 = vld [vmem:[%s1 + $0xbe0] sm:$0xf]
    %v904 = vld [vmem:[%s1 + $0xbe4] sm:$0xf]
    %v905 = vld [vmem:[%s1 + $0xbe8] sm:$0xf]
    %v906 = vld [vmem:[%s1 + $0xbec] sm:$0xf]
    %v907 = vld [vmem:[%s1 + $0xbf0] sm:$0xf]
    %v908 = vld [vmem:[%s1 + $0xbf4] sm:$0xf]
    %v909 = vld [vmem:[%s1 + $0xbf8] sm:$0xf]
    %v910 = vld [vmem:[%s1 + $0xbfc] sm:$0xf]
    %v911 = vld [vmem:[%s1 + $0xc00] sm:$0xf]
    %v912 = vld [vmem:[%s1 + $0xc04] sm:$0xf]
    %v913 = vld [vmem:[%s1 + $0xc08] sm:$0xf]
    %v914 = vld [vmem:[%s1 + $0xc0c] sm:$0xf]
    %v915 = vld [vmem:[%s1 + $0xc10] sm:$0xf]
    %v916 = vld [vmem:[%s1 + $0xc14] sm:$0xf]
    %v917 = vld [vmem:[%s1 + $0xc18] sm:$0xf]
    %v918 = vld [vmem:[%s1 + $0xc1c] sm:$0xf]
    %v919 = vld [vmem:[%s1 + $0xc20] sm:$0xf]
    %v920 = vld [vmem:[%s1 + $0xc24] sm:$0xf]
    %v921 = vld [vmem:[%s1 + $0xc28] sm:$0xf]
    %v922 = vld [vmem:[%s1 + $0xc2c] sm:$0xf]
    %v923 = vld [vmem:[%s1 + $0xc30] sm:$0xf]
    %v924 = vld [vmem:[%s1 + $0xc34] sm:$0xf]
    %v925 = vld [vmem:[%s1 + $0xc38] sm:$0xf]
    %v926 = vld [vmem:[%s1 + $0xc3c] sm:$0xf]
    %v927 = vld [vmem:[%s1 + $0xc40] sm:$0xf]
    %v928 = vld [vmem:[%s1 + $0xc44] sm:$0xf]
    %v929 = vld [vmem:[%s1 + $0xc48] sm:$0xf]
    %v930 = vld [vmem:[%s1 + $0xc4c] sm:$0xf]
    %v931 = vld [vmem:[%s1 + $0xc50] sm:$0xf]
    %v932 = vld [vmem:[%s1 + $0xc54] sm:$0xf]
    %v933 = vld [vmem:[%s1 + $0xc58] sm:$0xf]
    %v934 = vld [vmem:[%s1 + $0xc5c] sm:$0xf]
    %v935 = vld [vmem:[%s1 + $0xc60] sm:$0xf]
    %v936 = vld [vmem:[%s1 + $0xc64] sm:$0xf]
    %v937 = vld [vmem:[%s1 + $0xc68] sm:$0xf]
    %v938 = vld [vmem:[%s1 + $0xc6c] sm:$0xf]
    %v939 = vld [vmem:[%s1 + $0xc70] sm:$0xf]
    %v940 = vld [vmem:[%s1 + $0xc74] sm:$0xf]
    %v941 = vld [vmem:[%s1 + $0xc78] sm:$0xf]
    %v942 = vld [vmem:[%s1 + $0xc7c] sm:$0xf]
    %v943 = vld [vmem:[%s1 + $0xc80] sm:$0xf]
    %v944 = vld [vmem:[%s1 + $0xc84] sm:$0xf]
    %v945 = vld [vmem:[%s1 + $0xc88] sm:$0xf]
    %v946 = vld [vmem:[%s1 + $0xc8c] sm:$0xf]
    %v947 = vld [vmem:[%s1 + $0xc90] sm:$0xf]
    %v948 = vld [vmem:[%s1 + $0xc94] sm:$0xf]
    %v949 = vld [vmem:[%s1 + $0xc98] sm:$0xf]
    %v950 = vld [vmem:[%s1 + $0xc9c] sm:$0xf]
    %v951 = vld [vmem:[%s1 + $0xca0] sm:$0xf]
    %v952 = vld [vmem:[%s1 + $0xca4] sm:$0xf]
    %v953 = vld [vmem:[%s1 + $0xca8] sm:$0xf]
    %v954 = vld [vmem:[%s1 + $0xcac] sm:$0xf]
    %v955 = vld [vmem:[%s1 + $0xcb0] sm:$0xf]
    %v956 = vld [vmem:[%s1 + $0xcb4] sm:$0xf]
    %v957 = vld [vmem:[%s1 + $0xcb8] sm:$0xf]
    %v958 = vld [vmem:[%s1 + $0xcbc] sm:$0xf]
    %v959 = vld [vmem:[%s1 + $0xcc0] sm:$0xf]
    %v960 = vld [vmem:[%s1 + $0xcc4] sm:$0xf]
    %v961 = vld [vmem:[%s1 + $0xcc8] sm:$0xf]
    %v962 = vld [vmem:[%s1 + $0xccc] sm:$0xf]
    %v963 = vld [vmem:[%s1 + $0xcd0] sm:$0xf]
    %v964 = vld [vmem:[%s1 + $0xcd4] sm:$0xf]
    %v965 = vld [vmem:[%s1 + $0xcd8] sm:$0xf]
    %v966 = vld [vmem:[%s1 + $0xcdc] sm:$0xf]
    %v967 = vld [vmem:[%s1 + $0xce0] sm:$0xf]
    %v968 = vld [vmem:[%s1 + $0xce4] sm:$0xf]
    %v969 = vld [vmem:[%s1 + $0xce8] sm:$0xf]
    %v970 = vld [vmem:[%s1 + $0xcec] sm:$0xf]
    %v971 = vld [vmem:[%s1 + $0xcf0] sm:$0xf]
    %v972 = vld [vmem:[%s1 + $0xcf4] sm:$0xf]
    %v973 = vld [vmem:[%s1 + $0xcf8] sm:$0xf]
    %v974 = vld [vmem:[%s1 + $0xcfc] sm:$0xf]
    %v975 = vld [vmem:[%s1 + $0xd00] sm:$0xf]
    %v976 = vld [vmem:[%s1 + $0xd04] sm:$0xf]
    %v977 = vld [vmem:[%s1 + $0xd08] sm:$0xf]
    %v978 = vld [vmem:[%s1 + $0xd0c] sm:$0xf]
    %v979 = vld [vmem:[%s1 + $0xd10] sm:$0xf]
    %v980 = vld [vmem:[%s1 + $0xd14] sm:$0xf]
    %v981 = vld [vmem:[%s1 + $0xd18] sm:$0xf]
    %v982 = vld [vmem:[%s1 + $0xd1c] sm:$0xf]
    %v983 = vld [vmem:[%s1 + $0xd20] sm:$0xf]
    %v984 = vld [vmem:[%s1 + $0xd24] sm:$0xf]
    %v985 = vld [vmem:[%s1 + $0xd28] sm:$0xf]
    %v986 = vld [vmem:[%s1 + $0xd2c] sm:$0xf]
    %v987 = vld [vmem:[%s1 + $0xd30] sm:$0xf]
    %v988 = vld [vmem:[%s1 + $0xd34] sm:$0xf]
    %v989 = vld [vmem:[%s1 + $0xd38] sm:$0xf]
    %v990 = vld [vmem:[%s1 + $0xd3c] sm:$0xf]
    %v991 = vld [vmem:[%s1 + $0xd40] sm:$0xf]
    %v992 = vld [vmem:[%s1 + $0xd44] sm:$0xf]
    %v993 = vld [vmem:[%s1 + $0xd48] sm:$0xf]
    %v994 = vld [vmem:[%s1 + $0xd4c] sm:$0xf]
    %v995 = vld [vmem:[%s1 + $0xd50] sm:$0xf]
    %v996 = vld [vmem:[%s1 + $0xd54] sm:$0xf]
    %v997 = vld [vmem:[%s1 + $0xd58] sm:$0xf]
    %v998 = vld [vmem:[%s1 + $0xd5c] sm:$0xf]
    %v999 = vld [vmem:[%s1 + $0xd60] sm:$0xf]
    %v1000 = vld [vmem:[%s1 + $0xd64] sm:$0xf]
    %v1001 = vld [vmem:[%s1 + $0xd68] sm:$0xf]
    %v1002 = vld [vmem:[%s1 + $0xd6c] sm:$0xf]
    %v1003 = vld [vmem:[%s1 + $0xd70] sm:$0xf]
    %v1004 = vld [vmem:[%s1 + $0xd74] sm:$0xf]
    %v1005 = vld [vmem:[%s1 + $0xd78] sm:$0xf]
    %v1006 = vld [vmem:[%s1 + $0xd7c] sm:$0xf]
    %v1007 = vld [vmem:[%s1 + $0xd80] sm:$0xf]
    %v1008 = vld [vmem:[%s1 + $0xd84] sm:$0xf]
    %v1009 = vld [vmem:[%s1 + $0xd88] sm:$0xf]
    %v1010 = vld [vmem:[%s1 + $0xd8c] sm:$0xf]
    %v1011 = vld [vmem:[%s1 + $0xd90] sm:$0xf]
    %v1012 = vld [vmem:[%s1 + $0xd94] sm:$0xf]
    %v1013 = vld [vmem:[%s1 + $0xd98] sm:$0xf]
    %v1014 = vld [vmem:[%s1 + $0xd9c] sm:$0xf]
    %v1015 = vld [vmem:[%s1 + $0xda0] sm:$0xf]
    %v1016 = vld [vmem:[%s1 + $0xda4] sm:$0xf]
    %v1017 = vld [vmem:[%s1 + $0xda8] sm:$0xf]
    %v1018 = vld [vmem:[%s1 + $0xdac] sm:$0xf]
    %v1019 = vld [vmem:[%s1 + $0xdb0] sm:$0xf]
    %v1020 = vld [vmem:[%s1 + $0xdb4] sm:$0xf]
    %v1021 = vld [vmem:[%s1 + $0xdb8] sm:$0xf]
    %v1022 = vld [vmem:[%s1 + $0xdbc] sm:$0xf]
    %v1023 = vld [vmem:[%s1 + $0xdc0] sm:$0xf]
    %v1024 = vld [vmem:[%s1 + $0xdc4] sm:$0xf]
    %v1025 = vld [vmem:[%s1 + $0xdc8] sm:$0xf]
    %v1026 = vld [vmem:[%s1 + $0xdcc] sm:$0xf]
    %v1027 = vld [vmem:[%s1 + $0xdd0] sm:$0xf]
    %v1028 = vld [vmem:[%s1 + $0xdd4] sm:$0xf]
    %v1029 = vld [vmem:[%s1 + $0xdd8] sm:$0xf]
    %v1030 = vld [vmem:[%s1 + $0xddc] sm:$0xf]
    %v1031 = vld [vmem:[%s1 + $0xde0] sm:$0xf]
    %v1032 = vld [vmem:[%s1 + $0xde4] sm:$0xf]
    %v1033 = vld [vmem:[%s1 + $0xde8] sm:$0xf]
    %v1034 = vld [vmem:[%s1 + $0xdec] sm:$0xf]
    %v1035 = vld [vmem:[%s1 + $0xdf0] sm:$0xf]
    %v1036 = vld [vmem:[%s1 + $0xdf4] sm:$0xf]
    %v1037 = vld [vmem:[%s1 + $0xdf8] sm:$0xf]
    %v1038 = vld [vmem:[%s1 + $0xdfc] sm:$0xf]
    %v1039 = vld [vmem:[%s1 + $0xe00] sm:$0xf]
    %v1040 = vld [vmem:[%s1 + $0xe04] sm:$0xf]
    %v1041 = vld [vmem:[%s1 + $0xe08] sm:$0xf]
    %v1042 = vld [vmem:[%s1 + $0xe0c] sm:$0xf]
    %v1043 = vld [vmem:[%s1 + $0xe10] sm:$0xf]
    %v1044 = vld [vmem:[%s1 + $0xe14] sm:$0xf]
    %v1045 = vld [vmem:[%s1 + $0xe18] sm:$0xf]
    %v1046 = vld [vmem:[%s1 + $0xe1c] sm:$0xf]
    %v1047 = vld [vmem:[%s1 + $0xe20] sm:$0xf]
    %v1048 = vld [vmem:[%s1 + $0xe24] sm:$0xf]
    %v1049 = vld [vmem:[%s1 + $0xe28] sm:$0xf]
    %v1050 = vld [vmem:[%s1 + $0xe2c] sm:$0xf]
    %v1051 = vld [vmem:[%s1 + $0xe30] sm:$0xf]
    %v1052 = vld [vmem:[%s1 + $0xe34] sm:$0xf]
    %v1053 = vld [vmem:[%s1 + $0xe38] sm:$0xf]
    %v1054 = vld [vmem:[%s1 + $0xe3c] sm:$0xf]
    %v1055 = vld [vmem:[%s1 + $0xe40] sm:$0xf]
    %v1056 = vld [vmem:[%s1 + $0xe44] sm:$0xf]
    %v1057 = vld [vmem:[%s1 + $0xe48] sm:$0xf]
    %v1058 = vld [vmem:[%s1 + $0xe4c] sm:$0xf]
    %v1059 = vld [vmem:[%s1 + $0xe50] sm:$0xf]
    %v1060 = vld [vmem:[%s1 + $0xe54] sm:$0xf]
    %v1061 = vld [vmem:[%s1 + $0xe58] sm:$0xf]
    %v1062 = vld [vmem:[%s1 + $0xe5c] sm:$0xf]
    %v1063 = vld [vmem:[%s1 + $0xe60] sm:$0xf]
    %v1064 = vld [vmem:[%s1 + $0xe64] sm:$0xf]
    %v1065 = vld [vmem:[%s1 + $0xe68] sm:$0xf]
    %v1066 = vld [vmem:[%s1 + $0xe6c] sm:$0xf]
    %v1067 = vld [vmem:[%s1 + $0xe70] sm:$0xf]
    %v1068 = vld [vmem:[%s1 + $0xe74] sm:$0xf]
    %v1069 = vld [vmem:[%s1 + $0xe78] sm:$0xf]
    %v1070 = vld [vmem:[%s1 + $0xe7c] sm:$0xf]
    %v1071 = vld [vmem:[%s1 + $0xe80] sm:$0xf]
    %v1072 = vld [vmem:[%s1 + $0xe84] sm:$0xf]
    %v1073 = vld [vmem:[%s1 + $0xe88] sm:$0xf]
    %v1074 = vld [vmem:[%s1 + $0xe8c] sm:$0xf]
    %v1075 = vld [vmem:[%s1 + $0xe90] sm:$0xf]
    %v1076 = vld [vmem:[%s1 + $0xe94] sm:$0xf]
    %v1077 = vld [vmem:[%s1 + $0xe98] sm:$0xf]
    %v1078 = vld [vmem:[%s1 + $0xe9c] sm:$0xf]
    %v1079 = vld [vmem:[%s1 + $0xea0] sm:$0xf]
    %v1080 = vld [vmem:[%s1 + $0xea4] sm:$0xf]
    %v1081 = vld [vmem:[%s1 + $0xea8] sm:$0xf]
    %v1082 = vld [vmem:[%s1 + $0xeac] sm:$0xf]
    %v1083 = vld [vmem:[%s1 + $0xeb0] sm:$0xf]
    %v1084 = vld [vmem:[%s1 + $0xeb4] sm:$0xf]
    %v1085 = vld [vmem:[%s1 + $0xeb8] sm:$0xf]
    %v1086 = vld [vmem:[%s1 + $0xebc] sm:$0xf]
    %v1087 = vld [vmem:[%s1 + $0xec0] sm:$0xf]
    %v1088 = vld [vmem:[%s1 + $0xec4] sm:$0xf]
    %v1089 = vld [vmem:[%s1 + $0xec8] sm:$0xf]
    %v1090 = vld [vmem:[%s1 + $0xecc] sm:$0xf]
    %v1091 = vld [vmem:[%s1 + $0xed0] sm:$0xf]
    %v1092 = vld [vmem:[%s1 + $0xed4] sm:$0xf]
    %v1093 = vld [vmem:[%s1 + $0xed8] sm:$0xf]
    %v1094 = vld [vmem:[%s1 + $0xedc] sm:$0xf]
    %v1095 = vld [vmem:[%s1 + $0xee0] sm:$0xf]
    %v1096 = vld [vmem:[%s1 + $0xee4] sm:$0xf]
    %v1097 = vld [vmem:[%s1 + $0xee8] sm:$0xf]
    %v1098 = vld [vmem:[%s1 + $0xeec] sm:$0xf]
    %v1099 = vld [vmem:[%s1 + $0xef0] sm:$0xf]
    %v1100 = vld [vmem:[%s1 + $0xef4] sm:$0xf]
    %v1101 = vld [vmem:[%s1 + $0xef8] sm:$0xf]
    %v1102 = vld [vmem:[%s1 + $0xefc] sm:$0xf]
    %v1103 = vld [vmem:[%s1 + $0xf00] sm:$0xf]
    %v1104 = vld [vmem:[%s1 + $0xf04] sm:$0xf]
    %v1105 = vld [vmem:[%s1 + $0xf08] sm:$0xf]
    %v1106 = vld [vmem:[%s1 + $0xf0c] sm:$0xf]
    %v1107 = vld [vmem:[%s1 + $0xf10] sm:$0xf]
    %v1108 = vld [vmem:[%s1 + $0xf14] sm:$0xf]
    %v1109 = vld [vmem:[%s1 + $0xf18] sm:$0xf]
    %v1110 = vld [vmem:[%s1 + $0xf1c] sm:$0xf]
    %v1111 = vld [vmem:[%s1 + $0xf20] sm:$0xf]
    %v1112 = vld [vmem:[%s1 + $0xf24] sm:$0xf]
    %v1113 = vld [vmem:[%s1 + $0xf28] sm:$0xf]
    %v1114 = vld [vmem:[%s1 + $0xf2c] sm:$0xf]
    %v1115 = vld [vmem:[%s1 + $0xf30] sm:$0xf]
    %v1116 = vld [vmem:[%s1 + $0xf34] sm:$0xf]
    %v1117 = vld [vmem:[%s1 + $0xf38] sm:$0xf]
    %v1118 = vld [vmem:[%s1 + $0xf3c] sm:$0xf]
    %v1119 = vld [vmem:[%s1 + $0xf40] sm:$0xf]
    %v1120 = vld [vmem:[%s1 + $0xf44] sm:$0xf]
    %v1121 = vld [vmem:[%s1 + $0xf48] sm:$0xf]
    %v1122 = vld [vmem:[%s1 + $0xf4c] sm:$0xf]
    %v1123 = vld [vmem:[%s1 + $0xf50] sm:$0xf]
    %v1124 = vld [vmem:[%s1 + $0xf54] sm:$0xf]
    %v1125 = vld [vmem:[%s1 + $0xf58] sm:$0xf]
    %v1126 = vld [vmem:[%s1 + $0xf5c] sm:$0xf]
    %v1127 = vld [vmem:[%s1 + $0xf60] sm:$0xf]
    %v1128 = vld [vmem:[%s1 + $0xf64] sm:$0xf]
    %v1129 = vld [vmem:[%s1 + $0xf68] sm:$0xf]
    %v1130 = vld [vmem:[%s1 + $0xf6c] sm:$0xf]
    %v1131 = vld [vmem:[%s1 + $0xf70] sm:$0xf]
    %v1132 = vld [vmem:[%s1 + $0xf74] sm:$0xf]
    %v1133 = vld [vmem:[%s1 + $0xf78] sm:$0xf]
    %v1134 = vld [vmem:[%s1 + $0xf7c] sm:$0xf]
    %v1135 = vld [vmem:[%s1 + $0xf80] sm:$0xf]
    %v1136 = vld [vmem:[%s1 + $0xf84] sm:$0xf]
    %v1137 = vld [vmem:[%s1 + $0xf88] sm:$0xf]
    %v1138 = vld [vmem:[%s1 + $0xf8c] sm:$0xf]
    %v1139 = vld [vmem:[%s1 + $0xf90] sm:$0xf]
    %v1140 = vld [vmem:[%s1 + $0xf94] sm:$0xf]
    %v1141 = vld [vmem:[%s1 + $0xf98] sm:$0xf]
    %v1142 = vld [vmem:[%s1 + $0xf9c] sm:$0xf]
    %v1143 = vld [vmem:[%s1 + $0xfa0] sm:$0xf]
    %v1144 = vld [vmem:[%s1 + $0xfa4] sm:$0xf]
    %v1145 = vld [vmem:[%s1 + $0xfa8] sm:$0xf]
    %v1146 = vld [vmem:[%s1 + $0xfac] sm:$0xf]
    %v1147 = vld [vmem:[%s1 + $0xfb0] sm:$0xf]
    %v1148 = vld [vmem:[%s1 + $0xfb4] sm:$0xf]
    %v1149 = vld [vmem:[%s1 + $0xfb8] sm:$0xf]
    %v1150 = vld [vmem:[%s1 + $0xfbc] sm:$0xf]
    %v1151 = vld [vmem:[%s1 + $0xfc0] sm:$0xf]
    %v1152 = vld [vmem:[%s1 + $0xfc4] sm:$0xf]
    %v1153 = vld [vmem:[%s1 + $0xfc8] sm:$0xf]
    %v1154 = vld [vmem:[%s1 + $0xfcc] sm:$0xf]
    %v1155 = vld [vmem:[%s1 + $0xfd0] sm:$0xf]
    %v1156 = vld [vmem:[%s1 + $0xfd4] sm:$0xf]
    %v1157 = vld [vmem:[%s1 + $0xfd8] sm:$0xf]
    %v1158 = vld [vmem:[%s1 + $0xfdc] sm:$0xf]
    %v1159 = vld [vmem:[%s1 + $0xfe0] sm:$0xf]
    %v1160 = vld [vmem:[%s1 + $0xfe4] sm:$0xf]
    %v1161 = vld [vmem:[%s1 + $0xfe8] sm:$0xf]
    %v1162 = vld [vmem:[%s1 + $0xfec] sm:$0xf]
    %v1163 = vld [vmem:[%s1 + $0xff0] sm:$0xf]
    %v1164 = vld [vmem:[%s1 + $0xff4] sm:$0xf]
    %v1165 = vld [vmem:[%s1 + $0xff8] sm:$0xf]
    %v1166 = vld [vmem:[%s1 + $0xffc] sm:$0xf]
    %v1167 = vld [vmem:[%s2] sm:$0x1]
    %v1169 = vperm.slane %v1167, 0
    %v2195 = vunpack.c.l.b16 %v143
    %v2196 = vunpack.c.l.b16 %v144
    %v2197 = vunpack.c.l.b16 %v145
    %v2198 = vunpack.c.l.b16 %v146
    %v2199 = vunpack.c.l.b16 %v147
    %v2200 = vunpack.c.l.b16 %v148
    %v2201 = vunpack.c.l.b16 %v149
    %v2202 = vunpack.c.l.b16 %v150
    %v2203 = vunpack.c.l.b16 %v151
    %v2204 = vunpack.c.l.b16 %v152
    %v2205 = vunpack.c.l.b16 %v153
    %v2206 = vunpack.c.l.b16 %v154
    %v2207 = vunpack.c.l.b16 %v155
    %v2208 = vunpack.c.l.b16 %v156
    %v2209 = vunpack.c.l.b16 %v157
    %v2210 = vunpack.c.l.b16 %v158
    %v2211 = vunpack.c.l.b16 %v159
    %v2212 = vunpack.c.l.b16 %v160
    %v2213 = vunpack.c.l.b16 %v161
    %v2214 = vunpack.c.l.b16 %v162
    %v2215 = vunpack.c.l.b16 %v163
    %v2216 = vunpack.c.l.b16 %v164
    %v2217 = vunpack.c.l.b16 %v165
    %v2218 = vunpack.c.l.b16 %v166
    %v2219 = vunpack.c.l.b16 %v167
    %v2220 = vunpack.c.l.b16 %v168
    %v2221 = vunpack.c.l.b16 %v169
    %v2222 = vunpack.c.l.b16 %v170
    %v2223 = vunpack.c.l.b16 %v171
    %v2224 = vunpack.c.l.b16 %v172
    %v2225 = vunpack.c.l.b16 %v173
    %v2226 = vunpack.c.l.b16 %v174
    %v2227 = vunpack.c.l.b16 %v175
    %v2228 = vunpack.c.l.b16 %v176
    %v2229 = vunpack.c.l.b16 %v177
    %v2230 = vunpack.c.l.b16 %v178
    %v2231 = vunpack.c.l.b16 %v179
    %v2232 = vunpack.c.l.b16 %v180
    %v2233 = vunpack.c.l.b16 %v181
    %v2234 = vunpack.c.l.b16 %v182
    %v2235 = vunpack.c.l.b16 %v183
    %v2236 = vunpack.c.l.b16 %v184
    %v2237 = vunpack.c.l.b16 %v185
    %v2238 = vunpack.c.l.b16 %v186
    %v2239 = vunpack.c.l.b16 %v187
    %v2240 = vunpack.c.l.b16 %v188
    %v2241 = vunpack.c.l.b16 %v189
    %v2242 = vunpack.c.l.b16 %v190
    %v2243 = vunpack.c.l.b16 %v191
    %v2244 = vunpack.c.l.b16 %v192
    %v2245 = vunpack.c.l.b16 %v193
    %v2246 = vunpack.c.l.b16 %v194
    %v2247 = vunpack.c.l.b16 %v195
    %v2248 = vunpack.c.l.b16 %v196
    %v2249 = vunpack.c.l.b16 %v197
    %v2250 = vunpack.c.l.b16 %v198
    %v2251 = vunpack.c.l.b16 %v199
    %v2252 = vunpack.c.l.b16 %v200
    %v2253 = vunpack.c.l.b16 %v201
    %v2254 = vunpack.c.l.b16 %v202
    %v2255 = vunpack.c.l.b16 %v203
    %v2256 = vunpack.c.l.b16 %v204
    %v2257 = vunpack.c.l.b16 %v205
    %v2258 = vunpack.c.l.b16 %v206
    %v2259 = vunpack.c.l.b16 %v207
    %v2260 = vunpack.c.l.b16 %v208
    %v2261 = vunpack.c.l.b16 %v209
    %v2262 = vunpack.c.l.b16 %v210
    %v2263 = vunpack.c.l.b16 %v211
    %v2264 = vunpack.c.l.b16 %v212
    %v2265 = vunpack.c.l.b16 %v213
    %v2266 = vunpack.c.l.b16 %v214
    %v2267 = vunpack.c.l.b16 %v215
    %v2268 = vunpack.c.l.b16 %v216
    %v2269 = vunpack.c.l.b16 %v217
    %v2270 = vunpack.c.l.b16 %v218
    %v2271 = vunpack.c.l.b16 %v219
    %v2272 = vunpack.c.l.b16 %v220
    %v2273 = vunpack.c.l.b16 %v221
    %v2274 = vunpack.c.l.b16 %v222
    %v2275 = vunpack.c.l.b16 %v223
    %v2276 = vunpack.c.l.b16 %v224
    %v2277 = vunpack.c.l.b16 %v225
    %v2278 = vunpack.c.l.b16 %v226
    %v2279 = vunpack.c.l.b16 %v227
    %v2280 = vunpack.c.l.b16 %v228
    %v2281 = vunpack.c.l.b16 %v229
    %v2282 = vunpack.c.l.b16 %v230
    %v2283 = vunpack.c.l.b16 %v231
    %v2284 = vunpack.c.l.b16 %v232
    %v2285 = vunpack.c.l.b16 %v233
    %v2286 = vunpack.c.l.b16 %v234
    %v2287 = vunpack.c.l.b16 %v235
    %v2288 = vunpack.c.l.b16 %v236
    %v2289 = vunpack.c.l.b16 %v237
    %v2290 = vunpack.c.l.b16 %v238
    %v2291 = vunpack.c.l.b16 %v239
    %v2292 = vunpack.c.l.b16 %v240
    %v2293 = vunpack.c.l.b16 %v241
    %v2294 = vunpack.c.l.b16 %v242
    %v2295 = vunpack.c.l.b16 %v243
    %v2296 = vunpack.c.l.b16 %v244
    %v2297 = vunpack.c.l.b16 %v245
    %v2298 = vunpack.c.l.b16 %v246
    %v2299 = vunpack.c.l.b16 %v247
    %v2300 = vunpack.c.l.b16 %v248
    %v2301 = vunpack.c.l.b16 %v249
    %v2302 = vunpack.c.l.b16 %v250
    %v2303 = vunpack.c.l.b16 %v251
    %v2304 = vunpack.c.l.b16 %v252
    %v2305 = vunpack.c.l.b16 %v253
    %v2306 = vunpack.c.l.b16 %v254
    %v2307 = vunpack.c.l.b16 %v255
    %v2308 = vunpack.c.l.b16 %v256
    %v2309 = vunpack.c.l.b16 %v257
    %v2310 = vunpack.c.l.b16 %v258
    %v2311 = vunpack.c.l.b16 %v259
    %v2312 = vunpack.c.l.b16 %v260
    %v2313 = vunpack.c.l.b16 %v261
    %v2314 = vunpack.c.l.b16 %v262
    %v2315 = vunpack.c.l.b16 %v263
    %v2316 = vunpack.c.l.b16 %v264
    %v2317 = vunpack.c.l.b16 %v265
    %v2318 = vunpack.c.l.b16 %v266
    %v2319 = vunpack.c.l.b16 %v267
    %v2320 = vunpack.c.l.b16 %v268
    %v2321 = vunpack.c.l.b16 %v269
    %v2322 = vunpack.c.l.b16 %v270
    %v2323 = vunpack.c.l.b16 %v271
    %v2324 = vunpack.c.l.b16 %v272
    %v2325 = vunpack.c.l.b16 %v273
    %v2326 = vunpack.c.l.b16 %v274
    %v2327 = vunpack.c.l.b16 %v275
    %v2328 = vunpack.c.l.b16 %v276
    %v2329 = vunpack.c.l.b16 %v277
    %v2330 = vunpack.c.l.b16 %v278
    %v2331 = vunpack.c.l.b16 %v279
    %v2332 = vunpack.c.l.b16 %v280
    %v2333 = vunpack.c.l.b16 %v281
    %v2334 = vunpack.c.l.b16 %v282
    %v2335 = vunpack.c.l.b16 %v283
    %v2336 = vunpack.c.l.b16 %v284
    %v2337 = vunpack.c.l.b16 %v285
    %v2338 = vunpack.c.l.b16 %v286
    %v2339 = vunpack.c.l.b16 %v287
    %v2340 = vunpack.c.l.b16 %v288
    %v2341 = vunpack.c.l.b16 %v289
    %v2342 = vunpack.c.l.b16 %v290
    %v2343 = vunpack.c.l.b16 %v291
    %v2344 = vunpack.c.l.b16 %v292
    %v2345 = vunpack.c.l.b16 %v293
    %v2346 = vunpack.c.l.b16 %v294
    %v2347 = vunpack.c.l.b16 %v295
    %v2348 = vunpack.c.l.b16 %v296
    %v2349 = vunpack.c.l.b16 %v297
    %v2350 = vunpack.c.l.b16 %v298
    %v2351 = vunpack.c.l.b16 %v299
    %v2352 = vunpack.c.l.b16 %v300
    %v2353 = vunpack.c.l.b16 %v301
    %v2354 = vunpack.c.l.b16 %v302
    %v2355 = vunpack.c.l.b16 %v303
    %v2356 = vunpack.c.l.b16 %v304
    %v2357 = vunpack.c.l.b16 %v305
    %v2358 = vunpack.c.l.b16 %v306
    %v2359 = vunpack.c.l.b16 %v307
    %v2360 = vunpack.c.l.b16 %v308
    %v2361 = vunpack.c.l.b16 %v309
    %v2362 = vunpack.c.l.b16 %v310
    %v2363 = vunpack.c.l.b16 %v311
    %v2364 = vunpack.c.l.b16 %v312
    %v2365 = vunpack.c.l.b16 %v313
    %v2366 = vunpack.c.l.b16 %v314
    %v2367 = vunpack.c.l.b16 %v315
    %v2368 = vunpack.c.l.b16 %v316
    %v2369 = vunpack.c.l.b16 %v317
    %v2370 = vunpack.c.l.b16 %v318
    %v2371 = vunpack.c.l.b16 %v319
    %v2372 = vunpack.c.l.b16 %v320
    %v2373 = vunpack.c.l.b16 %v321
    %v2374 = vunpack.c.l.b16 %v322
    %v2375 = vunpack.c.l.b16 %v323
    %v2376 = vunpack.c.l.b16 %v324
    %v2377 = vunpack.c.l.b16 %v325
    %v2378 = vunpack.c.l.b16 %v326
    %v2379 = vunpack.c.l.b16 %v327
    %v2380 = vunpack.c.l.b16 %v328
    %v2381 = vunpack.c.l.b16 %v329
    %v2382 = vunpack.c.l.b16 %v330
    %v2383 = vunpack.c.l.b16 %v331
    %v2384 = vunpack.c.l.b16 %v332
    %v2385 = vunpack.c.l.b16 %v333
    %v2386 = vunpack.c.l.b16 %v334
    %v2387 = vunpack.c.l.b16 %v335
    %v2388 = vunpack.c.l.b16 %v336
    %v2389 = vunpack.c.l.b16 %v337
    %v2390 = vunpack.c.l.b16 %v338
    %v2391 = vunpack.c.l.b16 %v339
    %v2392 = vunpack.c.l.b16 %v340
    %v2393 = vunpack.c.l.b16 %v341
    %v2394 = vunpack.c.l.b16 %v342
    %v2395 = vunpack.c.l.b16 %v343
    %v2396 = vunpack.c.l.b16 %v344
    %v2397 = vunpack.c.l.b16 %v345
    %v2398 = vunpack.c.l.b16 %v346
    %v2399 = vunpack.c.l.b16 %v347
    %v2400 = vunpack.c.l.b16 %v348
    %v2401 = vunpack.c.l.b16 %v349
    %v2402 = vunpack.c.l.b16 %v350
    %v2403 = vunpack.c.l.b16 %v351
    %v2404 = vunpack.c.l.b16 %v352
    %v2405 = vunpack.c.l.b16 %v353
    %v2406 = vunpack.c.l.b16 %v354
    %v2407 = vunpack.c.l.b16 %v355
    %v2408 = vunpack.c.l.b16 %v356
    %v2409 = vunpack.c.l.b16 %v357
    %v2410 = vunpack.c.l.b16 %v358
    %v2411 = vunpack.c.l.b16 %v359
    %v2412 = vunpack.c.l.b16 %v360
    %v2413 = vunpack.c.l.b16 %v361
    %v2414 = vunpack.c.l.b16 %v362
    %v2415 = vunpack.c.l.b16 %v363
    %v2416 = vunpack.c.l.b16 %v364
    %v2417 = vunpack.c.l.b16 %v365
    %v2418 = vunpack.c.l.b16 %v366
    %v2419 = vunpack.c.l.b16 %v367
    %v2420 = vunpack.c.l.b16 %v368
    %v2421 = vunpack.c.l.b16 %v369
    %v2422 = vunpack.c.l.b16 %v370
    %v2423 = vunpack.c.l.b16 %v371
    %v2424 = vunpack.c.l.b16 %v372
    %v2425 = vunpack.c.l.b16 %v373
    %v2426 = vunpack.c.l.b16 %v374
    %v2427 = vunpack.c.l.b16 %v375
    %v2428 = vunpack.c.l.b16 %v376
    %v2429 = vunpack.c.l.b16 %v377
    %v2430 = vunpack.c.l.b16 %v378
    %v2431 = vunpack.c.l.b16 %v379
    %v2432 = vunpack.c.l.b16 %v380
    %v2433 = vunpack.c.l.b16 %v381
    %v2434 = vunpack.c.l.b16 %v382
    %v2435 = vunpack.c.l.b16 %v383
    %v2436 = vunpack.c.l.b16 %v384
    %v2437 = vunpack.c.l.b16 %v385
    %v2438 = vunpack.c.l.b16 %v386
    %v2439 = vunpack.c.l.b16 %v387
    %v2440 = vunpack.c.l.b16 %v388
    %v2441 = vunpack.c.l.b16 %v389
    %v2442 = vunpack.c.l.b16 %v390
    %v2443 = vunpack.c.l.b16 %v391
    %v2444 = vunpack.c.l.b16 %v392
    %v2445 = vunpack.c.l.b16 %v393
    %v2446 = vunpack.c.l.b16 %v394
    %v2447 = vunpack.c.l.b16 %v395
    %v2448 = vunpack.c.l.b16 %v396
    %v2449 = vunpack.c.l.b16 %v397
    %v2450 = vunpack.c.l.b16 %v398
    %v2451 = vunpack.c.l.b16 %v399
    %v2452 = vunpack.c.l.b16 %v400
    %v2453 = vunpack.c.l.b16 %v401
    %v2454 = vunpack.c.l.b16 %v402
    %v2455 = vunpack.c.l.b16 %v403
    %v2456 = vunpack.c.l.b16 %v404
    %v2457 = vunpack.c.l.b16 %v405
    %v2458 = vunpack.c.l.b16 %v406
    %v2459 = vunpack.c.l.b16 %v407
    %v2460 = vunpack.c.l.b16 %v408
    %v2461 = vunpack.c.l.b16 %v409
    %v2462 = vunpack.c.l.b16 %v410
    %v2463 = vunpack.c.l.b16 %v411
    %v2464 = vunpack.c.l.b16 %v412
    %v2465 = vunpack.c.l.b16 %v413
    %v2466 = vunpack.c.l.b16 %v414
    %v2467 = vunpack.c.l.b16 %v415
    %v2468 = vunpack.c.l.b16 %v416
    %v2469 = vunpack.c.l.b16 %v417
    %v2470 = vunpack.c.l.b16 %v418
    %v2471 = vunpack.c.l.b16 %v419
    %v2472 = vunpack.c.l.b16 %v420
    %v2473 = vunpack.c.l.b16 %v421
    %v2474 = vunpack.c.l.b16 %v422
    %v2475 = vunpack.c.l.b16 %v423
    %v2476 = vunpack.c.l.b16 %v424
    %v2477 = vunpack.c.l.b16 %v425
    %v2478 = vunpack.c.l.b16 %v426
    %v2479 = vunpack.c.l.b16 %v427
    %v2480 = vunpack.c.l.b16 %v428
    %v2481 = vunpack.c.l.b16 %v429
    %v2482 = vunpack.c.l.b16 %v430
    %v2483 = vunpack.c.l.b16 %v431
    %v2484 = vunpack.c.l.b16 %v432
    %v2485 = vunpack.c.l.b16 %v433
    %v2486 = vunpack.c.l.b16 %v434
    %v2487 = vunpack.c.l.b16 %v435
    %v2488 = vunpack.c.l.b16 %v436
    %v2489 = vunpack.c.l.b16 %v437
    %v2490 = vunpack.c.l.b16 %v438
    %v2491 = vunpack.c.l.b16 %v439
    %v2492 = vunpack.c.l.b16 %v440
    %v2493 = vunpack.c.l.b16 %v441
    %v2494 = vunpack.c.l.b16 %v442
    %v2495 = vunpack.c.l.b16 %v443
    %v2496 = vunpack.c.l.b16 %v444
    %v2497 = vunpack.c.l.b16 %v445
    %v2498 = vunpack.c.l.b16 %v446
    %v2499 = vunpack.c.l.b16 %v447
    %v2500 = vunpack.c.l.b16 %v448
    %v2501 = vunpack.c.l.b16 %v449
    %v2502 = vunpack.c.l.b16 %v450
    %v2503 = vunpack.c.l.b16 %v451
    %v2504 = vunpack.c.l.b16 %v452
    %v2505 = vunpack.c.l.b16 %v453
    %v2506 = vunpack.c.l.b16 %v454
    %v2507 = vunpack.c.l.b16 %v455
    %v2508 = vunpack.c.l.b16 %v456
    %v2509 = vunpack.c.l.b16 %v457
    %v2510 = vunpack.c.l.b16 %v458
    %v2511 = vunpack.c.l.b16 %v459
    %v2512 = vunpack.c.l.b16 %v460
    %v2513 = vunpack.c.l.b16 %v461
    %v2514 = vunpack.c.l.b16 %v462
    %v2515 = vunpack.c.l.b16 %v463
    %v2516 = vunpack.c.l.b16 %v464
    %v2517 = vunpack.c.l.b16 %v465
    %v2518 = vunpack.c.l.b16 %v466
    %v2519 = vunpack.c.l.b16 %v467
    %v2520 = vunpack.c.l.b16 %v468
    %v2521 = vunpack.c.l.b16 %v469
    %v2522 = vunpack.c.l.b16 %v470
    %v2523 = vunpack.c.l.b16 %v471
    %v2524 = vunpack.c.l.b16 %v472
    %v2525 = vunpack.c.l.b16 %v473
    %v2526 = vunpack.c.l.b16 %v474
    %v2527 = vunpack.c.l.b16 %v475
    %v2528 = vunpack.c.l.b16 %v476
    %v2529 = vunpack.c.l.b16 %v477
    %v2530 = vunpack.c.l.b16 %v478
    %v2531 = vunpack.c.l.b16 %v479
    %v2532 = vunpack.c.l.b16 %v480
    %v2533 = vunpack.c.l.b16 %v481
    %v2534 = vunpack.c.l.b16 %v482
    %v2535 = vunpack.c.l.b16 %v483
    %v2536 = vunpack.c.l.b16 %v484
    %v2537 = vunpack.c.l.b16 %v485
    %v2538 = vunpack.c.l.b16 %v486
    %v2539 = vunpack.c.l.b16 %v487
    %v2540 = vunpack.c.l.b16 %v488
    %v2541 = vunpack.c.l.b16 %v489
    %v2542 = vunpack.c.l.b16 %v490
    %v2543 = vunpack.c.l.b16 %v491
    %v2544 = vunpack.c.l.b16 %v492
    %v2545 = vunpack.c.l.b16 %v493
    %v2546 = vunpack.c.l.b16 %v494
    %v2547 = vunpack.c.l.b16 %v495
    %v2548 = vunpack.c.l.b16 %v496
    %v2549 = vunpack.c.l.b16 %v497
    %v2550 = vunpack.c.l.b16 %v498
    %v2551 = vunpack.c.l.b16 %v499
    %v2552 = vunpack.c.l.b16 %v500
    %v2553 = vunpack.c.l.b16 %v501
    %v2554 = vunpack.c.l.b16 %v502
    %v2555 = vunpack.c.l.b16 %v503
    %v2556 = vunpack.c.l.b16 %v504
    %v2557 = vunpack.c.l.b16 %v505
    %v2558 = vunpack.c.l.b16 %v506
    %v2559 = vunpack.c.l.b16 %v507
    %v2560 = vunpack.c.l.b16 %v508
    %v2561 = vunpack.c.l.b16 %v509
    %v2562 = vunpack.c.l.b16 %v510
    %v2563 = vunpack.c.l.b16 %v511
    %v2564 = vunpack.c.l.b16 %v512
    %v2565 = vunpack.c.l.b16 %v513
    %v2566 = vunpack.c.l.b16 %v514
    %v2567 = vunpack.c.l.b16 %v515
    %v2568 = vunpack.c.l.b16 %v516
    %v2569 = vunpack.c.l.b16 %v517
    %v2570 = vunpack.c.l.b16 %v518
    %v2571 = vunpack.c.l.b16 %v519
    %v2572 = vunpack.c.l.b16 %v520
    %v2573 = vunpack.c.l.b16 %v521
    %v2574 = vunpack.c.l.b16 %v522
    %v2575 = vunpack.c.l.b16 %v523
    %v2576 = vunpack.c.l.b16 %v524
    %v2577 = vunpack.c.l.b16 %v525
    %v2578 = vunpack.c.l.b16 %v526
    %v2579 = vunpack.c.l.b16 %v527
    %v2580 = vunpack.c.l.b16 %v528
    %v2581 = vunpack.c.l.b16 %v529
    %v2582 = vunpack.c.l.b16 %v530
    %v2583 = vunpack.c.l.b16 %v531
    %v2584 = vunpack.c.l.b16 %v532
    %v2585 = vunpack.c.l.b16 %v533
    %v2586 = vunpack.c.l.b16 %v534
    %v2587 = vunpack.c.l.b16 %v535
    %v2588 = vunpack.c.l.b16 %v536
    %v2589 = vunpack.c.l.b16 %v537
    %v2590 = vunpack.c.l.b16 %v538
    %v2591 = vunpack.c.l.b16 %v539
    %v2592 = vunpack.c.l.b16 %v540
    %v2593 = vunpack.c.l.b16 %v541
    %v2594 = vunpack.c.l.b16 %v542
    %v2595 = vunpack.c.l.b16 %v543
    %v2596 = vunpack.c.l.b16 %v544
    %v2597 = vunpack.c.l.b16 %v545
    %v2598 = vunpack.c.l.b16 %v546
    %v2599 = vunpack.c.l.b16 %v547
    %v2600 = vunpack.c.l.b16 %v548
    %v2601 = vunpack.c.l.b16 %v549
    %v2602 = vunpack.c.l.b16 %v550
    %v2603 = vunpack.c.l.b16 %v551
    %v2604 = vunpack.c.l.b16 %v552
    %v2605 = vunpack.c.l.b16 %v553
    %v2606 = vunpack.c.l.b16 %v554
    %v2607 = vunpack.c.l.b16 %v555
    %v2608 = vunpack.c.l.b16 %v556
    %v2609 = vunpack.c.l.b16 %v557
    %v2610 = vunpack.c.l.b16 %v558
    %v2611 = vunpack.c.l.b16 %v559
    %v2612 = vunpack.c.l.b16 %v560
    %v2613 = vunpack.c.l.b16 %v561
    %v2614 = vunpack.c.l.b16 %v562
    %v2615 = vunpack.c.l.b16 %v563
    %v2616 = vunpack.c.l.b16 %v564
    %v2617 = vunpack.c.l.b16 %v565
    %v2618 = vunpack.c.l.b16 %v566
    %v2619 = vunpack.c.l.b16 %v567
    %v2620 = vunpack.c.l.b16 %v568
    %v2621 = vunpack.c.l.b16 %v569
    %v2622 = vunpack.c.l.b16 %v570
    %v2623 = vunpack.c.l.b16 %v571
    %v2624 = vunpack.c.l.b16 %v572
    %v2625 = vunpack.c.l.b16 %v573
    %v2626 = vunpack.c.l.b16 %v574
    %v2627 = vunpack.c.l.b16 %v575
    %v2628 = vunpack.c.l.b16 %v576
    %v2629 = vunpack.c.l.b16 %v577
    %v2630 = vunpack.c.l.b16 %v578
    %v2631 = vunpack.c.l.b16 %v579
    %v2632 = vunpack.c.l.b16 %v580
    %v2633 = vunpack.c.l.b16 %v581
    %v2634 = vunpack.c.l.b16 %v582
    %v2635 = vunpack.c.l.b16 %v583
    %v2636 = vunpack.c.l.b16 %v584
    %v2637 = vunpack.c.l.b16 %v585
    %v2638 = vunpack.c.l.b16 %v586
    %v2639 = vunpack.c.l.b16 %v587
    %v2640 = vunpack.c.l.b16 %v588
    %v2641 = vunpack.c.l.b16 %v589
    %v2642 = vunpack.c.l.b16 %v590
    %v2643 = vunpack.c.l.b16 %v591
    %v2644 = vunpack.c.l.b16 %v592
    %v2645 = vunpack.c.l.b16 %v593
    %v2646 = vunpack.c.l.b16 %v594
    %v2647 = vunpack.c.l.b16 %v595
    %v2648 = vunpack.c.l.b16 %v596
    %v2649 = vunpack.c.l.b16 %v597
    %v2650 = vunpack.c.l.b16 %v598
    %v2651 = vunpack.c.l.b16 %v599
    %v2652 = vunpack.c.l.b16 %v600
    %v2653 = vunpack.c.l.b16 %v601
    %v2654 = vunpack.c.l.b16 %v602
    %v2655 = vunpack.c.l.b16 %v603
    %v2656 = vunpack.c.l.b16 %v604
    %v2657 = vunpack.c.l.b16 %v605
    %v2658 = vunpack.c.l.b16 %v606
    %v2659 = vunpack.c.l.b16 %v607
    %v2660 = vunpack.c.l.b16 %v608
    %v2661 = vunpack.c.l.b16 %v609
    %v2662 = vunpack.c.l.b16 %v610
    %v2663 = vunpack.c.l.b16 %v611
    %v2664 = vunpack.c.l.b16 %v612
    %v2665 = vunpack.c.l.b16 %v613
    %v2666 = vunpack.c.l.b16 %v614
    %v2667 = vunpack.c.l.b16 %v615
    %v2668 = vunpack.c.l.b16 %v616
    %v2669 = vunpack.c.l.b16 %v617
    %v2670 = vunpack.c.l.b16 %v618
    %v2671 = vunpack.c.l.b16 %v619
    %v2672 = vunpack.c.l.b16 %v620
    %v2673 = vunpack.c.l.b16 %v621
    %v2674 = vunpack.c.l.b16 %v622
    %v2675 = vunpack.c.l.b16 %v623
    %v2676 = vunpack.c.l.b16 %v624
    %v2677 = vunpack.c.l.b16 %v625
    %v2678 = vunpack.c.l.b16 %v626
    %v2679 = vunpack.c.l.b16 %v627
    %v2680 = vunpack.c.l.b16 %v628
    %v2681 = vunpack.c.l.b16 %v629
    %v2682 = vunpack.c.l.b16 %v630
    %v2683 = vunpack.c.l.b16 %v631
    %v2684 = vunpack.c.l.b16 %v632
    %v2685 = vunpack.c.l.b16 %v633
    %v2686 = vunpack.c.l.b16 %v634
    %v2687 = vunpack.c.l.b16 %v635
    %v2688 = vunpack.c.l.b16 %v636
    %v2689 = vunpack.c.l.b16 %v637
    %v2690 = vunpack.c.l.b16 %v638
    %v2691 = vunpack.c.l.b16 %v639
    %v2692 = vunpack.c.l.b16 %v640
    %v2693 = vunpack.c.l.b16 %v641
    %v2694 = vunpack.c.l.b16 %v642
    %v2695 = vunpack.c.l.b16 %v643
    %v2696 = vunpack.c.l.b16 %v644
    %v2697 = vunpack.c.l.b16 %v645
    %v2698 = vunpack.c.l.b16 %v646
    %v2699 = vunpack.c.l.b16 %v647
    %v2700 = vunpack.c.l.b16 %v648
    %v2701 = vunpack.c.l.b16 %v649
    %v2702 = vunpack.c.l.b16 %v650
    %v2703 = vunpack.c.l.b16 %v651
    %v2704 = vunpack.c.l.b16 %v652
    %v2705 = vunpack.c.l.b16 %v653
    %v2706 = vunpack.c.l.b16 %v654
    %v2707 = vunpack.c.l.b16 %v655
    %v2708 = vunpack.c.l.b16 %v656
    %v2709 = vunpack.c.l.b16 %v657
    %v2710 = vunpack.c.l.b16 %v658
    %v2711 = vunpack.c.l.b16 %v659
    %v2712 = vunpack.c.l.b16 %v660
    %v2713 = vunpack.c.l.b16 %v661
    %v2714 = vunpack.c.l.b16 %v662
    %v2715 = vunpack.c.l.b16 %v663
    %v2716 = vunpack.c.l.b16 %v664
    %v2717 = vunpack.c.l.b16 %v665
    %v2718 = vunpack.c.l.b16 %v666
    %v2719 = vunpack.c.l.b16 %v667
    %v2720 = vunpack.c.l.b16 %v668
    %v2721 = vunpack.c.l.b16 %v669
    %v2722 = vunpack.c.l.b16 %v670
    %v2723 = vunpack.c.l.b16 %v671
    %v2724 = vunpack.c.l.b16 %v672
    %v2725 = vunpack.c.l.b16 %v673
    %v2726 = vunpack.c.l.b16 %v674
    %v2727 = vunpack.c.l.b16 %v675
    %v2728 = vunpack.c.l.b16 %v676
    %v2729 = vunpack.c.l.b16 %v677
    %v2730 = vunpack.c.l.b16 %v678
    %v2731 = vunpack.c.l.b16 %v679
    %v2732 = vunpack.c.l.b16 %v680
    %v2733 = vunpack.c.l.b16 %v681
    %v2734 = vunpack.c.l.b16 %v682
    %v2735 = vunpack.c.l.b16 %v683
    %v2736 = vunpack.c.l.b16 %v684
    %v2737 = vunpack.c.l.b16 %v685
    %v2738 = vunpack.c.l.b16 %v686
    %v2739 = vunpack.c.l.b16 %v687
    %v2740 = vunpack.c.l.b16 %v688
    %v2741 = vunpack.c.l.b16 %v689
    %v2742 = vunpack.c.l.b16 %v690
    %v2743 = vunpack.c.l.b16 %v691
    %v2744 = vunpack.c.l.b16 %v692
    %v2745 = vunpack.c.l.b16 %v693
    %v2746 = vunpack.c.l.b16 %v694
    %v2747 = vunpack.c.l.b16 %v695
    %v2748 = vunpack.c.l.b16 %v696
    %v2749 = vunpack.c.l.b16 %v697
    %v2750 = vunpack.c.l.b16 %v698
    %v2751 = vunpack.c.l.b16 %v699
    %v2752 = vunpack.c.l.b16 %v700
    %v2753 = vunpack.c.l.b16 %v701
    %v2754 = vunpack.c.l.b16 %v702
    %v2755 = vunpack.c.l.b16 %v703
    %v2756 = vunpack.c.l.b16 %v704
    %v2757 = vunpack.c.l.b16 %v705
    %v2758 = vunpack.c.l.b16 %v706
    %v2759 = vunpack.c.l.b16 %v707
    %v2760 = vunpack.c.l.b16 %v708
    %v2761 = vunpack.c.l.b16 %v709
    %v2762 = vunpack.c.l.b16 %v710
    %v2763 = vunpack.c.l.b16 %v711
    %v2764 = vunpack.c.l.b16 %v712
    %v2765 = vunpack.c.l.b16 %v713
    %v2766 = vunpack.c.l.b16 %v714
    %v2767 = vunpack.c.l.b16 %v715
    %v2768 = vunpack.c.l.b16 %v716
    %v2769 = vunpack.c.l.b16 %v717
    %v2770 = vunpack.c.l.b16 %v718
    %v2771 = vunpack.c.l.b16 %v719
    %v2772 = vunpack.c.l.b16 %v720
    %v2773 = vunpack.c.l.b16 %v721
    %v2774 = vunpack.c.l.b16 %v722
    %v2775 = vunpack.c.l.b16 %v723
    %v2776 = vunpack.c.l.b16 %v724
    %v2777 = vunpack.c.l.b16 %v725
    %v2778 = vunpack.c.l.b16 %v726
    %v2779 = vunpack.c.l.b16 %v727
    %v2780 = vunpack.c.l.b16 %v728
    %v2781 = vunpack.c.l.b16 %v729
    %v2782 = vunpack.c.l.b16 %v730
    %v2783 = vunpack.c.l.b16 %v731
    %v2784 = vunpack.c.l.b16 %v732
    %v2785 = vunpack.c.l.b16 %v733
    %v2786 = vunpack.c.l.b16 %v734
    %v2787 = vunpack.c.l.b16 %v735
    %v2788 = vunpack.c.l.b16 %v736
    %v2789 = vunpack.c.l.b16 %v737
    %v2790 = vunpack.c.l.b16 %v738
    %v2791 = vunpack.c.l.b16 %v739
    %v2792 = vunpack.c.l.b16 %v740
    %v2793 = vunpack.c.l.b16 %v741
    %v2794 = vunpack.c.l.b16 %v742
    %v2795 = vunpack.c.l.b16 %v743
    %v2796 = vunpack.c.l.b16 %v744
    %v2797 = vunpack.c.l.b16 %v745
    %v2798 = vunpack.c.l.b16 %v746
    %v2799 = vunpack.c.l.b16 %v747
    %v2800 = vunpack.c.l.b16 %v748
    %v2801 = vunpack.c.l.b16 %v749
    %v2802 = vunpack.c.l.b16 %v750
    %v2803 = vunpack.c.l.b16 %v751
    %v2804 = vunpack.c.l.b16 %v752
    %v2805 = vunpack.c.l.b16 %v753
    %v2806 = vunpack.c.l.b16 %v754
    %v2807 = vunpack.c.l.b16 %v755
    %v2808 = vunpack.c.l.b16 %v756
    %v2809 = vunpack.c.l.b16 %v757
    %v2810 = vunpack.c.l.b16 %v758
    %v2811 = vunpack.c.l.b16 %v759
    %v2812 = vunpack.c.l.b16 %v760
    %v2813 = vunpack.c.l.b16 %v761
    %v2814 = vunpack.c.l.b16 %v762
    %v2815 = vunpack.c.l.b16 %v763
    %v2816 = vunpack.c.l.b16 %v764
    %v2817 = vunpack.c.l.b16 %v765
    %v2818 = vunpack.c.l.b16 %v766
    %v2819 = vunpack.c.l.b16 %v767
    %v2820 = vunpack.c.l.b16 %v768
    %v2821 = vunpack.c.l.b16 %v769
    %v2822 = vunpack.c.l.b16 %v770
    %v2823 = vunpack.c.l.b16 %v771
    %v2824 = vunpack.c.l.b16 %v772
    %v2825 = vunpack.c.l.b16 %v773
    %v2826 = vunpack.c.l.b16 %v774
    %v2827 = vunpack.c.l.b16 %v775
    %v2828 = vunpack.c.l.b16 %v776
    %v2829 = vunpack.c.l.b16 %v777
    %v2830 = vunpack.c.l.b16 %v778
    %v2831 = vunpack.c.l.b16 %v779
    %v2832 = vunpack.c.l.b16 %v780
    %v2833 = vunpack.c.l.b16 %v781
    %v2834 = vunpack.c.l.b16 %v782
    %v2835 = vunpack.c.l.b16 %v783
    %v2836 = vunpack.c.l.b16 %v784
    %v2837 = vunpack.c.l.b16 %v785
    %v2838 = vunpack.c.l.b16 %v786
    %v2839 = vunpack.c.l.b16 %v787
    %v2840 = vunpack.c.l.b16 %v788
    %v2841 = vunpack.c.l.b16 %v789
    %v2842 = vunpack.c.l.b16 %v790
    %v2843 = vunpack.c.l.b16 %v791
    %v2844 = vunpack.c.l.b16 %v792
    %v2845 = vunpack.c.l.b16 %v793
    %v2846 = vunpack.c.l.b16 %v794
    %v2847 = vunpack.c.l.b16 %v795
    %v2848 = vunpack.c.l.b16 %v796
    %v2849 = vunpack.c.l.b16 %v797
    %v2850 = vunpack.c.l.b16 %v798
    %v2851 = vunpack.c.l.b16 %v799
    %v2852 = vunpack.c.l.b16 %v800
    %v2853 = vunpack.c.l.b16 %v801
    %v2854 = vunpack.c.l.b16 %v802
    %v2855 = vunpack.c.l.b16 %v803
    %v2856 = vunpack.c.l.b16 %v804
    %v2857 = vunpack.c.l.b16 %v805
    %v2858 = vunpack.c.l.b16 %v806
    %v2859 = vunpack.c.l.b16 %v807
    %v2860 = vunpack.c.l.b16 %v808
    %v2861 = vunpack.c.l.b16 %v809
    %v2862 = vunpack.c.l.b16 %v810
    %v2863 = vunpack.c.l.b16 %v811
    %v2864 = vunpack.c.l.b16 %v812
    %v2865 = vunpack.c.l.b16 %v813
    %v2866 = vunpack.c.l.b16 %v814
    %v2867 = vunpack.c.l.b16 %v815
    %v2868 = vunpack.c.l.b16 %v816
    %v2869 = vunpack.c.l.b16 %v817
    %v2870 = vunpack.c.l.b16 %v818
    %v2871 = vunpack.c.l.b16 %v819
    %v2872 = vunpack.c.l.b16 %v820
    %v2873 = vunpack.c.l.b16 %v821
    %v2874 = vunpack.c.l.b16 %v822
    %v2875 = vunpack.c.l.b16 %v823
    %v2876 = vunpack.c.l.b16 %v824
    %v2877 = vunpack.c.l.b16 %v825
    %v2878 = vunpack.c.l.b16 %v826
    %v2879 = vunpack.c.l.b16 %v827
    %v2880 = vunpack.c.l.b16 %v828
    %v2881 = vunpack.c.l.b16 %v829
    %v2882 = vunpack.c.l.b16 %v830
    %v2883 = vunpack.c.l.b16 %v831
    %v2884 = vunpack.c.l.b16 %v832
    %v2885 = vunpack.c.l.b16 %v833
    %v2886 = vunpack.c.l.b16 %v834
    %v2887 = vunpack.c.l.b16 %v835
    %v2888 = vunpack.c.l.b16 %v836
    %v2889 = vunpack.c.l.b16 %v837
    %v2890 = vunpack.c.l.b16 %v838
    %v2891 = vunpack.c.l.b16 %v839
    %v2892 = vunpack.c.l.b16 %v840
    %v2893 = vunpack.c.l.b16 %v841
    %v2894 = vunpack.c.l.b16 %v842
    %v2895 = vunpack.c.l.b16 %v843
    %v2896 = vunpack.c.l.b16 %v844
    %v2897 = vunpack.c.l.b16 %v845
    %v2898 = vunpack.c.l.b16 %v846
    %v2899 = vunpack.c.l.b16 %v847
    %v2900 = vunpack.c.l.b16 %v848
    %v2901 = vunpack.c.l.b16 %v849
    %v2902 = vunpack.c.l.b16 %v850
    %v2903 = vunpack.c.l.b16 %v851
    %v2904 = vunpack.c.l.b16 %v852
    %v2905 = vunpack.c.l.b16 %v853
    %v2906 = vunpack.c.l.b16 %v854
    %v2907 = vunpack.c.l.b16 %v855
    %v2908 = vunpack.c.l.b16 %v856
    %v2909 = vunpack.c.l.b16 %v857
    %v2910 = vunpack.c.l.b16 %v858
    %v2911 = vunpack.c.l.b16 %v859
    %v2912 = vunpack.c.l.b16 %v860
    %v2913 = vunpack.c.l.b16 %v861
    %v2914 = vunpack.c.l.b16 %v862
    %v2915 = vunpack.c.l.b16 %v863
    %v2916 = vunpack.c.l.b16 %v864
    %v2917 = vunpack.c.l.b16 %v865
    %v2918 = vunpack.c.l.b16 %v866
    %v2919 = vunpack.c.l.b16 %v867
    %v2920 = vunpack.c.l.b16 %v868
    %v2921 = vunpack.c.l.b16 %v869
    %v2922 = vunpack.c.l.b16 %v870
    %v2923 = vunpack.c.l.b16 %v871
    %v2924 = vunpack.c.l.b16 %v872
    %v2925 = vunpack.c.l.b16 %v873
    %v2926 = vunpack.c.l.b16 %v874
    %v2927 = vunpack.c.l.b16 %v875
    %v2928 = vunpack.c.l.b16 %v876
    %v2929 = vunpack.c.l.b16 %v877
    %v2930 = vunpack.c.l.b16 %v878
    %v2931 = vunpack.c.l.b16 %v879
    %v2932 = vunpack.c.l.b16 %v880
    %v2933 = vunpack.c.l.b16 %v881
    %v2934 = vunpack.c.l.b16 %v882
    %v2935 = vunpack.c.l.b16 %v883
    %v2936 = vunpack.c.l.b16 %v884
    %v2937 = vunpack.c.l.b16 %v885
    %v2938 = vunpack.c.l.b16 %v886
    %v2939 = vunpack.c.l.b16 %v887
    %v2940 = vunpack.c.l.b16 %v888
    %v2941 = vunpack.c.l.b16 %v889
    %v2942 = vunpack.c.l.b16 %v890
    %v2943 = vunpack.c.l.b16 %v891
    %v2944 = vunpack.c.l.b16 %v892
    %v2945 = vunpack.c.l.b16 %v893
    %v2946 = vunpack.c.l.b16 %v894
    %v2947 = vunpack.c.l.b16 %v895
    %v2948 = vunpack.c.l.b16 %v896
    %v2949 = vunpack.c.l.b16 %v897
    %v2950 = vunpack.c.l.b16 %v898
    %v2951 = vunpack.c.l.b16 %v899
    %v2952 = vunpack.c.l.b16 %v900
    %v2953 = vunpack.c.l.b16 %v901
    %v2954 = vunpack.c.l.b16 %v902
    %v2955 = vunpack.c.l.b16 %v903
    %v2956 = vunpack.c.l.b16 %v904
    %v2957 = vunpack.c.l.b16 %v905
    %v2958 = vunpack.c.l.b16 %v906
    %v2959 = vunpack.c.l.b16 %v907
    %v2960 = vunpack.c.l.b16 %v908
    %v2961 = vunpack.c.l.b16 %v909
    %v2962 = vunpack.c.l.b16 %v910
    %v2963 = vunpack.c.l.b16 %v911
    %v2964 = vunpack.c.l.b16 %v912
    %v2965 = vunpack.c.l.b16 %v913
    %v2966 = vunpack.c.l.b16 %v914
    %v2967 = vunpack.c.l.b16 %v915
    %v2968 = vunpack.c.l.b16 %v916
    %v2969 = vunpack.c.l.b16 %v917
    %v2970 = vunpack.c.l.b16 %v918
    %v2971 = vunpack.c.l.b16 %v919
    %v2972 = vunpack.c.l.b16 %v920
    %v2973 = vunpack.c.l.b16 %v921
    %v2974 = vunpack.c.l.b16 %v922
    %v2975 = vunpack.c.l.b16 %v923
    %v2976 = vunpack.c.l.b16 %v924
    %v2977 = vunpack.c.l.b16 %v925
    %v2978 = vunpack.c.l.b16 %v926
    %v2979 = vunpack.c.l.b16 %v927
    %v2980 = vunpack.c.l.b16 %v928
    %v2981 = vunpack.c.l.b16 %v929
    %v2982 = vunpack.c.l.b16 %v930
    %v2983 = vunpack.c.l.b16 %v931
    %v2984 = vunpack.c.l.b16 %v932
    %v2985 = vunpack.c.l.b16 %v933
    %v2986 = vunpack.c.l.b16 %v934
    %v2987 = vunpack.c.l.b16 %v935
    %v2988 = vunpack.c.l.b16 %v936
    %v2989 = vunpack.c.l.b16 %v937
    %v2990 = vunpack.c.l.b16 %v938
    %v2991 = vunpack.c.l.b16 %v939
    %v2992 = vunpack.c.l.b16 %v940
    %v2993 = vunpack.c.l.b16 %v941
    %v2994 = vunpack.c.l.b16 %v942
    %v2995 = vunpack.c.l.b16 %v943
    %v2996 = vunpack.c.l.b16 %v944
    %v2997 = vunpack.c.l.b16 %v945
    %v2998 = vunpack.c.l.b16 %v946
    %v2999 = vunpack.c.l.b16 %v947
    %v3000 = vunpack.c.l.b16 %v948
    %v3001 = vunpack.c.l.b16 %v949
    %v3002 = vunpack.c.l.b16 %v950
    %v3003 = vunpack.c.l.b16 %v951
    %v3004 = vunpack.c.l.b16 %v952
    %v3005 = vunpack.c.l.b16 %v953
    %v3006 = vunpack.c.l.b16 %v954
    %v3007 = vunpack.c.l.b16 %v955
    %v3008 = vunpack.c.l.b16 %v956
    %v3009 = vunpack.c.l.b16 %v957
    %v3010 = vunpack.c.l.b16 %v958
    %v3011 = vunpack.c.l.b16 %v959
    %v3012 = vunpack.c.l.b16 %v960
    %v3013 = vunpack.c.l.b16 %v961
    %v3014 = vunpack.c.l.b16 %v962
    %v3015 = vunpack.c.l.b16 %v963
    %v3016 = vunpack.c.l.b16 %v964
    %v3017 = vunpack.c.l.b16 %v965
    %v3018 = vunpack.c.l.b16 %v966
    %v3019 = vunpack.c.l.b16 %v967
    %v3020 = vunpack.c.l.b16 %v968
    %v3021 = vunpack.c.l.b16 %v969
    %v3022 = vunpack.c.l.b16 %v970
    %v3023 = vunpack.c.l.b16 %v971
    %v3024 = vunpack.c.l.b16 %v972
    %v3025 = vunpack.c.l.b16 %v973
    %v3026 = vunpack.c.l.b16 %v974
    %v3027 = vunpack.c.l.b16 %v975
    %v3028 = vunpack.c.l.b16 %v976
    %v3029 = vunpack.c.l.b16 %v977
    %v3030 = vunpack.c.l.b16 %v978
    %v3031 = vunpack.c.l.b16 %v979
    %v3032 = vunpack.c.l.b16 %v980
    %v3033 = vunpack.c.l.b16 %v981
    %v3034 = vunpack.c.l.b16 %v982
    %v3035 = vunpack.c.l.b16 %v983
    %v3036 = vunpack.c.l.b16 %v984
    %v3037 = vunpack.c.l.b16 %v985
    %v3038 = vunpack.c.l.b16 %v986
    %v3039 = vunpack.c.l.b16 %v987
    %v3040 = vunpack.c.l.b16 %v988
    %v3041 = vunpack.c.l.b16 %v989
    %v3042 = vunpack.c.l.b16 %v990
    %v3043 = vunpack.c.l.b16 %v991
    %v3044 = vunpack.c.l.b16 %v992
    %v3045 = vunpack.c.l.b16 %v993
    %v3046 = vunpack.c.l.b16 %v994
    %v3047 = vunpack.c.l.b16 %v995
    %v3048 = vunpack.c.l.b16 %v996
    %v3049 = vunpack.c.l.b16 %v997
    %v3050 = vunpack.c.l.b16 %v998
    %v3051 = vunpack.c.l.b16 %v999
    %v3052 = vunpack.c.l.b16 %v1000
    %v3053 = vunpack.c.l.b16 %v1001
    %v3054 = vunpack.c.l.b16 %v1002
    %v3055 = vunpack.c.l.b16 %v1003
    %v3056 = vunpack.c.l.b16 %v1004
    %v3057 = vunpack.c.l.b16 %v1005
    %v3058 = vunpack.c.l.b16 %v1006
    %v3059 = vunpack.c.l.b16 %v1007
    %v3060 = vunpack.c.l.b16 %v1008
    %v3061 = vunpack.c.l.b16 %v1009
    %v3062 = vunpack.c.l.b16 %v1010
    %v3063 = vunpack.c.l.b16 %v1011
    %v3064 = vunpack.c.l.b16 %v1012
    %v3065 = vunpack.c.l.b16 %v1013
    %v3066 = vunpack.c.l.b16 %v1014
    %v3067 = vunpack.c.l.b16 %v1015
    %v3068 = vunpack.c.l.b16 %v1016
    %v3069 = vunpack.c.l.b16 %v1017
    %v3070 = vunpack.c.l.b16 %v1018
    %v3071 = vunpack.c.l.b16 %v1019
    %v3072 = vunpack.c.l.b16 %v1020
    %v3073 = vunpack.c.l.b16 %v1021
    %v3074 = vunpack.c.l.b16 %v1022
    %v3075 = vunpack.c.l.b16 %v1023
    %v3076 = vunpack.c.l.b16 %v1024
    %v3077 = vunpack.c.l.b16 %v1025
    %v3078 = vunpack.c.l.b16 %v1026
    %v3079 = vunpack.c.l.b16 %v1027
    %v3080 = vunpack.c.l.b16 %v1028
    %v3081 = vunpack.c.l.b16 %v1029
    %v3082 = vunpack.c.l.b16 %v1030
    %v3083 = vunpack.c.l.b16 %v1031
    %v3084 = vunpack.c.l.b16 %v1032
    %v3085 = vunpack.c.l.b16 %v1033
    %v3086 = vunpack.c.l.b16 %v1034
    %v3087 = vunpack.c.l.b16 %v1035
    %v3088 = vunpack.c.l.b16 %v1036
    %v3089 = vunpack.c.l.b16 %v1037
    %v3090 = vunpack.c.l.b16 %v1038
    %v3091 = vunpack.c.l.b16 %v1039
    %v3092 = vunpack.c.l.b16 %v1040
    %v3093 = vunpack.c.l.b16 %v1041
    %v3094 = vunpack.c.l.b16 %v1042
    %v3095 = vunpack.c.l.b16 %v1043
    %v3096 = vunpack.c.l.b16 %v1044
    %v3097 = vunpack.c.l.b16 %v1045
    %v3098 = vunpack.c.l.b16 %v1046
    %v3099 = vunpack.c.l.b16 %v1047
    %v3100 = vunpack.c.l.b16 %v1048
    %v3101 = vunpack.c.l.b16 %v1049
    %v3102 = vunpack.c.l.b16 %v1050
    %v3103 = vunpack.c.l.b16 %v1051
    %v3104 = vunpack.c.l.b16 %v1052
    %v3105 = vunpack.c.l.b16 %v1053
    %v3106 = vunpack.c.l.b16 %v1054
    %v3107 = vunpack.c.l.b16 %v1055
    %v3108 = vunpack.c.l.b16 %v1056
    %v3109 = vunpack.c.l.b16 %v1057
    %v3110 = vunpack.c.l.b16 %v1058
    %v3111 = vunpack.c.l.b16 %v1059
    %v3112 = vunpack.c.l.b16 %v1060
    %v3113 = vunpack.c.l.b16 %v1061
    %v3114 = vunpack.c.l.b16 %v1062
    %v3115 = vunpack.c.l.b16 %v1063
    %v3116 = vunpack.c.l.b16 %v1064
    %v3117 = vunpack.c.l.b16 %v1065
    %v3118 = vunpack.c.l.b16 %v1066
    %v3119 = vunpack.c.l.b16 %v1067
    %v3120 = vunpack.c.l.b16 %v1068
    %v3121 = vunpack.c.l.b16 %v1069
    %v3122 = vunpack.c.l.b16 %v1070
    %v3123 = vunpack.c.l.b16 %v1071
    %v3124 = vunpack.c.l.b16 %v1072
    %v3125 = vunpack.c.l.b16 %v1073
    %v3126 = vunpack.c.l.b16 %v1074
    %v3127 = vunpack.c.l.b16 %v1075
    %v3128 = vunpack.c.l.b16 %v1076
    %v3129 = vunpack.c.l.b16 %v1077
    %v3130 = vunpack.c.l.b16 %v1078
    %v3131 = vunpack.c.l.b16 %v1079
    %v3132 = vunpack.c.l.b16 %v1080
    %v3133 = vunpack.c.l.b16 %v1081
    %v3134 = vunpack.c.l.b16 %v1082
    %v3135 = vunpack.c.l.b16 %v1083
    %v3136 = vunpack.c.l.b16 %v1084
    %v3137 = vunpack.c.l.b16 %v1085
    %v3138 = vunpack.c.l.b16 %v1086
    %v3139 = vunpack.c.l.b16 %v1087
    %v3140 = vunpack.c.l.b16 %v1088
    %v3141 = vunpack.c.l.b16 %v1089
    %v3142 = vunpack.c.l.b16 %v1090
    %v3143 = vunpack.c.l.b16 %v1091
    %v3144 = vunpack.c.l.b16 %v1092
    %v3145 = vunpack.c.l.b16 %v1093
    %v3146 = vunpack.c.l.b16 %v1094
    %v3147 = vunpack.c.l.b16 %v1095
    %v3148 = vunpack.c.l.b16 %v1096
    %v3149 = vunpack.c.l.b16 %v1097
    %v3150 = vunpack.c.l.b16 %v1098
    %v3151 = vunpack.c.l.b16 %v1099
    %v3152 = vunpack.c.l.b16 %v1100
    %v3153 = vunpack.c.l.b16 %v1101
    %v3154 = vunpack.c.l.b16 %v1102
    %v3155 = vunpack.c.l.b16 %v1103
    %v3156 = vunpack.c.l.b16 %v1104
    %v3157 = vunpack.c.l.b16 %v1105
    %v3158 = vunpack.c.l.b16 %v1106
    %v3159 = vunpack.c.l.b16 %v1107
    %v3160 = vunpack.c.l.b16 %v1108
    %v3161 = vunpack.c.l.b16 %v1109
    %v3162 = vunpack.c.l.b16 %v1110
    %v3163 = vunpack.c.l.b16 %v1111
    %v3164 = vunpack.c.l.b16 %v1112
    %v3165 = vunpack.c.l.b16 %v1113
    %v3166 = vunpack.c.l.b16 %v1114
    %v3167 = vunpack.c.l.b16 %v1115
    %v3168 = vunpack.c.l.b16 %v1116
    %v3169 = vunpack.c.l.b16 %v1117
    %v3170 = vunpack.c.l.b16 %v1118
    %v3171 = vunpack.c.l.b16 %v1119
    %v3172 = vunpack.c.l.b16 %v1120
    %v3173 = vunpack.c.l.b16 %v1121
    %v3174 = vunpack.c.l.b16 %v1122
    %v3175 = vunpack.c.l.b16 %v1123
    %v3176 = vunpack.c.l.b16 %v1124
    %v3177 = vunpack.c.l.b16 %v1125
    %v3178 = vunpack.c.l.b16 %v1126
    %v3179 = vunpack.c.l.b16 %v1127
    %v3180 = vunpack.c.l.b16 %v1128
    %v3181 = vunpack.c.l.b16 %v1129
    %v3182 = vunpack.c.l.b16 %v1130
    %v3183 = vunpack.c.l.b16 %v1131
    %v3184 = vunpack.c.l.b16 %v1132
    %v3185 = vunpack.c.l.b16 %v1133
    %v3186 = vunpack.c.l.b16 %v1134
    %v3187 = vunpack.c.l.b16 %v1135
    %v3188 = vunpack.c.l.b16 %v1136
    %v3189 = vunpack.c.l.b16 %v1137
    %v3190 = vunpack.c.l.b16 %v1138
    %v3191 = vunpack.c.l.b16 %v1139
    %v3192 = vunpack.c.l.b16 %v1140
    %v3193 = vunpack.c.l.b16 %v1141
    %v3194 = vunpack.c.l.b16 %v1142
    %v3195 = vunpack.c.l.b16 %v1143
    %v3196 = vunpack.c.l.b16 %v1144
    %v3197 = vunpack.c.l.b16 %v1145
    %v3198 = vunpack.c.l.b16 %v1146
    %v3199 = vunpack.c.l.b16 %v1147
    %v3200 = vunpack.c.l.b16 %v1148
    %v3201 = vunpack.c.l.b16 %v1149
    %v3202 = vunpack.c.l.b16 %v1150
    %v3203 = vunpack.c.l.b16 %v1151
    %v3204 = vunpack.c.l.b16 %v1152
    %v3205 = vunpack.c.l.b16 %v1153
    %v3206 = vunpack.c.l.b16 %v1154
    %v3207 = vunpack.c.l.b16 %v1155
    %v3208 = vunpack.c.l.b16 %v1156
    %v3209 = vunpack.c.l.b16 %v1157
    %v3210 = vunpack.c.l.b16 %v1158
    %v3211 = vunpack.c.l.b16 %v1159
    %v3212 = vunpack.c.l.b16 %v1160
    %v3213 = vunpack.c.l.b16 %v1161
    %v3214 = vunpack.c.l.b16 %v1162
    %v3215 = vunpack.c.l.b16 %v1163
    %v3216 = vunpack.c.l.b16 %v1164
    %v3217 = vunpack.c.l.b16 %v1165
    %v3218 = vunpack.c.l.b16 %v1166
    %v3219 = vpack.c.b16 %v2196, %v2195
    %v3220 = vpack.c.b16 %v2198, %v2197
    %v3221 = vpack.c.b16 %v2200, %v2199
    %v3222 = vpack.c.b16 %v2202, %v2201
    %v3223 = vpack.c.b16 %v2204, %v2203
    %v3224 = vpack.c.b16 %v2206, %v2205
    %v3225 = vpack.c.b16 %v2208, %v2207
    %v3226 = vpack.c.b16 %v2210, %v2209
    %v3227 = vpack.c.b16 %v2212, %v2211
    %v3228 = vpack.c.b16 %v2214, %v2213
    %v3229 = vpack.c.b16 %v2216, %v2215
    %v3230 = vpack.c.b16 %v2218, %v2217
    %v3231 = vpack.c.b16 %v2220, %v2219
    %v3232 = vpack.c.b16 %v2222, %v2221
    %v3233 = vpack.c.b16 %v2224, %v2223
    %v3234 = vpack.c.b16 %v2226, %v2225
    %v3235 = vpack.c.b16 %v2228, %v2227
    %v3236 = vpack.c.b16 %v2230, %v2229
    %v3237 = vpack.c.b16 %v2232, %v2231
    %v3238 = vpack.c.b16 %v2234, %v2233
    %v3239 = vpack.c.b16 %v2236, %v2235
    %v3240 = vpack.c.b16 %v2238, %v2237
    %v3241 = vpack.c.b16 %v2240, %v2239
    %v3242 = vpack.c.b16 %v2242, %v2241
    %v3243 = vpack.c.b16 %v2244, %v2243
    %v3244 = vpack.c.b16 %v2246, %v2245
    %v3245 = vpack.c.b16 %v2248, %v2247
    %v3246 = vpack.c.b16 %v2250, %v2249
    %v3247 = vpack.c.b16 %v2252, %v2251
    %v3248 = vpack.c.b16 %v2254, %v2253
    %v3249 = vpack.c.b16 %v2256, %v2255
    %v3250 = vpack.c.b16 %v2258, %v2257
    %v3251 = vpack.c.b16 %v2260, %v2259
    %v3252 = vpack.c.b16 %v2262, %v2261
    %v3253 = vpack.c.b16 %v2264, %v2263
    %v3254 = vpack.c.b16 %v2266, %v2265
    %v3255 = vpack.c.b16 %v2268, %v2267
    %v3256 = vpack.c.b16 %v2270, %v2269
    %v3257 = vpack.c.b16 %v2272, %v2271
    %v3258 = vpack.c.b16 %v2274, %v2273
    %v3259 = vpack.c.b16 %v2276, %v2275
    %v3260 = vpack.c.b16 %v2278, %v2277
    %v3261 = vpack.c.b16 %v2280, %v2279
    %v3262 = vpack.c.b16 %v2282, %v2281
    %v3263 = vpack.c.b16 %v2284, %v2283
    %v3264 = vpack.c.b16 %v2286, %v2285
    %v3265 = vpack.c.b16 %v2288, %v2287
    %v3266 = vpack.c.b16 %v2290, %v2289
    %v3267 = vpack.c.b16 %v2292, %v2291
    %v3268 = vpack.c.b16 %v2294, %v2293
    %v3269 = vpack.c.b16 %v2296, %v2295
    %v3270 = vpack.c.b16 %v2298, %v2297
    %v3271 = vpack.c.b16 %v2300, %v2299
    %v3272 = vpack.c.b16 %v2302, %v2301
    %v3273 = vpack.c.b16 %v2304, %v2303
    %v3274 = vpack.c.b16 %v2306, %v2305
    %v3275 = vpack.c.b16 %v2308, %v2307
    %v3276 = vpack.c.b16 %v2310, %v2309
    %v3277 = vpack.c.b16 %v2312, %v2311
    %v3278 = vpack.c.b16 %v2314, %v2313
    %v3279 = vpack.c.b16 %v2316, %v2315
    %v3280 = vpack.c.b16 %v2318, %v2317
    %v3281 = vpack.c.b16 %v2320, %v2319
    %v3282 = vpack.c.b16 %v2322, %v2321
    %v3283 = vpack.c.b16 %v2324, %v2323
    %v3284 = vpack.c.b16 %v2326, %v2325
    %v3285 = vpack.c.b16 %v2328, %v2327
    %v3286 = vpack.c.b16 %v2330, %v2329
    %v3287 = vpack.c.b16 %v2332, %v2331
    %v3288 = vpack.c.b16 %v2334, %v2333
    %v3289 = vpack.c.b16 %v2336, %v2335
    %v3290 = vpack.c.b16 %v2338, %v2337
    %v3291 = vpack.c.b16 %v2340, %v2339
    %v3292 = vpack.c.b16 %v2342, %v2341
    %v3293 = vpack.c.b16 %v2344, %v2343
    %v3294 = vpack.c.b16 %v2346, %v2345
    %v3295 = vpack.c.b16 %v2348, %v2347
    %v3296 = vpack.c.b16 %v2350, %v2349
    %v3297 = vpack.c.b16 %v2352, %v2351
    %v3298 = vpack.c.b16 %v2354, %v2353
    %v3299 = vpack.c.b16 %v2356, %v2355
    %v3300 = vpack.c.b16 %v2358, %v2357
    %v3301 = vpack.c.b16 %v2360, %v2359
    %v3302 = vpack.c.b16 %v2362, %v2361
    %v3303 = vpack.c.b16 %v2364, %v2363
    %v3304 = vpack.c.b16 %v2366, %v2365
    %v3305 = vpack.c.b16 %v2368, %v2367
    %v3306 = vpack.c.b16 %v2370, %v2369
    %v3307 = vpack.c.b16 %v2372, %v2371
    %v3308 = vpack.c.b16 %v2374, %v2373
    %v3309 = vpack.c.b16 %v2376, %v2375
    %v3310 = vpack.c.b16 %v2378, %v2377
    %v3311 = vpack.c.b16 %v2380, %v2379
    %v3312 = vpack.c.b16 %v2382, %v2381
    %v3313 = vpack.c.b16 %v2384, %v2383
    %v3314 = vpack.c.b16 %v2386, %v2385
    %v3315 = vpack.c.b16 %v2388, %v2387
    %v3316 = vpack.c.b16 %v2390, %v2389
    %v3317 = vpack.c.b16 %v2392, %v2391
    %v3318 = vpack.c.b16 %v2394, %v2393
    %v3319 = vpack.c.b16 %v2396, %v2395
    %v3320 = vpack.c.b16 %v2398, %v2397
    %v3321 = vpack.c.b16 %v2400, %v2399
    %v3322 = vpack.c.b16 %v2402, %v2401
    %v3323 = vpack.c.b16 %v2404, %v2403
    %v3324 = vpack.c.b16 %v2406, %v2405
    %v3325 = vpack.c.b16 %v2408, %v2407
    %v3326 = vpack.c.b16 %v2410, %v2409
    %v3327 = vpack.c.b16 %v2412, %v2411
    %v3328 = vpack.c.b16 %v2414, %v2413
    %v3329 = vpack.c.b16 %v2416, %v2415
    %v3330 = vpack.c.b16 %v2418, %v2417
    %v3331 = vpack.c.b16 %v2420, %v2419
    %v3332 = vpack.c.b16 %v2422, %v2421
    %v3333 = vpack.c.b16 %v2424, %v2423
    %v3334 = vpack.c.b16 %v2426, %v2425
    %v3335 = vpack.c.b16 %v2428, %v2427
    %v3336 = vpack.c.b16 %v2430, %v2429
    %v3337 = vpack.c.b16 %v2432, %v2431
    %v3338 = vpack.c.b16 %v2434, %v2433
    %v3339 = vpack.c.b16 %v2436, %v2435
    %v3340 = vpack.c.b16 %v2438, %v2437
    %v3341 = vpack.c.b16 %v2440, %v2439
    %v3342 = vpack.c.b16 %v2442, %v2441
    %v3343 = vpack.c.b16 %v2444, %v2443
    %v3344 = vpack.c.b16 %v2446, %v2445
    %v3345 = vpack.c.b16 %v2448, %v2447
    %v3346 = vpack.c.b16 %v2450, %v2449
    %v3347 = vpack.c.b16 %v2452, %v2451
    %v3348 = vpack.c.b16 %v2454, %v2453
    %v3349 = vpack.c.b16 %v2456, %v2455
    %v3350 = vpack.c.b16 %v2458, %v2457
    %v3351 = vpack.c.b16 %v2460, %v2459
    %v3352 = vpack.c.b16 %v2462, %v2461
    %v3353 = vpack.c.b16 %v2464, %v2463
    %v3354 = vpack.c.b16 %v2466, %v2465
    %v3355 = vpack.c.b16 %v2468, %v2467
    %v3356 = vpack.c.b16 %v2470, %v2469
    %v3357 = vpack.c.b16 %v2472, %v2471
    %v3358 = vpack.c.b16 %v2474, %v2473
    %v3359 = vpack.c.b16 %v2476, %v2475
    %v3360 = vpack.c.b16 %v2478, %v2477
    %v3361 = vpack.c.b16 %v2480, %v2479
    %v3362 = vpack.c.b16 %v2482, %v2481
    %v3363 = vpack.c.b16 %v2484, %v2483
    %v3364 = vpack.c.b16 %v2486, %v2485
    %v3365 = vpack.c.b16 %v2488, %v2487
    %v3366 = vpack.c.b16 %v2490, %v2489
    %v3367 = vpack.c.b16 %v2492, %v2491
    %v3368 = vpack.c.b16 %v2494, %v2493
    %v3369 = vpack.c.b16 %v2496, %v2495
    %v3370 = vpack.c.b16 %v2498, %v2497
    %v3371 = vpack.c.b16 %v2500, %v2499
    %v3372 = vpack.c.b16 %v2502, %v2501
    %v3373 = vpack.c.b16 %v2504, %v2503
    %v3374 = vpack.c.b16 %v2506, %v2505
    %v3375 = vpack.c.b16 %v2508, %v2507
    %v3376 = vpack.c.b16 %v2510, %v2509
    %v3377 = vpack.c.b16 %v2512, %v2511
    %v3378 = vpack.c.b16 %v2514, %v2513
    %v3379 = vpack.c.b16 %v2516, %v2515
    %v3380 = vpack.c.b16 %v2518, %v2517
    %v3381 = vpack.c.b16 %v2520, %v2519
    %v3382 = vpack.c.b16 %v2522, %v2521
    %v3383 = vpack.c.b16 %v2524, %v2523
    %v3384 = vpack.c.b16 %v2526, %v2525
    %v3385 = vpack.c.b16 %v2528, %v2527
    %v3386 = vpack.c.b16 %v2530, %v2529
    %v3387 = vpack.c.b16 %v2532, %v2531
    %v3388 = vpack.c.b16 %v2534, %v2533
    %v3389 = vpack.c.b16 %v2536, %v2535
    %v3390 = vpack.c.b16 %v2538, %v2537
    %v3391 = vpack.c.b16 %v2540, %v2539
    %v3392 = vpack.c.b16 %v2542, %v2541
    %v3393 = vpack.c.b16 %v2544, %v2543
    %v3394 = vpack.c.b16 %v2546, %v2545
    %v3395 = vpack.c.b16 %v2548, %v2547
    %v3396 = vpack.c.b16 %v2550, %v2549
    %v3397 = vpack.c.b16 %v2552, %v2551
    %v3398 = vpack.c.b16 %v2554, %v2553
    %v3399 = vpack.c.b16 %v2556, %v2555
    %v3400 = vpack.c.b16 %v2558, %v2557
    %v3401 = vpack.c.b16 %v2560, %v2559
    %v3402 = vpack.c.b16 %v2562, %v2561
    %v3403 = vpack.c.b16 %v2564, %v2563
    %v3404 = vpack.c.b16 %v2566, %v2565
    %v3405 = vpack.c.b16 %v2568, %v2567
    %v3406 = vpack.c.b16 %v2570, %v2569
    %v3407 = vpack.c.b16 %v2572, %v2571
    %v3408 = vpack.c.b16 %v2574, %v2573
    %v3409 = vpack.c.b16 %v2576, %v2575
    %v3410 = vpack.c.b16 %v2578, %v2577
    %v3411 = vpack.c.b16 %v2580, %v2579
    %v3412 = vpack.c.b16 %v2582, %v2581
    %v3413 = vpack.c.b16 %v2584, %v2583
    %v3414 = vpack.c.b16 %v2586, %v2585
    %v3415 = vpack.c.b16 %v2588, %v2587
    %v3416 = vpack.c.b16 %v2590, %v2589
    %v3417 = vpack.c.b16 %v2592, %v2591
    %v3418 = vpack.c.b16 %v2594, %v2593
    %v3419 = vpack.c.b16 %v2596, %v2595
    %v3420 = vpack.c.b16 %v2598, %v2597
    %v3421 = vpack.c.b16 %v2600, %v2599
    %v3422 = vpack.c.b16 %v2602, %v2601
    %v3423 = vpack.c.b16 %v2604, %v2603
    %v3424 = vpack.c.b16 %v2606, %v2605
    %v3425 = vpack.c.b16 %v2608, %v2607
    %v3426 = vpack.c.b16 %v2610, %v2609
    %v3427 = vpack.c.b16 %v2612, %v2611
    %v3428 = vpack.c.b16 %v2614, %v2613
    %v3429 = vpack.c.b16 %v2616, %v2615
    %v3430 = vpack.c.b16 %v2618, %v2617
    %v3431 = vpack.c.b16 %v2620, %v2619
    %v3432 = vpack.c.b16 %v2622, %v2621
    %v3433 = vpack.c.b16 %v2624, %v2623
    %v3434 = vpack.c.b16 %v2626, %v2625
    %v3435 = vpack.c.b16 %v2628, %v2627
    %v3436 = vpack.c.b16 %v2630, %v2629
    %v3437 = vpack.c.b16 %v2632, %v2631
    %v3438 = vpack.c.b16 %v2634, %v2633
    %v3439 = vpack.c.b16 %v2636, %v2635
    %v3440 = vpack.c.b16 %v2638, %v2637
    %v3441 = vpack.c.b16 %v2640, %v2639
    %v3442 = vpack.c.b16 %v2642, %v2641
    %v3443 = vpack.c.b16 %v2644, %v2643
    %v3444 = vpack.c.b16 %v2646, %v2645
    %v3445 = vpack.c.b16 %v2648, %v2647
    %v3446 = vpack.c.b16 %v2650, %v2649
    %v3447 = vpack.c.b16 %v2652, %v2651
    %v3448 = vpack.c.b16 %v2654, %v2653
    %v3449 = vpack.c.b16 %v2656, %v2655
    %v3450 = vpack.c.b16 %v2658, %v2657
    %v3451 = vpack.c.b16 %v2660, %v2659
    %v3452 = vpack.c.b16 %v2662, %v2661
    %v3453 = vpack.c.b16 %v2664, %v2663
    %v3454 = vpack.c.b16 %v2666, %v2665
    %v3455 = vpack.c.b16 %v2668, %v2667
    %v3456 = vpack.c.b16 %v2670, %v2669
    %v3457 = vpack.c.b16 %v2672, %v2671
    %v3458 = vpack.c.b16 %v2674, %v2673
    %v3459 = vpack.c.b16 %v2676, %v2675
    %v3460 = vpack.c.b16 %v2678, %v2677
    %v3461 = vpack.c.b16 %v2680, %v2679
    %v3462 = vpack.c.b16 %v2682, %v2681
    %v3463 = vpack.c.b16 %v2684, %v2683
    %v3464 = vpack.c.b16 %v2686, %v2685
    %v3465 = vpack.c.b16 %v2688, %v2687
    %v3466 = vpack.c.b16 %v2690, %v2689
    %v3467 = vpack.c.b16 %v2692, %v2691
    %v3468 = vpack.c.b16 %v2694, %v2693
    %v3469 = vpack.c.b16 %v2696, %v2695
    %v3470 = vpack.c.b16 %v2698, %v2697
    %v3471 = vpack.c.b16 %v2700, %v2699
    %v3472 = vpack.c.b16 %v2702, %v2701
    %v3473 = vpack.c.b16 %v2704, %v2703
    %v3474 = vpack.c.b16 %v2706, %v2705
    %v3475 = vpack.c.b16 %v2708, %v2707
    %v3476 = vpack.c.b16 %v2710, %v2709
    %v3477 = vpack.c.b16 %v2712, %v2711
    %v3478 = vpack.c.b16 %v2714, %v2713
    %v3479 = vpack.c.b16 %v2716, %v2715
    %v3480 = vpack.c.b16 %v2718, %v2717
    %v3481 = vpack.c.b16 %v2720, %v2719
    %v3482 = vpack.c.b16 %v2722, %v2721
    %v3483 = vpack.c.b16 %v2724, %v2723
    %v3484 = vpack.c.b16 %v2726, %v2725
    %v3485 = vpack.c.b16 %v2728, %v2727
    %v3486 = vpack.c.b16 %v2730, %v2729
    %v3487 = vpack.c.b16 %v2732, %v2731
    %v3488 = vpack.c.b16 %v2734, %v2733
    %v3489 = vpack.c.b16 %v2736, %v2735
    %v3490 = vpack.c.b16 %v2738, %v2737
    %v3491 = vpack.c.b16 %v2740, %v2739
    %v3492 = vpack.c.b16 %v2742, %v2741
    %v3493 = vpack.c.b16 %v2744, %v2743
    %v3494 = vpack.c.b16 %v2746, %v2745
    %v3495 = vpack.c.b16 %v2748, %v2747
    %v3496 = vpack.c.b16 %v2750, %v2749
    %v3497 = vpack.c.b16 %v2752, %v2751
    %v3498 = vpack.c.b16 %v2754, %v2753
    %v3499 = vpack.c.b16 %v2756, %v2755
    %v3500 = vpack.c.b16 %v2758, %v2757
    %v3501 = vpack.c.b16 %v2760, %v2759
    %v3502 = vpack.c.b16 %v2762, %v2761
    %v3503 = vpack.c.b16 %v2764, %v2763
    %v3504 = vpack.c.b16 %v2766, %v2765
    %v3505 = vpack.c.b16 %v2768, %v2767
    %v3506 = vpack.c.b16 %v2770, %v2769
    %v3507 = vpack.c.b16 %v2772, %v2771
    %v3508 = vpack.c.b16 %v2774, %v2773
    %v3509 = vpack.c.b16 %v2776, %v2775
    %v3510 = vpack.c.b16 %v2778, %v2777
    %v3511 = vpack.c.b16 %v2780, %v2779
    %v3512 = vpack.c.b16 %v2782, %v2781
    %v3513 = vpack.c.b16 %v2784, %v2783
    %v3514 = vpack.c.b16 %v2786, %v2785
    %v3515 = vpack.c.b16 %v2788, %v2787
    %v3516 = vpack.c.b16 %v2790, %v2789
    %v3517 = vpack.c.b16 %v2792, %v2791
    %v3518 = vpack.c.b16 %v2794, %v2793
    %v3519 = vpack.c.b16 %v2796, %v2795
    %v3520 = vpack.c.b16 %v2798, %v2797
    %v3521 = vpack.c.b16 %v2800, %v2799
    %v3522 = vpack.c.b16 %v2802, %v2801
    %v3523 = vpack.c.b16 %v2804, %v2803
    %v3524 = vpack.c.b16 %v2806, %v2805
    %v3525 = vpack.c.b16 %v2808, %v2807
    %v3526 = vpack.c.b16 %v2810, %v2809
    %v3527 = vpack.c.b16 %v2812, %v2811
    %v3528 = vpack.c.b16 %v2814, %v2813
    %v3529 = vpack.c.b16 %v2816, %v2815
    %v3530 = vpack.c.b16 %v2818, %v2817
    %v3531 = vpack.c.b16 %v2820, %v2819
    %v3532 = vpack.c.b16 %v2822, %v2821
    %v3533 = vpack.c.b16 %v2824, %v2823
    %v3534 = vpack.c.b16 %v2826, %v2825
    %v3535 = vpack.c.b16 %v2828, %v2827
    %v3536 = vpack.c.b16 %v2830, %v2829
    %v3537 = vpack.c.b16 %v2832, %v2831
    %v3538 = vpack.c.b16 %v2834, %v2833
    %v3539 = vpack.c.b16 %v2836, %v2835
    %v3540 = vpack.c.b16 %v2838, %v2837
    %v3541 = vpack.c.b16 %v2840, %v2839
    %v3542 = vpack.c.b16 %v2842, %v2841
    %v3543 = vpack.c.b16 %v2844, %v2843
    %v3544 = vpack.c.b16 %v2846, %v2845
    %v3545 = vpack.c.b16 %v2848, %v2847
    %v3546 = vpack.c.b16 %v2850, %v2849
    %v3547 = vpack.c.b16 %v2852, %v2851
    %v3548 = vpack.c.b16 %v2854, %v2853
    %v3549 = vpack.c.b16 %v2856, %v2855
    %v3550 = vpack.c.b16 %v2858, %v2857
    %v3551 = vpack.c.b16 %v2860, %v2859
    %v3552 = vpack.c.b16 %v2862, %v2861
    %v3553 = vpack.c.b16 %v2864, %v2863
    %v3554 = vpack.c.b16 %v2866, %v2865
    %v3555 = vpack.c.b16 %v2868, %v2867
    %v3556 = vpack.c.b16 %v2870, %v2869
    %v3557 = vpack.c.b16 %v2872, %v2871
    %v3558 = vpack.c.b16 %v2874, %v2873
    %v3559 = vpack.c.b16 %v2876, %v2875
    %v3560 = vpack.c.b16 %v2878, %v2877
    %v3561 = vpack.c.b16 %v2880, %v2879
    %v3562 = vpack.c.b16 %v2882, %v2881
    %v3563 = vpack.c.b16 %v2884, %v2883
    %v3564 = vpack.c.b16 %v2886, %v2885
    %v3565 = vpack.c.b16 %v2888, %v2887
    %v3566 = vpack.c.b16 %v2890, %v2889
    %v3567 = vpack.c.b16 %v2892, %v2891
    %v3568 = vpack.c.b16 %v2894, %v2893
    %v3569 = vpack.c.b16 %v2896, %v2895
    %v3570 = vpack.c.b16 %v2898, %v2897
    %v3571 = vpack.c.b16 %v2900, %v2899
    %v3572 = vpack.c.b16 %v2902, %v2901
    %v3573 = vpack.c.b16 %v2904, %v2903
    %v3574 = vpack.c.b16 %v2906, %v2905
    %v3575 = vpack.c.b16 %v2908, %v2907
    %v3576 = vpack.c.b16 %v2910, %v2909
    %v3577 = vpack.c.b16 %v2912, %v2911
    %v3578 = vpack.c.b16 %v2914, %v2913
    %v3579 = vpack.c.b16 %v2916, %v2915
    %v3580 = vpack.c.b16 %v2918, %v2917
    %v3581 = vpack.c.b16 %v2920, %v2919
    %v3582 = vpack.c.b16 %v2922, %v2921
    %v3583 = vpack.c.b16 %v2924, %v2923
    %v3584 = vpack.c.b16 %v2926, %v2925
    %v3585 = vpack.c.b16 %v2928, %v2927
    %v3586 = vpack.c.b16 %v2930, %v2929
    %v3587 = vpack.c.b16 %v2932, %v2931
    %v3588 = vpack.c.b16 %v2934, %v2933
    %v3589 = vpack.c.b16 %v2936, %v2935
    %v3590 = vpack.c.b16 %v2938, %v2937
    %v3591 = vpack.c.b16 %v2940, %v2939
    %v3592 = vpack.c.b16 %v2942, %v2941
    %v3593 = vpack.c.b16 %v2944, %v2943
    %v3594 = vpack.c.b16 %v2946, %v2945
    %v3595 = vpack.c.b16 %v2948, %v2947
    %v3596 = vpack.c.b16 %v2950, %v2949
    %v3597 = vpack.c.b16 %v2952, %v2951
    %v3598 = vpack.c.b16 %v2954, %v2953
    %v3599 = vpack.c.b16 %v2956, %v2955
    %v3600 = vpack.c.b16 %v2958, %v2957
    %v3601 = vpack.c.b16 %v2960, %v2959
    %v3602 = vpack.c.b16 %v2962, %v2961
    %v3603 = vpack.c.b16 %v2964, %v2963
    %v3604 = vpack.c.b16 %v2966, %v2965
    %v3605 = vpack.c.b16 %v2968, %v2967
    %v3606 = vpack.c.b16 %v2970, %v2969
    %v3607 = vpack.c.b16 %v2972, %v2971
    %v3608 = vpack.c.b16 %v2974, %v2973
    %v3609 = vpack.c.b16 %v2976, %v2975
    %v3610 = vpack.c.b16 %v2978, %v2977
    %v3611 = vpack.c.b16 %v2980, %v2979
    %v3612 = vpack.c.b16 %v2982, %v2981
    %v3613 = vpack.c.b16 %v2984, %v2983
    %v3614 = vpack.c.b16 %v2986, %v2985
    %v3615 = vpack.c.b16 %v2988, %v2987
    %v3616 = vpack.c.b16 %v2990, %v2989
    %v3617 = vpack.c.b16 %v2992, %v2991
    %v3618 = vpack.c.b16 %v2994, %v2993
    %v3619 = vpack.c.b16 %v2996, %v2995
    %v3620 = vpack.c.b16 %v2998, %v2997
    %v3621 = vpack.c.b16 %v3000, %v2999
    %v3622 = vpack.c.b16 %v3002, %v3001
    %v3623 = vpack.c.b16 %v3004, %v3003
    %v3624 = vpack.c.b16 %v3006, %v3005
    %v3625 = vpack.c.b16 %v3008, %v3007
    %v3626 = vpack.c.b16 %v3010, %v3009
    %v3627 = vpack.c.b16 %v3012, %v3011
    %v3628 = vpack.c.b16 %v3014, %v3013
    %v3629 = vpack.c.b16 %v3016, %v3015
    %v3630 = vpack.c.b16 %v3018, %v3017
    %v3631 = vpack.c.b16 %v3020, %v3019
    %v3632 = vpack.c.b16 %v3022, %v3021
    %v3633 = vpack.c.b16 %v3024, %v3023
    %v3634 = vpack.c.b16 %v3026, %v3025
    %v3635 = vpack.c.b16 %v3028, %v3027
    %v3636 = vpack.c.b16 %v3030, %v3029
    %v3637 = vpack.c.b16 %v3032, %v3031
    %v3638 = vpack.c.b16 %v3034, %v3033
    %v3639 = vpack.c.b16 %v3036, %v3035
    %v3640 = vpack.c.b16 %v3038, %v3037
    %v3641 = vpack.c.b16 %v3040, %v3039
    %v3642 = vpack.c.b16 %v3042, %v3041
    %v3643 = vpack.c.b16 %v3044, %v3043
    %v3644 = vpack.c.b16 %v3046, %v3045
    %v3645 = vpack.c.b16 %v3048, %v3047
    %v3646 = vpack.c.b16 %v3050, %v3049
    %v3647 = vpack.c.b16 %v3052, %v3051
    %v3648 = vpack.c.b16 %v3054, %v3053
    %v3649 = vpack.c.b16 %v3056, %v3055
    %v3650 = vpack.c.b16 %v3058, %v3057
    %v3651 = vpack.c.b16 %v3060, %v3059
    %v3652 = vpack.c.b16 %v3062, %v3061
    %v3653 = vpack.c.b16 %v3064, %v3063
    %v3654 = vpack.c.b16 %v3066, %v3065
    %v3655 = vpack.c.b16 %v3068, %v3067
    %v3656 = vpack.c.b16 %v3070, %v3069
    %v3657 = vpack.c.b16 %v3072, %v3071
    %v3658 = vpack.c.b16 %v3074, %v3073
    %v3659 = vpack.c.b16 %v3076, %v3075
    %v3660 = vpack.c.b16 %v3078, %v3077
    %v3661 = vpack.c.b16 %v3080, %v3079
    %v3662 = vpack.c.b16 %v3082, %v3081
    %v3663 = vpack.c.b16 %v3084, %v3083
    %v3664 = vpack.c.b16 %v3086, %v3085
    %v3665 = vpack.c.b16 %v3088, %v3087
    %v3666 = vpack.c.b16 %v3090, %v3089
    %v3667 = vpack.c.b16 %v3092, %v3091
    %v3668 = vpack.c.b16 %v3094, %v3093
    %v3669 = vpack.c.b16 %v3096, %v3095
    %v3670 = vpack.c.b16 %v3098, %v3097
    %v3671 = vpack.c.b16 %v3100, %v3099
    %v3672 = vpack.c.b16 %v3102, %v3101
    %v3673 = vpack.c.b16 %v3104, %v3103
    %v3674 = vpack.c.b16 %v3106, %v3105
    %v3675 = vpack.c.b16 %v3108, %v3107
    %v3676 = vpack.c.b16 %v3110, %v3109
    %v3677 = vpack.c.b16 %v3112, %v3111
    %v3678 = vpack.c.b16 %v3114, %v3113
    %v3679 = vpack.c.b16 %v3116, %v3115
    %v3680 = vpack.c.b16 %v3118, %v3117
    %v3681 = vpack.c.b16 %v3120, %v3119
    %v3682 = vpack.c.b16 %v3122, %v3121
    %v3683 = vpack.c.b16 %v3124, %v3123
    %v3684 = vpack.c.b16 %v3126, %v3125
    %v3685 = vpack.c.b16 %v3128, %v3127
    %v3686 = vpack.c.b16 %v3130, %v3129
    %v3687 = vpack.c.b16 %v3132, %v3131
    %v3688 = vpack.c.b16 %v3134, %v3133
    %v3689 = vpack.c.b16 %v3136, %v3135
    %v3690 = vpack.c.b16 %v3138, %v3137
    %v3691 = vpack.c.b16 %v3140, %v3139
    %v3692 = vpack.c.b16 %v3142, %v3141
    %v3693 = vpack.c.b16 %v3144, %v3143
    %v3694 = vpack.c.b16 %v3146, %v3145
    %v3695 = vpack.c.b16 %v3148, %v3147
    %v3696 = vpack.c.b16 %v3150, %v3149
    %v3697 = vpack.c.b16 %v3152, %v3151
    %v3698 = vpack.c.b16 %v3154, %v3153
    %v3699 = vpack.c.b16 %v3156, %v3155
    %v3700 = vpack.c.b16 %v3158, %v3157
    %v3701 = vpack.c.b16 %v3160, %v3159
    %v3702 = vpack.c.b16 %v3162, %v3161
    %v3703 = vpack.c.b16 %v3164, %v3163
    %v3704 = vpack.c.b16 %v3166, %v3165
    %v3705 = vpack.c.b16 %v3168, %v3167
    %v3706 = vpack.c.b16 %v3170, %v3169
    %v3707 = vpack.c.b16 %v3172, %v3171
    %v3708 = vpack.c.b16 %v3174, %v3173
    %v3709 = vpack.c.b16 %v3176, %v3175
    %v3710 = vpack.c.b16 %v3178, %v3177
    %v3711 = vpack.c.b16 %v3180, %v3179
    %v3712 = vpack.c.b16 %v3182, %v3181
    %v3713 = vpack.c.b16 %v3184, %v3183
    %v3714 = vpack.c.b16 %v3186, %v3185
    %v3715 = vpack.c.b16 %v3188, %v3187
    %v3716 = vpack.c.b16 %v3190, %v3189
    %v3717 = vpack.c.b16 %v3192, %v3191
    %v3718 = vpack.c.b16 %v3194, %v3193
    %v3719 = vpack.c.b16 %v3196, %v3195
    %v3720 = vpack.c.b16 %v3198, %v3197
    %v3721 = vpack.c.b16 %v3200, %v3199
    %v3722 = vpack.c.b16 %v3202, %v3201
    %v3723 = vpack.c.b16 %v3204, %v3203
    %v3724 = vpack.c.b16 %v3206, %v3205
    %v3725 = vpack.c.b16 %v3208, %v3207
    %v3726 = vpack.c.b16 %v3210, %v3209
    %v3727 = vpack.c.b16 %v3212, %v3211
    %v3728 = vpack.c.b16 %v3214, %v3213
    %v3729 = vpack.c.b16 %v3216, %v3215
    %v3730 = vpack.c.b16 %v3218, %v3217
    %4243 = vmatpush.bf16.msra.mxu0 %v3226
    %4244 = vmatpush.bf16.msra.mxu0 %v3225
    %4245 = vmatpush.bf16.msra.mxu0 %v3224
    %4246 = vmatpush.bf16.msra.mxu0 %v3223
    %4247 = vmatpush.bf16.msra.mxu0 %v3222
    %4248 = vmatpush.bf16.msra.mxu0 %v3221
    %4249 = vmatpush.bf16.msra.mxu0 %v3220
    %4250 = vmatpush.bf16.msra.mxu0 %v3219
    %4251 = vmatmul.bf16.gmra.mxu0 %v79
    %v4252 = vpop.f32.mrf.mxu0
    %v4253 = vadd.f32 %v1169, %v4252
    %v4254 = vpop.f32.mrf.mxu0
    %4255 = vdwg.mxu0
    %4256 = vmatpush.bf16.msra.mxu0 %v3234
    %4257 = vmatpush.bf16.msra.mxu0 %v3233
    %4258 = vmatpush.bf16.msra.mxu0 %v3232
    %4259 = vmatpush.bf16.msra.mxu0 %v3231
    %4260 = vmatpush.bf16.msra.mxu0 %v3230
    %4261 = vmatpush.bf16.msra.mxu0 %v3229
    %4262 = vmatpush.bf16.msra.mxu0 %v3228
    %4263 = vmatpush.bf16.msra.mxu0 %v3227
    %4264 = vmatmul.bf16.gmra.mxu0 %v80
    %v4265 = vpop.f32.mrf.mxu0
    %v4266 = vadd.f32 %v4253, %v4265
    %v4267 = vpop.f32.mrf.mxu0
    %4268 = vdwg.mxu0
    %4269 = vmatpush.bf16.msra.mxu0 %v3242
    %4270 = vmatpush.bf16.msra.mxu0 %v3241
    %4271 = vmatpush.bf16.msra.mxu0 %v3240
    %4272 = vmatpush.bf16.msra.mxu0 %v3239
    %4273 = vmatpush.bf16.msra.mxu0 %v3238
    %4274 = vmatpush.bf16.msra.mxu0 %v3237
    %4275 = vmatpush.bf16.msra.mxu0 %v3236
    %4276 = vmatpush.bf16.msra.mxu0 %v3235
    %4277 = vmatmul.bf16.gmra.mxu0 %v81
    %v4278 = vpop.f32.mrf.mxu0
    %v4279 = vadd.f32 %v4266, %v4278
    %v4280 = vpop.f32.mrf.mxu0
    %4281 = vdwg.mxu0
    %4282 = vmatpush.bf16.msra.mxu0 %v3250
    %4283 = vmatpush.bf16.msra.mxu0 %v3249
    %4284 = vmatpush.bf16.msra.mxu0 %v3248
    %4285 = vmatpush.bf16.msra.mxu0 %v3247
    %4286 = vmatpush.bf16.msra.mxu0 %v3246
    %4287 = vmatpush.bf16.msra.mxu0 %v3245
    %4288 = vmatpush.bf16.msra.mxu0 %v3244
    %4289 = vmatpush.bf16.msra.mxu0 %v3243
    %4290 = vmatmul.bf16.gmra.mxu0 %v82
    %v4291 = vpop.f32.mrf.mxu0
    %v4292 = vadd.f32 %v4279, %v4291
    %v4293 = vpop.f32.mrf.mxu0
    %4294 = vdwg.mxu0
    %4295 = vmatpush.bf16.msra.mxu0 %v3258
    %4296 = vmatpush.bf16.msra.mxu0 %v3257
    %4297 = vmatpush.bf16.msra.mxu0 %v3256
    %4298 = vmatpush.bf16.msra.mxu0 %v3255
    %4299 = vmatpush.bf16.msra.mxu0 %v3254
    %4300 = vmatpush.bf16.msra.mxu0 %v3253
    %4301 = vmatpush.bf16.msra.mxu0 %v3252
    %4302 = vmatpush.bf16.msra.mxu0 %v3251
    %4303 = vmatmul.bf16.gmra.mxu0 %v83
    %v4304 = vpop.f32.mrf.mxu0
    %v4305 = vadd.f32 %v4292, %v4304
    %v4306 = vpop.f32.mrf.mxu0
    %4307 = vdwg.mxu0
    %4308 = vmatpush.bf16.msra.mxu0 %v3266
    %4309 = vmatpush.bf16.msra.mxu0 %v3265
    %4310 = vmatpush.bf16.msra.mxu0 %v3264
    %4311 = vmatpush.bf16.msra.mxu0 %v3263
    %4312 = vmatpush.bf16.msra.mxu0 %v3262
    %4313 = vmatpush.bf16.msra.mxu0 %v3261
    %4314 = vmatpush.bf16.msra.mxu0 %v3260
    %4315 = vmatpush.bf16.msra.mxu0 %v3259
    %4316 = vmatmul.bf16.gmra.mxu0 %v84
    %v4317 = vpop.f32.mrf.mxu0
    %v4318 = vadd.f32 %v4305, %v4317
    %v4319 = vpop.f32.mrf.mxu0
    %4320 = vdwg.mxu0
    %4321 = vmatpush.bf16.msra.mxu0 %v3274
    %4322 = vmatpush.bf16.msra.mxu0 %v3273
    %4323 = vmatpush.bf16.msra.mxu0 %v3272
    %4324 = vmatpush.bf16.msra.mxu0 %v3271
    %4325 = vmatpush.bf16.msra.mxu0 %v3270
    %4326 = vmatpush.bf16.msra.mxu0 %v3269
    %4327 = vmatpush.bf16.msra.mxu0 %v3268
    %4328 = vmatpush.bf16.msra.mxu0 %v3267
    %4329 = vmatmul.bf16.gmra.mxu0 %v85
    %v4330 = vpop.f32.mrf.mxu0
    %v4331 = vadd.f32 %v4318, %v4330
    %v4332 = vpop.f32.mrf.mxu0
    %4333 = vdwg.mxu0
    %4334 = vmatpush.bf16.msra.mxu0 %v3282
    %4335 = vmatpush.bf16.msra.mxu0 %v3281
    %4336 = vmatpush.bf16.msra.mxu0 %v3280
    %4337 = vmatpush.bf16.msra.mxu0 %v3279
    %4338 = vmatpush.bf16.msra.mxu0 %v3278
    %4339 = vmatpush.bf16.msra.mxu0 %v3277
    %4340 = vmatpush.bf16.msra.mxu0 %v3276
    %4341 = vmatpush.bf16.msra.mxu0 %v3275
    %4342 = vmatmul.bf16.gmra.mxu0 %v86
    %v4343 = vpop.f32.mrf.mxu0
    %v4344 = vadd.f32 %v4331, %v4343
    %v4345 = vpop.f32.mrf.mxu0
    %4346 = vdwg.mxu0
    %4347 = vmatpush.bf16.msra.mxu0 %v3290
    %4348 = vmatpush.bf16.msra.mxu0 %v3289
    %4349 = vmatpush.bf16.msra.mxu0 %v3288
    %4350 = vmatpush.bf16.msra.mxu0 %v3287
    %4351 = vmatpush.bf16.msra.mxu0 %v3286
    %4352 = vmatpush.bf16.msra.mxu0 %v3285
    %4353 = vmatpush.bf16.msra.mxu0 %v3284
    %4354 = vmatpush.bf16.msra.mxu0 %v3283
    %4355 = vmatmul.bf16.gmra.mxu0 %v87
    %v4356 = vpop.f32.mrf.mxu0
    %v4357 = vadd.f32 %v4344, %v4356
    %v4358 = vpop.f32.mrf.mxu0
    %4359 = vdwg.mxu0
    %4360 = vmatpush.bf16.msra.mxu0 %v3298
    %4361 = vmatpush.bf16.msra.mxu0 %v3297
    %4362 = vmatpush.bf16.msra.mxu0 %v3296
    %4363 = vmatpush.bf16.msra.mxu0 %v3295
    %4364 = vmatpush.bf16.msra.mxu0 %v3294
    %4365 = vmatpush.bf16.msra.mxu0 %v3293
    %4366 = vmatpush.bf16.msra.mxu0 %v3292
    %4367 = vmatpush.bf16.msra.mxu0 %v3291
    %4368 = vmatmul.bf16.gmra.mxu0 %v88
    %v4369 = vpop.f32.mrf.mxu0
    %v4370 = vadd.f32 %v4357, %v4369
    %v4371 = vpop.f32.mrf.mxu0
    %4372 = vdwg.mxu0
    %4373 = vmatpush.bf16.msra.mxu0 %v3306
    %4374 = vmatpush.bf16.msra.mxu0 %v3305
    %4375 = vmatpush.bf16.msra.mxu0 %v3304
    %4376 = vmatpush.bf16.msra.mxu0 %v3303
    %4377 = vmatpush.bf16.msra.mxu0 %v3302
    %4378 = vmatpush.bf16.msra.mxu0 %v3301
    %4379 = vmatpush.bf16.msra.mxu0 %v3300
    %4380 = vmatpush.bf16.msra.mxu0 %v3299
    %4381 = vmatmul.bf16.gmra.mxu0 %v89
    %v4382 = vpop.f32.mrf.mxu0
    %v4383 = vadd.f32 %v4370, %v4382
    %v4384 = vpop.f32.mrf.mxu0
    %4385 = vdwg.mxu0
    %4386 = vmatpush.bf16.msra.mxu0 %v3314
    %4387 = vmatpush.bf16.msra.mxu0 %v3313
    %4388 = vmatpush.bf16.msra.mxu0 %v3312
    %4389 = vmatpush.bf16.msra.mxu0 %v3311
    %4390 = vmatpush.bf16.msra.mxu0 %v3310
    %4391 = vmatpush.bf16.msra.mxu0 %v3309
    %4392 = vmatpush.bf16.msra.mxu0 %v3308
    %4393 = vmatpush.bf16.msra.mxu0 %v3307
    %4394 = vmatmul.bf16.gmra.mxu0 %v90
    %v4395 = vpop.f32.mrf.mxu0
    %v4396 = vadd.f32 %v4383, %v4395
    %v4397 = vpop.f32.mrf.mxu0
    %4398 = vdwg.mxu0
    %4399 = vmatpush.bf16.msra.mxu0 %v3322
    %4400 = vmatpush.bf16.msra.mxu0 %v3321
    %4401 = vmatpush.bf16.msra.mxu0 %v3320
    %4402 = vmatpush.bf16.msra.mxu0 %v3319
    %4403 = vmatpush.bf16.msra.mxu0 %v3318
    %4404 = vmatpush.bf16.msra.mxu0 %v3317
    %4405 = vmatpush.bf16.msra.mxu0 %v3316
    %4406 = vmatpush.bf16.msra.mxu0 %v3315
    %4407 = vmatmul.bf16.gmra.mxu0 %v91
    %v4408 = vpop.f32.mrf.mxu0
    %v4409 = vadd.f32 %v4396, %v4408
    %v4410 = vpop.f32.mrf.mxu0
    %4411 = vdwg.mxu0
    %4412 = vmatpush.bf16.msra.mxu0 %v3330
    %4413 = vmatpush.bf16.msra.mxu0 %v3329
    %4414 = vmatpush.bf16.msra.mxu0 %v3328
    %4415 = vmatpush.bf16.msra.mxu0 %v3327
    %4416 = vmatpush.bf16.msra.mxu0 %v3326
    %4417 = vmatpush.bf16.msra.mxu0 %v3325
    %4418 = vmatpush.bf16.msra.mxu0 %v3324
    %4419 = vmatpush.bf16.msra.mxu0 %v3323
    %4420 = vmatmul.bf16.gmra.mxu0 %v92
    %v4421 = vpop.f32.mrf.mxu0
    %v4422 = vadd.f32 %v4409, %v4421
    %v4423 = vpop.f32.mrf.mxu0
    %4424 = vdwg.mxu0
    %4425 = vmatpush.bf16.msra.mxu0 %v3338
    %4426 = vmatpush.bf16.msra.mxu0 %v3337
    %4427 = vmatpush.bf16.msra.mxu0 %v3336
    %4428 = vmatpush.bf16.msra.mxu0 %v3335
    %4429 = vmatpush.bf16.msra.mxu0 %v3334
    %4430 = vmatpush.bf16.msra.mxu0 %v3333
    %4431 = vmatpush.bf16.msra.mxu0 %v3332
    %4432 = vmatpush.bf16.msra.mxu0 %v3331
    %4433 = vmatmul.bf16.gmra.mxu0 %v93
    %v4434 = vpop.f32.mrf.mxu0
    %v4435 = vadd.f32 %v4422, %v4434
    %v4436 = vpop.f32.mrf.mxu0
    %4437 = vdwg.mxu0
    %4438 = vmatpush.bf16.msra.mxu0 %v3346
    %4439 = vmatpush.bf16.msra.mxu0 %v3345
    %4440 = vmatpush.bf16.msra.mxu0 %v3344
    %4441 = vmatpush.bf16.msra.mxu0 %v3343
    %4442 = vmatpush.bf16.msra.mxu0 %v3342
    %4443 = vmatpush.bf16.msra.mxu0 %v3341
    %4444 = vmatpush.bf16.msra.mxu0 %v3340
    %4445 = vmatpush.bf16.msra.mxu0 %v3339
    %4446 = vmatmul.bf16.gmra.mxu0 %v94
    %v4447 = vpop.f32.mrf.mxu0
    %v4448 = vadd.f32 %v4435, %v4447
    %v4449 = vpop.f32.mrf.mxu0
    %4450 = vdwg.mxu0
    %4451 = vmatpush.bf16.msra.mxu0 %v3354
    %4452 = vmatpush.bf16.msra.mxu0 %v3353
    %4453 = vmatpush.bf16.msra.mxu0 %v3352
    %4454 = vmatpush.bf16.msra.mxu0 %v3351
    %4455 = vmatpush.bf16.msra.mxu0 %v3350
    %4456 = vmatpush.bf16.msra.mxu0 %v3349
    %4457 = vmatpush.bf16.msra.mxu0 %v3348
    %4458 = vmatpush.bf16.msra.mxu0 %v3347
    %4459 = vmatmul.bf16.gmra.mxu0 %v95
    %v4460 = vpop.f32.mrf.mxu0
    %v4461 = vadd.f32 %v4448, %v4460
    %v4462 = vpop.f32.mrf.mxu0
    %4463 = vdwg.mxu0
    %4464 = vmatpush.bf16.msra.mxu0 %v3362
    %4465 = vmatpush.bf16.msra.mxu0 %v3361
    %4466 = vmatpush.bf16.msra.mxu0 %v3360
    %4467 = vmatpush.bf16.msra.mxu0 %v3359
    %4468 = vmatpush.bf16.msra.mxu0 %v3358
    %4469 = vmatpush.bf16.msra.mxu0 %v3357
    %4470 = vmatpush.bf16.msra.mxu0 %v3356
    %4471 = vmatpush.bf16.msra.mxu0 %v3355
    %4472 = vmatmul.bf16.gmra.mxu0 %v96
    %v4473 = vpop.f32.mrf.mxu0
    %v4474 = vadd.f32 %v4461, %v4473
    %v4475 = vpop.f32.mrf.mxu0
    %4476 = vdwg.mxu0
    %4477 = vmatpush.bf16.msra.mxu0 %v3370
    %4478 = vmatpush.bf16.msra.mxu0 %v3369
    %4479 = vmatpush.bf16.msra.mxu0 %v3368
    %4480 = vmatpush.bf16.msra.mxu0 %v3367
    %4481 = vmatpush.bf16.msra.mxu0 %v3366
    %4482 = vmatpush.bf16.msra.mxu0 %v3365
    %4483 = vmatpush.bf16.msra.mxu0 %v3364
    %4484 = vmatpush.bf16.msra.mxu0 %v3363
    %4485 = vmatmul.bf16.gmra.mxu0 %v97
    %v4486 = vpop.f32.mrf.mxu0
    %v4487 = vadd.f32 %v4474, %v4486
    %v4488 = vpop.f32.mrf.mxu0
    %4489 = vdwg.mxu0
    %4490 = vmatpush.bf16.msra.mxu0 %v3378
    %4491 = vmatpush.bf16.msra.mxu0 %v3377
    %4492 = vmatpush.bf16.msra.mxu0 %v3376
    %4493 = vmatpush.bf16.msra.mxu0 %v3375
    %4494 = vmatpush.bf16.msra.mxu0 %v3374
    %4495 = vmatpush.bf16.msra.mxu0 %v3373
    %4496 = vmatpush.bf16.msra.mxu0 %v3372
    %4497 = vmatpush.bf16.msra.mxu0 %v3371
    %4498 = vmatmul.bf16.gmra.mxu0 %v98
    %v4499 = vpop.f32.mrf.mxu0
    %v4500 = vadd.f32 %v4487, %v4499
    %v4501 = vpop.f32.mrf.mxu0
    %4502 = vdwg.mxu0
    %4503 = vmatpush.bf16.msra.mxu0 %v3386
    %4504 = vmatpush.bf16.msra.mxu0 %v3385
    %4505 = vmatpush.bf16.msra.mxu0 %v3384
    %4506 = vmatpush.bf16.msra.mxu0 %v3383
    %4507 = vmatpush.bf16.msra.mxu0 %v3382
    %4508 = vmatpush.bf16.msra.mxu0 %v3381
    %4509 = vmatpush.bf16.msra.mxu0 %v3380
    %4510 = vmatpush.bf16.msra.mxu0 %v3379
    %4511 = vmatmul.bf16.gmra.mxu0 %v99
    %v4512 = vpop.f32.mrf.mxu0
    %v4513 = vadd.f32 %v4500, %v4512
    %v4514 = vpop.f32.mrf.mxu0
    %4515 = vdwg.mxu0
    %4516 = vmatpush.bf16.msra.mxu0 %v3394
    %4517 = vmatpush.bf16.msra.mxu0 %v3393
    %4518 = vmatpush.bf16.msra.mxu0 %v3392
    %4519 = vmatpush.bf16.msra.mxu0 %v3391
    %4520 = vmatpush.bf16.msra.mxu0 %v3390
    %4521 = vmatpush.bf16.msra.mxu0 %v3389
    %4522 = vmatpush.bf16.msra.mxu0 %v3388
    %4523 = vmatpush.bf16.msra.mxu0 %v3387
    %4524 = vmatmul.bf16.gmra.mxu0 %v100
    %v4525 = vpop.f32.mrf.mxu0
    %v4526 = vadd.f32 %v4513, %v4525
    %v4527 = vpop.f32.mrf.mxu0
    %4528 = vdwg.mxu0
    %4529 = vmatpush.bf16.msra.mxu0 %v3402
    %4530 = vmatpush.bf16.msra.mxu0 %v3401
    %4531 = vmatpush.bf16.msra.mxu0 %v3400
    %4532 = vmatpush.bf16.msra.mxu0 %v3399
    %4533 = vmatpush.bf16.msra.mxu0 %v3398
    %4534 = vmatpush.bf16.msra.mxu0 %v3397
    %4535 = vmatpush.bf16.msra.mxu0 %v3396
    %4536 = vmatpush.bf16.msra.mxu0 %v3395
    %4537 = vmatmul.bf16.gmra.mxu0 %v101
    %v4538 = vpop.f32.mrf.mxu0
    %v4539 = vadd.f32 %v4526, %v4538
    %v4540 = vpop.f32.mrf.mxu0
    %4541 = vdwg.mxu0
    %4542 = vmatpush.bf16.msra.mxu0 %v3410
    %4543 = vmatpush.bf16.msra.mxu0 %v3409
    %4544 = vmatpush.bf16.msra.mxu0 %v3408
    %4545 = vmatpush.bf16.msra.mxu0 %v3407
    %4546 = vmatpush.bf16.msra.mxu0 %v3406
    %4547 = vmatpush.bf16.msra.mxu0 %v3405
    %4548 = vmatpush.bf16.msra.mxu0 %v3404
    %4549 = vmatpush.bf16.msra.mxu0 %v3403
    %4550 = vmatmul.bf16.gmra.mxu0 %v102
    %v4551 = vpop.f32.mrf.mxu0
    %v4552 = vadd.f32 %v4539, %v4551
    %v4553 = vpop.f32.mrf.mxu0
    %4554 = vdwg.mxu0
    %4555 = vmatpush.bf16.msra.mxu0 %v3418
    %4556 = vmatpush.bf16.msra.mxu0 %v3417
    %4557 = vmatpush.bf16.msra.mxu0 %v3416
    %4558 = vmatpush.bf16.msra.mxu0 %v3415
    %4559 = vmatpush.bf16.msra.mxu0 %v3414
    %4560 = vmatpush.bf16.msra.mxu0 %v3413
    %4561 = vmatpush.bf16.msra.mxu0 %v3412
    %4562 = vmatpush.bf16.msra.mxu0 %v3411
    %4563 = vmatmul.bf16.gmra.mxu0 %v103
    %v4564 = vpop.f32.mrf.mxu0
    %v4565 = vadd.f32 %v4552, %v4564
    %v4566 = vpop.f32.mrf.mxu0
    %4567 = vdwg.mxu0
    %4568 = vmatpush.bf16.msra.mxu0 %v3426
    %4569 = vmatpush.bf16.msra.mxu0 %v3425
    %4570 = vmatpush.bf16.msra.mxu0 %v3424
    %4571 = vmatpush.bf16.msra.mxu0 %v3423
    %4572 = vmatpush.bf16.msra.mxu0 %v3422
    %4573 = vmatpush.bf16.msra.mxu0 %v3421
    %4574 = vmatpush.bf16.msra.mxu0 %v3420
    %4575 = vmatpush.bf16.msra.mxu0 %v3419
    %4576 = vmatmul.bf16.gmra.mxu0 %v104
    %v4577 = vpop.f32.mrf.mxu0
    %v4578 = vadd.f32 %v4565, %v4577
    %v4579 = vpop.f32.mrf.mxu0
    %4580 = vdwg.mxu0
    %4581 = vmatpush.bf16.msra.mxu0 %v3434
    %4582 = vmatpush.bf16.msra.mxu0 %v3433
    %4583 = vmatpush.bf16.msra.mxu0 %v3432
    %4584 = vmatpush.bf16.msra.mxu0 %v3431
    %4585 = vmatpush.bf16.msra.mxu0 %v3430
    %4586 = vmatpush.bf16.msra.mxu0 %v3429
    %4587 = vmatpush.bf16.msra.mxu0 %v3428
    %4588 = vmatpush.bf16.msra.mxu0 %v3427
    %4589 = vmatmul.bf16.gmra.mxu0 %v105
    %v4590 = vpop.f32.mrf.mxu0
    %v4591 = vadd.f32 %v4578, %v4590
    %v4592 = vpop.f32.mrf.mxu0
    %4593 = vdwg.mxu0
    %4594 = vmatpush.bf16.msra.mxu0 %v3442
    %4595 = vmatpush.bf16.msra.mxu0 %v3441
    %4596 = vmatpush.bf16.msra.mxu0 %v3440
    %4597 = vmatpush.bf16.msra.mxu0 %v3439
    %4598 = vmatpush.bf16.msra.mxu0 %v3438
    %4599 = vmatpush.bf16.msra.mxu0 %v3437
    %4600 = vmatpush.bf16.msra.mxu0 %v3436
    %4601 = vmatpush.bf16.msra.mxu0 %v3435
    %4602 = vmatmul.bf16.gmra.mxu0 %v106
    %v4603 = vpop.f32.mrf.mxu0
    %v4604 = vadd.f32 %v4591, %v4603
    %v4605 = vpop.f32.mrf.mxu0
    %4606 = vdwg.mxu0
    %4607 = vmatpush.bf16.msra.mxu0 %v3450
    %4608 = vmatpush.bf16.msra.mxu0 %v3449
    %4609 = vmatpush.bf16.msra.mxu0 %v3448
    %4610 = vmatpush.bf16.msra.mxu0 %v3447
    %4611 = vmatpush.bf16.msra.mxu0 %v3446
    %4612 = vmatpush.bf16.msra.mxu0 %v3445
    %4613 = vmatpush.bf16.msra.mxu0 %v3444
    %4614 = vmatpush.bf16.msra.mxu0 %v3443
    %4615 = vmatmul.bf16.gmra.mxu0 %v107
    %v4616 = vpop.f32.mrf.mxu0
    %v4617 = vadd.f32 %v4604, %v4616
    %v4618 = vpop.f32.mrf.mxu0
    %4619 = vdwg.mxu0
    %4620 = vmatpush.bf16.msra.mxu0 %v3458
    %4621 = vmatpush.bf16.msra.mxu0 %v3457
    %4622 = vmatpush.bf16.msra.mxu0 %v3456
    %4623 = vmatpush.bf16.msra.mxu0 %v3455
    %4624 = vmatpush.bf16.msra.mxu0 %v3454
    %4625 = vmatpush.bf16.msra.mxu0 %v3453
    %4626 = vmatpush.bf16.msra.mxu0 %v3452
    %4627 = vmatpush.bf16.msra.mxu0 %v3451
    %4628 = vmatmul.bf16.gmra.mxu0 %v108
    %v4629 = vpop.f32.mrf.mxu0
    %v4630 = vadd.f32 %v4617, %v4629
    %v4631 = vpop.f32.mrf.mxu0
    %4632 = vdwg.mxu0
    %4633 = vmatpush.bf16.msra.mxu0 %v3466
    %4634 = vmatpush.bf16.msra.mxu0 %v3465
    %4635 = vmatpush.bf16.msra.mxu0 %v3464
    %4636 = vmatpush.bf16.msra.mxu0 %v3463
    %4637 = vmatpush.bf16.msra.mxu0 %v3462
    %4638 = vmatpush.bf16.msra.mxu0 %v3461
    %4639 = vmatpush.bf16.msra.mxu0 %v3460
    %4640 = vmatpush.bf16.msra.mxu0 %v3459
    %4641 = vmatmul.bf16.gmra.mxu0 %v109
    %v4642 = vpop.f32.mrf.mxu0
    %v4643 = vadd.f32 %v4630, %v4642
    %v4644 = vpop.f32.mrf.mxu0
    %4645 = vdwg.mxu0
    %4646 = vmatpush.bf16.msra.mxu0 %v3474
    %4647 = vmatpush.bf16.msra.mxu0 %v3473
    %4648 = vmatpush.bf16.msra.mxu0 %v3472
    %4649 = vmatpush.bf16.msra.mxu0 %v3471
    %4650 = vmatpush.bf16.msra.mxu0 %v3470
    %4651 = vmatpush.bf16.msra.mxu0 %v3469
    %4652 = vmatpush.bf16.msra.mxu0 %v3468
    %4653 = vmatpush.bf16.msra.mxu0 %v3467
    %4654 = vmatmul.bf16.gmra.mxu0 %v110
    %v4655 = vpop.f32.mrf.mxu0
    %v4656 = vadd.f32 %v4643, %v4655
    %v4657 = vpop.f32.mrf.mxu0
    %4658 = vdwg.mxu0
    %4659 = vmatpush.bf16.msra.mxu0 %v3482
    %4660 = vmatpush.bf16.msra.mxu0 %v3481
    %4661 = vmatpush.bf16.msra.mxu0 %v3480
    %4662 = vmatpush.bf16.msra.mxu0 %v3479
    %4663 = vmatpush.bf16.msra.mxu0 %v3478
    %4664 = vmatpush.bf16.msra.mxu0 %v3477
    %4665 = vmatpush.bf16.msra.mxu0 %v3476
    %4666 = vmatpush.bf16.msra.mxu0 %v3475
    %4667 = vmatmul.bf16.gmra.mxu0 %v111
    %v4668 = vpop.f32.mrf.mxu0
    %v4669 = vadd.f32 %v4656, %v4668
    %v4670 = vpop.f32.mrf.mxu0
    %4671 = vdwg.mxu0
    %4672 = vmatpush.bf16.msra.mxu0 %v3490
    %4673 = vmatpush.bf16.msra.mxu0 %v3489
    %4674 = vmatpush.bf16.msra.mxu0 %v3488
    %4675 = vmatpush.bf16.msra.mxu0 %v3487
    %4676 = vmatpush.bf16.msra.mxu0 %v3486
    %4677 = vmatpush.bf16.msra.mxu0 %v3485
    %4678 = vmatpush.bf16.msra.mxu0 %v3484
    %4679 = vmatpush.bf16.msra.mxu0 %v3483
    %4680 = vmatmul.bf16.gmra.mxu0 %v112
    %v4681 = vpop.f32.mrf.mxu0
    %v4682 = vadd.f32 %v4669, %v4681
    %v4683 = vpop.f32.mrf.mxu0
    %4684 = vdwg.mxu0
    %4685 = vmatpush.bf16.msra.mxu0 %v3498
    %4686 = vmatpush.bf16.msra.mxu0 %v3497
    %4687 = vmatpush.bf16.msra.mxu0 %v3496
    %4688 = vmatpush.bf16.msra.mxu0 %v3495
    %4689 = vmatpush.bf16.msra.mxu0 %v3494
    %4690 = vmatpush.bf16.msra.mxu0 %v3493
    %4691 = vmatpush.bf16.msra.mxu0 %v3492
    %4692 = vmatpush.bf16.msra.mxu0 %v3491
    %4693 = vmatmul.bf16.gmra.mxu0 %v113
    %v4694 = vpop.f32.mrf.mxu0
    %v4695 = vadd.f32 %v4682, %v4694
    %v4696 = vpop.f32.mrf.mxu0
    %4697 = vdwg.mxu0
    %4698 = vmatpush.bf16.msra.mxu0 %v3506
    %4699 = vmatpush.bf16.msra.mxu0 %v3505
    %4700 = vmatpush.bf16.msra.mxu0 %v3504
    %4701 = vmatpush.bf16.msra.mxu0 %v3503
    %4702 = vmatpush.bf16.msra.mxu0 %v3502
    %4703 = vmatpush.bf16.msra.mxu0 %v3501
    %4704 = vmatpush.bf16.msra.mxu0 %v3500
    %4705 = vmatpush.bf16.msra.mxu0 %v3499
    %4706 = vmatmul.bf16.gmra.mxu0 %v114
    %v4707 = vpop.f32.mrf.mxu0
    %v4708 = vadd.f32 %v4695, %v4707
    %v4709 = vpop.f32.mrf.mxu0
    %4710 = vdwg.mxu0
    %4711 = vmatpush.bf16.msra.mxu0 %v3514
    %4712 = vmatpush.bf16.msra.mxu0 %v3513
    %4713 = vmatpush.bf16.msra.mxu0 %v3512
    %4714 = vmatpush.bf16.msra.mxu0 %v3511
    %4715 = vmatpush.bf16.msra.mxu0 %v3510
    %4716 = vmatpush.bf16.msra.mxu0 %v3509
    %4717 = vmatpush.bf16.msra.mxu0 %v3508
    %4718 = vmatpush.bf16.msra.mxu0 %v3507
    %4719 = vmatmul.bf16.gmra.mxu0 %v115
    %v4720 = vpop.f32.mrf.mxu0
    %v4721 = vadd.f32 %v4708, %v4720
    %v4722 = vpop.f32.mrf.mxu0
    %4723 = vdwg.mxu0
    %4724 = vmatpush.bf16.msra.mxu0 %v3522
    %4725 = vmatpush.bf16.msra.mxu0 %v3521
    %4726 = vmatpush.bf16.msra.mxu0 %v3520
    %4727 = vmatpush.bf16.msra.mxu0 %v3519
    %4728 = vmatpush.bf16.msra.mxu0 %v3518
    %4729 = vmatpush.bf16.msra.mxu0 %v3517
    %4730 = vmatpush.bf16.msra.mxu0 %v3516
    %4731 = vmatpush.bf16.msra.mxu0 %v3515
    %4732 = vmatmul.bf16.gmra.mxu0 %v116
    %v4733 = vpop.f32.mrf.mxu0
    %v4734 = vadd.f32 %v4721, %v4733
    %v4735 = vpop.f32.mrf.mxu0
    %4736 = vdwg.mxu0
    %4737 = vmatpush.bf16.msra.mxu0 %v3530
    %4738 = vmatpush.bf16.msra.mxu0 %v3529
    %4739 = vmatpush.bf16.msra.mxu0 %v3528
    %4740 = vmatpush.bf16.msra.mxu0 %v3527
    %4741 = vmatpush.bf16.msra.mxu0 %v3526
    %4742 = vmatpush.bf16.msra.mxu0 %v3525
    %4743 = vmatpush.bf16.msra.mxu0 %v3524
    %4744 = vmatpush.bf16.msra.mxu0 %v3523
    %4745 = vmatmul.bf16.gmra.mxu0 %v117
    %v4746 = vpop.f32.mrf.mxu0
    %v4747 = vadd.f32 %v4734, %v4746
    %v4748 = vpop.f32.mrf.mxu0
    %4749 = vdwg.mxu0
    %4750 = vmatpush.bf16.msra.mxu0 %v3538
    %4751 = vmatpush.bf16.msra.mxu0 %v3537
    %4752 = vmatpush.bf16.msra.mxu0 %v3536
    %4753 = vmatpush.bf16.msra.mxu0 %v3535
    %4754 = vmatpush.bf16.msra.mxu0 %v3534
    %4755 = vmatpush.bf16.msra.mxu0 %v3533
    %4756 = vmatpush.bf16.msra.mxu0 %v3532
    %4757 = vmatpush.bf16.msra.mxu0 %v3531
    %4758 = vmatmul.bf16.gmra.mxu0 %v118
    %v4759 = vpop.f32.mrf.mxu0
    %v4760 = vadd.f32 %v4747, %v4759
    %v4761 = vpop.f32.mrf.mxu0
    %4762 = vdwg.mxu0
    %4763 = vmatpush.bf16.msra.mxu0 %v3546
    %4764 = vmatpush.bf16.msra.mxu0 %v3545
    %4765 = vmatpush.bf16.msra.mxu0 %v3544
    %4766 = vmatpush.bf16.msra.mxu0 %v3543
    %4767 = vmatpush.bf16.msra.mxu0 %v3542
    %4768 = vmatpush.bf16.msra.mxu0 %v3541
    %4769 = vmatpush.bf16.msra.mxu0 %v3540
    %4770 = vmatpush.bf16.msra.mxu0 %v3539
    %4771 = vmatmul.bf16.gmra.mxu0 %v119
    %v4772 = vpop.f32.mrf.mxu0
    %v4773 = vadd.f32 %v4760, %v4772
    %v4774 = vpop.f32.mrf.mxu0
    %4775 = vdwg.mxu0
    %4776 = vmatpush.bf16.msra.mxu0 %v3554
    %4777 = vmatpush.bf16.msra.mxu0 %v3553
    %4778 = vmatpush.bf16.msra.mxu0 %v3552
    %4779 = vmatpush.bf16.msra.mxu0 %v3551
    %4780 = vmatpush.bf16.msra.mxu0 %v3550
    %4781 = vmatpush.bf16.msra.mxu0 %v3549
    %4782 = vmatpush.bf16.msra.mxu0 %v3548
    %4783 = vmatpush.bf16.msra.mxu0 %v3547
    %4784 = vmatmul.bf16.gmra.mxu0 %v120
    %v4785 = vpop.f32.mrf.mxu0
    %v4786 = vadd.f32 %v4773, %v4785
    %v4787 = vpop.f32.mrf.mxu0
    %4788 = vdwg.mxu0
    %4789 = vmatpush.bf16.msra.mxu0 %v3562
    %4790 = vmatpush.bf16.msra.mxu0 %v3561
    %4791 = vmatpush.bf16.msra.mxu0 %v3560
    %4792 = vmatpush.bf16.msra.mxu0 %v3559
    %4793 = vmatpush.bf16.msra.mxu0 %v3558
    %4794 = vmatpush.bf16.msra.mxu0 %v3557
    %4795 = vmatpush.bf16.msra.mxu0 %v3556
    %4796 = vmatpush.bf16.msra.mxu0 %v3555
    %4797 = vmatmul.bf16.gmra.mxu0 %v121
    %v4798 = vpop.f32.mrf.mxu0
    %v4799 = vadd.f32 %v4786, %v4798
    %v4800 = vpop.f32.mrf.mxu0
    %4801 = vdwg.mxu0
    %4802 = vmatpush.bf16.msra.mxu0 %v3570
    %4803 = vmatpush.bf16.msra.mxu0 %v3569
    %4804 = vmatpush.bf16.msra.mxu0 %v3568
    %4805 = vmatpush.bf16.msra.mxu0 %v3567
    %4806 = vmatpush.bf16.msra.mxu0 %v3566
    %4807 = vmatpush.bf16.msra.mxu0 %v3565
    %4808 = vmatpush.bf16.msra.mxu0 %v3564
    %4809 = vmatpush.bf16.msra.mxu0 %v3563
    %4810 = vmatmul.bf16.gmra.mxu0 %v122
    %v4811 = vpop.f32.mrf.mxu0
    %v4812 = vadd.f32 %v4799, %v4811
    %v4813 = vpop.f32.mrf.mxu0
    %4814 = vdwg.mxu0
    %4815 = vmatpush.bf16.msra.mxu0 %v3578
    %4816 = vmatpush.bf16.msra.mxu0 %v3577
    %4817 = vmatpush.bf16.msra.mxu0 %v3576
    %4818 = vmatpush.bf16.msra.mxu0 %v3575
    %4819 = vmatpush.bf16.msra.mxu0 %v3574
    %4820 = vmatpush.bf16.msra.mxu0 %v3573
    %4821 = vmatpush.bf16.msra.mxu0 %v3572
    %4822 = vmatpush.bf16.msra.mxu0 %v3571
    %4823 = vmatmul.bf16.gmra.mxu0 %v123
    %v4824 = vpop.f32.mrf.mxu0
    %v4825 = vadd.f32 %v4812, %v4824
    %v4826 = vpop.f32.mrf.mxu0
    %4827 = vdwg.mxu0
    %4828 = vmatpush.bf16.msra.mxu0 %v3586
    %4829 = vmatpush.bf16.msra.mxu0 %v3585
    %4830 = vmatpush.bf16.msra.mxu0 %v3584
    %4831 = vmatpush.bf16.msra.mxu0 %v3583
    %4832 = vmatpush.bf16.msra.mxu0 %v3582
    %4833 = vmatpush.bf16.msra.mxu0 %v3581
    %4834 = vmatpush.bf16.msra.mxu0 %v3580
    %4835 = vmatpush.bf16.msra.mxu0 %v3579
    %4836 = vmatmul.bf16.gmra.mxu0 %v124
    %v4837 = vpop.f32.mrf.mxu0
    %v4838 = vadd.f32 %v4825, %v4837
    %v4839 = vpop.f32.mrf.mxu0
    %4840 = vdwg.mxu0
    %4841 = vmatpush.bf16.msra.mxu0 %v3594
    %4842 = vmatpush.bf16.msra.mxu0 %v3593
    %4843 = vmatpush.bf16.msra.mxu0 %v3592
    %4844 = vmatpush.bf16.msra.mxu0 %v3591
    %4845 = vmatpush.bf16.msra.mxu0 %v3590
    %4846 = vmatpush.bf16.msra.mxu0 %v3589
    %4847 = vmatpush.bf16.msra.mxu0 %v3588
    %4848 = vmatpush.bf16.msra.mxu0 %v3587
    %4849 = vmatmul.bf16.gmra.mxu0 %v125
    %v4850 = vpop.f32.mrf.mxu0
    %v4851 = vadd.f32 %v4838, %v4850
    %v4852 = vpop.f32.mrf.mxu0
    %4853 = vdwg.mxu0
    %4854 = vmatpush.bf16.msra.mxu0 %v3602
    %4855 = vmatpush.bf16.msra.mxu0 %v3601
    %4856 = vmatpush.bf16.msra.mxu0 %v3600
    %4857 = vmatpush.bf16.msra.mxu0 %v3599
    %4858 = vmatpush.bf16.msra.mxu0 %v3598
    %4859 = vmatpush.bf16.msra.mxu0 %v3597
    %4860 = vmatpush.bf16.msra.mxu0 %v3596
    %4861 = vmatpush.bf16.msra.mxu0 %v3595
    %4862 = vmatmul.bf16.gmra.mxu0 %v126
    %v4863 = vpop.f32.mrf.mxu0
    %v4864 = vadd.f32 %v4851, %v4863
    %v4865 = vpop.f32.mrf.mxu0
    %4866 = vdwg.mxu0
    %4867 = vmatpush.bf16.msra.mxu0 %v3610
    %4868 = vmatpush.bf16.msra.mxu0 %v3609
    %4869 = vmatpush.bf16.msra.mxu0 %v3608
    %4870 = vmatpush.bf16.msra.mxu0 %v3607
    %4871 = vmatpush.bf16.msra.mxu0 %v3606
    %4872 = vmatpush.bf16.msra.mxu0 %v3605
    %4873 = vmatpush.bf16.msra.mxu0 %v3604
    %4874 = vmatpush.bf16.msra.mxu0 %v3603
    %4875 = vmatmul.bf16.gmra.mxu0 %v127
    %v4876 = vpop.f32.mrf.mxu0
    %v4877 = vadd.f32 %v4864, %v4876
    %v4878 = vpop.f32.mrf.mxu0
    %4879 = vdwg.mxu0
    %4880 = vmatpush.bf16.msra.mxu0 %v3618
    %4881 = vmatpush.bf16.msra.mxu0 %v3617
    %4882 = vmatpush.bf16.msra.mxu0 %v3616
    %4883 = vmatpush.bf16.msra.mxu0 %v3615
    %4884 = vmatpush.bf16.msra.mxu0 %v3614
    %4885 = vmatpush.bf16.msra.mxu0 %v3613
    %4886 = vmatpush.bf16.msra.mxu0 %v3612
    %4887 = vmatpush.bf16.msra.mxu0 %v3611
    %4888 = vmatmul.bf16.gmra.mxu0 %v128
    %v4889 = vpop.f32.mrf.mxu0
    %v4890 = vadd.f32 %v4877, %v4889
    %v4891 = vpop.f32.mrf.mxu0
    %4892 = vdwg.mxu0
    %4893 = vmatpush.bf16.msra.mxu0 %v3626
    %4894 = vmatpush.bf16.msra.mxu0 %v3625
    %4895 = vmatpush.bf16.msra.mxu0 %v3624
    %4896 = vmatpush.bf16.msra.mxu0 %v3623
    %4897 = vmatpush.bf16.msra.mxu0 %v3622
    %4898 = vmatpush.bf16.msra.mxu0 %v3621
    %4899 = vmatpush.bf16.msra.mxu0 %v3620
    %4900 = vmatpush.bf16.msra.mxu0 %v3619
    %4901 = vmatmul.bf16.gmra.mxu0 %v129
    %v4902 = vpop.f32.mrf.mxu0
    %v4903 = vadd.f32 %v4890, %v4902
    %v4904 = vpop.f32.mrf.mxu0
    %4905 = vdwg.mxu0
    %4906 = vmatpush.bf16.msra.mxu0 %v3634
    %4907 = vmatpush.bf16.msra.mxu0 %v3633
    %4908 = vmatpush.bf16.msra.mxu0 %v3632
    %4909 = vmatpush.bf16.msra.mxu0 %v3631
    %4910 = vmatpush.bf16.msra.mxu0 %v3630
    %4911 = vmatpush.bf16.msra.mxu0 %v3629
    %4912 = vmatpush.bf16.msra.mxu0 %v3628
    %4913 = vmatpush.bf16.msra.mxu0 %v3627
    %4914 = vmatmul.bf16.gmra.mxu0 %v130
    %v4915 = vpop.f32.mrf.mxu0
    %v4916 = vadd.f32 %v4903, %v4915
    %v4917 = vpop.f32.mrf.mxu0
    %4918 = vdwg.mxu0
    %4919 = vmatpush.bf16.msra.mxu0 %v3642
    %4920 = vmatpush.bf16.msra.mxu0 %v3641
    %4921 = vmatpush.bf16.msra.mxu0 %v3640
    %4922 = vmatpush.bf16.msra.mxu0 %v3639
    %4923 = vmatpush.bf16.msra.mxu0 %v3638
    %4924 = vmatpush.bf16.msra.mxu0 %v3637
    %4925 = vmatpush.bf16.msra.mxu0 %v3636
    %4926 = vmatpush.bf16.msra.mxu0 %v3635
    %4927 = vmatmul.bf16.gmra.mxu0 %v131
    %v4928 = vpop.f32.mrf.mxu0
    %v4929 = vadd.f32 %v4916, %v4928
    %v4930 = vpop.f32.mrf.mxu0
    %4931 = vdwg.mxu0
    %4932 = vmatpush.bf16.msra.mxu0 %v3650
    %4933 = vmatpush.bf16.msra.mxu0 %v3649
    %4934 = vmatpush.bf16.msra.mxu0 %v3648
    %4935 = vmatpush.bf16.msra.mxu0 %v3647
    %4936 = vmatpush.bf16.msra.mxu0 %v3646
    %4937 = vmatpush.bf16.msra.mxu0 %v3645
    %4938 = vmatpush.bf16.msra.mxu0 %v3644
    %4939 = vmatpush.bf16.msra.mxu0 %v3643
    %4940 = vmatmul.bf16.gmra.mxu0 %v132
    %v4941 = vpop.f32.mrf.mxu0
    %v4942 = vadd.f32 %v4929, %v4941
    %v4943 = vpop.f32.mrf.mxu0
    %4944 = vdwg.mxu0
    %4945 = vmatpush.bf16.msra.mxu0 %v3658
    %4946 = vmatpush.bf16.msra.mxu0 %v3657
    %4947 = vmatpush.bf16.msra.mxu0 %v3656
    %4948 = vmatpush.bf16.msra.mxu0 %v3655
    %4949 = vmatpush.bf16.msra.mxu0 %v3654
    %4950 = vmatpush.bf16.msra.mxu0 %v3653
    %4951 = vmatpush.bf16.msra.mxu0 %v3652
    %4952 = vmatpush.bf16.msra.mxu0 %v3651
    %4953 = vmatmul.bf16.gmra.mxu0 %v133
    %v4954 = vpop.f32.mrf.mxu0
    %v4955 = vadd.f32 %v4942, %v4954
    %v4956 = vpop.f32.mrf.mxu0
    %4957 = vdwg.mxu0
    %4958 = vmatpush.bf16.msra.mxu0 %v3666
    %4959 = vmatpush.bf16.msra.mxu0 %v3665
    %4960 = vmatpush.bf16.msra.mxu0 %v3664
    %4961 = vmatpush.bf16.msra.mxu0 %v3663
    %4962 = vmatpush.bf16.msra.mxu0 %v3662
    %4963 = vmatpush.bf16.msra.mxu0 %v3661
    %4964 = vmatpush.bf16.msra.mxu0 %v3660
    %4965 = vmatpush.bf16.msra.mxu0 %v3659
    %4966 = vmatmul.bf16.gmra.mxu0 %v134
    %v4967 = vpop.f32.mrf.mxu0
    %v4968 = vadd.f32 %v4955, %v4967
    %v4969 = vpop.f32.mrf.mxu0
    %4970 = vdwg.mxu0
    %4971 = vmatpush.bf16.msra.mxu0 %v3674
    %4972 = vmatpush.bf16.msra.mxu0 %v3673
    %4973 = vmatpush.bf16.msra.mxu0 %v3672
    %4974 = vmatpush.bf16.msra.mxu0 %v3671
    %4975 = vmatpush.bf16.msra.mxu0 %v3670
    %4976 = vmatpush.bf16.msra.mxu0 %v3669
    %4977 = vmatpush.bf16.msra.mxu0 %v3668
    %4978 = vmatpush.bf16.msra.mxu0 %v3667
    %4979 = vmatmul.bf16.gmra.mxu0 %v135
    %v4980 = vpop.f32.mrf.mxu0
    %v4981 = vadd.f32 %v4968, %v4980
    %v4982 = vpop.f32.mrf.mxu0
    %4983 = vdwg.mxu0
    %4984 = vmatpush.bf16.msra.mxu0 %v3682
    %4985 = vmatpush.bf16.msra.mxu0 %v3681
    %4986 = vmatpush.bf16.msra.mxu0 %v3680
    %4987 = vmatpush.bf16.msra.mxu0 %v3679
    %4988 = vmatpush.bf16.msra.mxu0 %v3678
    %4989 = vmatpush.bf16.msra.mxu0 %v3677
    %4990 = vmatpush.bf16.msra.mxu0 %v3676
    %4991 = vmatpush.bf16.msra.mxu0 %v3675
    %4992 = vmatmul.bf16.gmra.mxu0 %v136
    %v4993 = vpop.f32.mrf.mxu0
    %v4994 = vadd.f32 %v4981, %v4993
    %v4995 = vpop.f32.mrf.mxu0
    %4996 = vdwg.mxu0
    %4997 = vmatpush.bf16.msra.mxu0 %v3690
    %4998 = vmatpush.bf16.msra.mxu0 %v3689
    %4999 = vmatpush.bf16.msra.mxu0 %v3688
    %5000 = vmatpush.bf16.msra.mxu0 %v3687
    %5001 = vmatpush.bf16.msra.mxu0 %v3686
    %5002 = vmatpush.bf16.msra.mxu0 %v3685
    %5003 = vmatpush.bf16.msra.mxu0 %v3684
    %5004 = vmatpush.bf16.msra.mxu0 %v3683
    %5005 = vmatmul.bf16.gmra.mxu0 %v137
    %v5006 = vpop.f32.mrf.mxu0
    %v5007 = vadd.f32 %v4994, %v5006
    %v5008 = vpop.f32.mrf.mxu0
    %5009 = vdwg.mxu0
    %5010 = vmatpush.bf16.msra.mxu0 %v3698
    %5011 = vmatpush.bf16.msra.mxu0 %v3697
    %5012 = vmatpush.bf16.msra.mxu0 %v3696
    %5013 = vmatpush.bf16.msra.mxu0 %v3695
    %5014 = vmatpush.bf16.msra.mxu0 %v3694
    %5015 = vmatpush.bf16.msra.mxu0 %v3693
    %5016 = vmatpush.bf16.msra.mxu0 %v3692
    %5017 = vmatpush.bf16.msra.mxu0 %v3691
    %5018 = vmatmul.bf16.gmra.mxu0 %v138
    %v5019 = vpop.f32.mrf.mxu0
    %v5020 = vadd.f32 %v5007, %v5019
    %v5021 = vpop.f32.mrf.mxu0
    %5022 = vdwg.mxu0
    %5023 = vmatpush.bf16.msra.mxu0 %v3706
    %5024 = vmatpush.bf16.msra.mxu0 %v3705
    %5025 = vmatpush.bf16.msra.mxu0 %v3704
    %5026 = vmatpush.bf16.msra.mxu0 %v3703
    %5027 = vmatpush.bf16.msra.mxu0 %v3702
    %5028 = vmatpush.bf16.msra.mxu0 %v3701
    %5029 = vmatpush.bf16.msra.mxu0 %v3700
    %5030 = vmatpush.bf16.msra.mxu0 %v3699
    %5031 = vmatmul.bf16.gmra.mxu0 %v139
    %v5032 = vpop.f32.mrf.mxu0
    %v5033 = vadd.f32 %v5020, %v5032
    %v5034 = vpop.f32.mrf.mxu0
    %5035 = vdwg.mxu0
    %5036 = vmatpush.bf16.msra.mxu0 %v3714
    %5037 = vmatpush.bf16.msra.mxu0 %v3713
    %5038 = vmatpush.bf16.msra.mxu0 %v3712
    %5039 = vmatpush.bf16.msra.mxu0 %v3711
    %5040 = vmatpush.bf16.msra.mxu0 %v3710
    %5041 = vmatpush.bf16.msra.mxu0 %v3709
    %5042 = vmatpush.bf16.msra.mxu0 %v3708
    %5043 = vmatpush.bf16.msra.mxu0 %v3707
    %5044 = vmatmul.bf16.gmra.mxu0 %v140
    %v5045 = vpop.f32.mrf.mxu0
    %v5046 = vadd.f32 %v5033, %v5045
    %v5047 = vpop.f32.mrf.mxu0
    %5048 = vdwg.mxu0
    %5049 = vmatpush.bf16.msra.mxu0 %v3722
    %5050 = vmatpush.bf16.msra.mxu0 %v3721
    %5051 = vmatpush.bf16.msra.mxu0 %v3720
    %5052 = vmatpush.bf16.msra.mxu0 %v3719
    %5053 = vmatpush.bf16.msra.mxu0 %v3718
    %5054 = vmatpush.bf16.msra.mxu0 %v3717
    %5055 = vmatpush.bf16.msra.mxu0 %v3716
    %5056 = vmatpush.bf16.msra.mxu0 %v3715
    %5057 = vmatmul.bf16.gmra.mxu0 %v141
    %v5058 = vpop.f32.mrf.mxu0
    %v5059 = vadd.f32 %v5046, %v5058
    %v5060 = vpop.f32.mrf.mxu0
    %5061 = vdwg.mxu0
    %5062 = vmatpush.bf16.msra.mxu0 %v3730
    %5063 = vmatpush.bf16.msra.mxu0 %v3729
    %5064 = vmatpush.bf16.msra.mxu0 %v3728
    %5065 = vmatpush.bf16.msra.mxu0 %v3727
    %5066 = vmatpush.bf16.msra.mxu0 %v3726
    %5067 = vmatpush.bf16.msra.mxu0 %v3725
    %5068 = vmatpush.bf16.msra.mxu0 %v3724
    %5069 = vmatpush.bf16.msra.mxu0 %v3723
    %5070 = vmatmul.bf16.gmra.mxu0 %v142
    %v5071 = vpop.f32.mrf.mxu0
    %v5072 = vadd.f32 %v5059, %v5071
    %v5073 = vpop.f32.mrf.mxu0
    %5074 = vdwg.mxu0
    %vm5075 = vcmask 261120
    %5076 = vst.msk [vmem:[#allocation2] sm:$0xff] %vm5075, %v5072
    // Predicated region
    $region14: #{tpu_custom_call.1} parent=1 // pred_check
      _
    $region15: #{tpu_custom_call.1} parent=1 // pred_check_branch
      %5078 = sbr.rel (0) target = $region17
    $region16: #{tpu_custom_call.1} parent=1 // pred_region
      %5080 = vsyncadd [#allocation3], 0
      %s5082 = sshll.u32 [#allocation2], 4
      %s5083 = int_to_ptr.vmem [resolvable:$true] %s5082
      %s5084 = sshll.u32 %s3, 4
      %s5085 = int_to_ptr.hbm [resolvable:$true] %s5084
      %5087 = dma.vmem_to_hbm [thread:$0]  %s5083, 128, %s5085, [#allocation3]
    $region17: #{tpu_custom_call.1} parent=1 // pred_fallthru
      _
    // Predicated region
    $region18: #{tpu_custom_call.1} parent=1 // pred_check
      _
    $region19: #{tpu_custom_call.1} parent=1 // pred_check_branch
      %5089 = sbr.rel (0) target = $region21
    $region20: #{tpu_custom_call.1} parent=1 // pred_region
      %5091 = dma.done [#allocation3], 128
    $region21: #{tpu_custom_call.1} parent=1 // pred_fallthru
      _
    %5092 = vsyncpa [#allocation3], 1

</llo_original>
